<compile_context>
chip_gen: v5e
topology: v5e:2x2
jax: 0.10.0
libtpu: 0.0.40
codegen_flags: <defaults>
</compile_context>

<pallas_src>
import functools
import inspect
import math

import jax
import jax.numpy as jnp
from jax.experimental import pallas as pl
from jax.experimental.pallas import tpu as pltpu

EPS = 1e-6
ACT_DTYPE = jnp.float32        # inter-sublayer activation dtype in HBM
                               # TODO(synk): bf16 on v5e to halve activation HBM traffic.
COMPUTE_DTYPE = jnp.bfloat16   # MXU operand dtype (accumulation stays f32)


# ----------------------------- hardware-aware config ---------------------------
def _vmem_limit_bytes():
    try:
        cap = getattr(pltpu.get_tpu_info(), "vmem_capacity_bytes", None)
    except Exception:
        cap = None
    if not cap:
        cap = 128 * 1024 * 1024
    return int(min(cap * 3 // 4, 100 * 1024 * 1024))


_VMEM_LIMIT = _vmem_limit_bytes()


def _supports_single_buffer():
    if not hasattr(pl, "Buffered"):
        return False
    try:
        return "pipeline_mode" in inspect.signature(pl.BlockSpec).parameters
    except (TypeError, ValueError):
        return False


_SINGLE_BUFFER_OK = _supports_single_buffer()


def _const_spec(block_shape):
    """BlockSpec for inputs whose block index never changes (weights / biases / LN params).
    Single-buffered when supported: these never need prefetching of a 'next' block."""
    index_map = lambda *_: (0,) * len(block_shape)
    if _SINGLE_BUFFER_OK:
        return pl.BlockSpec(block_shape, index_map, pipeline_mode=pl.Buffered(1))
    return pl.BlockSpec(block_shape, index_map)


def _pick_seq_tile(s):
    for t in (256, 128):
        if s >= t and s % t == 0:
            return t
    return s  # small / ragged S: single q tile


# ------------------------- in-kernel helpers (traced) -------------------------
def _ln(x, g, b):
    """LayerNorm with ddof=1 std, matching the reference: g*(x-mean)/(std+eps)+b. f32."""
    d = x.shape[-1]
    mean = jnp.mean(x, axis=-1, keepdims=True)
    diff = x - mean
    var = jnp.sum(diff * diff, axis=-1, keepdims=True) * (1.0 / (d - 1))
    inv = pl.reciprocal(jnp.sqrt(var) + EPS, approx=False)  # exact; multiply not divide
    return g * diff * inv + b


# ----------------------- fused attention sublayer kernel ----------------------
def _attn_sublayer_kernel(*refs, num_heads, mask_mode, cross):
    it = iter(refs)
    x_ref = next(it)                                        # (1, S, D): residual + kv source
    mem_ref = next(it) if cross else None                   # (1, Tq, D): query source (cross)
    mask_ref = next(it) if mask_mode == "dense" else None   # (1, Tq, S)
    g_ref, b_ref = next(it), next(it)
    wq_ref, bq_ref = next(it), next(it)
    wk_ref, bk_ref = next(it), next(it)
    wv_ref, bv_ref = next(it), next(it)
    wo_ref, bo_ref = next(it), next(it)
    o_ref = next(it)
    k_scr, v_scr, heads_scr = next(it), next(it), next(it)

    S = x_ref.shape[1]
    D = x_ref.shape[2]
    Tq = o_ref.shape[1]
    d_k = D // num_heads
    scale = 1.0 / math.sqrt(d_k)
    qi = pl.program_id(1)

    g = g_ref[...]
    b = b_ref[...]

    # K / V depend only on the whole (batch-)sequence: compute once per batch element
    # (first q tile) into persistent bf16 VMEM scratch, reuse for every q tile.
    @pl.when(qi == 0)
    def _():
        xn_kv = _ln(x_ref[0], g, b).astype(COMPUTE_DTYPE)
        k_scr[...] = (jnp.dot(xn_kv, wk_ref[...], preferred_element_type=jnp.float32)
                      + bk_ref[...]).astype(COMPUTE_DTYPE)
        v_scr[...] = (jnp.dot(xn_kv, wv_ref[...], preferred_element_type=jnp.float32)
                      + bv_ref[...]).astype(COMPUTE_DTYPE)

    q_start = pl.multiple_of(qi * Tq, Tq)
    x_q = x_ref[0, pl.ds(q_start, Tq), :]                   # (Tq, D) residual rows, f32
    if cross:
        q_src = mem_ref[0]                                  # query = memory, NOT layer-normed
    else:
        q_src = _ln(x_q, g, b)

    # Fold 1/sqrt(d_k) into Q once; bf16 operands, f32 accumulation.
    q = ((jnp.dot(q_src.astype(COMPUTE_DTYPE), wq_ref[...],
                  preferred_element_type=jnp.float32) + bq_ref[...]) * scale
         ).astype(COMPUTE_DTYPE)                            # (Tq, D)

    # Additive mask (-1e9 on masked slots; identical post-softmax to masked_fill for any
    # row with at least one unmasked key).
    if mask_mode == "dense":
        neg = jnp.where(mask_ref[0] == 0.0, -1e9, 0.0)                       # (Tq, S)
    elif mask_mode == "causal":
        row = q_start + jax.lax.broadcasted_iota(jnp.int32, (Tq, S), 0)
        col = jax.lax.broadcasted_iota(jnp.int32, (Tq, S), 1)
        neg = jnp.where(col > row, -1e9, 0.0)                                # (Tq, S)
    else:                                                                    # "none"
        neg = None

    k = k_scr[...]
    v = v_scr[...]
    # TODO(synk): for 8-16 production heads, bound live ranges (lax.fori_loop) and use
    # >=128-lane-wide head groups instead of this static unroll over d_k-wide slices.
    for h in range(num_heads):
        lo = h * d_k
        s = jax.lax.dot_general(q[:, lo:lo + d_k], k[:, lo:lo + d_k],
                                (((1,), (1,)), ((), ())),
                                preferred_element_type=jnp.float32)          # (Tq, S), no .T
        if neg is not None:
            s = s + neg
        s = s - jnp.max(s, axis=-1, keepdims=True)
        p = jnp.exp(s)
        p = p * pl.reciprocal(jnp.sum(p, axis=-1, keepdims=True), approx=True)
        heads_scr[:, lo:lo + d_k] = jnp.dot(p.astype(COMPUTE_DTYPE), v[:, lo:lo + d_k],
                                            preferred_element_type=jnp.float32)

    attn = (jnp.dot(heads_scr[...].astype(COMPUTE_DTYPE), wo_ref[...],
                    preferred_element_type=jnp.float32) + bo_ref[...])
    o_ref[...] = (x_q + attn)[None].astype(o_ref.dtype)


def attention_sublayer(x, ln_g, ln_b, p, num_heads, *, memory=None, mask=None,
                       mask_mode="dense"):
    """Fused sublayer: x + MHA(...). Self-attention if memory is None; otherwise
    cross-attention with query = memory (faithful to src_attn(memory, x, x, mask))."""
    B, S, D = x.shape
    cross = memory is not None
    if cross:
        Bm, Sm, Dm = memory.shape
        assert Bm == B and Dm == D
        assert Sm == S, "residual add requires memory seq == x seq (as in the reference forward)"
    if mask_mode == "dense":
        assert mask is not None and mask.shape == (B, S, S)

    Tq = _pick_seq_tile(S)
    n_q = S // Tq

    in_specs = [pl.BlockSpec((1, S, D), lambda bb, qq: (bb, 0, 0))]   # x: kv source + residual
    args = [x]
    if cross:
        in_specs.append(pl.BlockSpec((1, Tq, D), lambda bb, qq: (bb, qq, 0)))
        args.append(memory)
    if mask_mode == "dense":
        in_specs.append(pl.BlockSpec((1, Tq, S), lambda bb, qq: (bb, qq, 0)))
        args.append(mask)
    in_specs += [_const_spec((1, D)), _const_spec((1, D))]
    args += [ln_g, ln_b]
    for wname, bname in (("wq", "bq"), ("wk", "bk"), ("wv", "bv"), ("wo", "bo")):
        in_specs += [_const_spec((D, D)), _const_spec((1, D))]
        args += [p[wname].astype(COMPUTE_DTYPE), p[bname]]

    kernel = functools.partial(_attn_sublayer_kernel, num_heads=num_heads,
                               mask_mode=mask_mode, cross=cross)
    return pl.pallas_call(
        kernel,
        out_shape=jax.ShapeDtypeStruct((B, S, D), ACT_DTYPE),
        grid=(B, n_q),
        in_specs=in_specs,
        out_specs=pl.BlockSpec((1, Tq, D), lambda bb, qq: (bb, qq, 0)),
        scratch_shapes=[pltpu.VMEM((S, D), COMPUTE_DTYPE),      # K cache (per batch element)
                        pltpu.VMEM((S, D), COMPUTE_DTYPE),      # V cache
                        pltpu.VMEM((Tq, D), jnp.float32)],      # concatenated head outputs
        compiler_params=pltpu.CompilerParams(
            # batch axis is megacore-parallel; the q-tile axis stays in order because the
            # K/V scratch cache is (re)built at q-tile 0 of each batch element.
            dimension_semantics=("parallel", "arbitrary"),
            vmem_limit_bytes=_VMEM_LIMIT),
    )(*args)


# -------------------- fused FFN sublayer (+ optional final LN) ----------------
def _ffn_sublayer_kernel(x_ref, g_ref, b_ref, w1_ref, b1_ref, w2_ref, b2_ref,
                         *rest, final_ln):
    if final_ln:
        fg_ref, fb_ref, o_ref = rest
    else:
        (o_ref,) = rest
    x = x_ref[...]                                              # (TR, D) f32
    xn = _ln(x, g_ref[...], b_ref[...]).astype(COMPUTE_DTYPE)
    h = jnp.dot(xn, w1_ref[...], preferred_element_type=jnp.float32) + b1_ref[...]
    h = jnp.maximum(h, 0.0).astype(COMPUTE_DTYPE)
    y = x + jnp.dot(h, w2_ref[...], preferred_element_type=jnp.float32) + b2_ref[...]
    if final_ln:
        y = _ln(y, fg_ref[...], fb_ref[...])
    o_ref[...] = y.astype(o_ref.dtype)


def ffn_sublayer(x, ln_g, ln_b, p, final_ln_g=None, final_ln_b=None):
    B, S, D = x.shape
    rows = B * S
    Dff = p["w1"].shape[1]
    x2 = x.reshape(rows, D)
    TR = 256 if rows >= 256 else (128 if rows >= 128 else rows)
    pad = (-rows) % TR
    if pad:  # ragged row counts: zero-pad instead of one giant block
        x2 = jnp.concatenate([x2, jnp.zeros((pad, D), x2.dtype)], axis=0)
    rows_p = rows + pad
    final_ln = final_ln_g is not None

    kernel = functools.partial(_ffn_sublayer_kernel, final_ln=final_ln)
    in_specs = [
        pl.BlockSpec((TR, D), lambda r: (r, 0)),
        _const_spec((1, D)), _const_spec((1, D)),
        _const_spec((D, Dff)), _const_spec((1, Dff)),
        _const_spec((Dff, D)), _const_spec((1, D)),
    ]
    args = [x2, ln_g, ln_b,
            p["w1"].astype(COMPUTE_DTYPE), p["b1"],
            p["w2"].astype(COMPUTE_DTYPE), p["b2"]]
    if final_ln:
        in_specs += [_const_spec((1, D)), _const_spec((1, D))]
        args += [final_ln_g, final_ln_b]

    out = pl.pallas_call(
        kernel,
        out_shape=jax.ShapeDtypeStruct((rows_p, D), ACT_DTYPE),
        grid=(rows_p // TR,),
        in_specs=in_specs,
        out_specs=pl.BlockSpec((TR, D), lambda r: (r, 0)),
        compiler_params=pltpu.CompilerParams(
            dimension_semantics=("parallel",),
            vmem_limit_bytes=_VMEM_LIMIT),
    )(*args)
    if pad:
        out = out[:rows]
    return out.reshape(B, S, D)


# ------------------------------ Decoder (glue) --------------------------------
def decoder_forward(x, memory, source_mask, target_mask, params, num_heads,
                    source_mask_mode="dense", target_mask_mode="dense"):
    """mask modes: 'dense'  -> use the provided (B,S,S) mask array (general case),
                   'causal' -> generate the lower-triangular mask in-kernel (no mask DMA),
                   'none'   -> no masking (e.g. an all-ones mask)."""
    n_layers = len(params["layers"])
    for li, lp in enumerate(params["layers"]):
        # sublayer[0]: x + self_attn(LN0(x), LN0(x), LN0(x), target_mask)   [one fused kernel]
        x = attention_sublayer(
            x, lp["ln0_g"], lp["ln0_b"], lp["self_attn"], num_heads,
            mask=target_mask if target_mask_mode == "dense" else None,
            mask_mode=target_mask_mode)
        # sublayer[1]: x + src_attn(memory, LN1(x), LN1(x), source_mask)    [one fused kernel]
        x = attention_sublayer(
            x, lp["ln1_g"], lp["ln1_b"], lp["src_attn"], num_heads,
            memory=memory,
            mask=source_mask if source_mask_mode == "dense" else None,
            mask_mode=source_mask_mode)
        # sublayer[2]: x + FFN(LN2(x)); final Decoder LayerNorm fused into the last layer.
        last = li == n_layers - 1
        x = ffn_sublayer(x, lp["ln2_g"], lp["ln2_b"], lp["ffn"],
                         final_ln_g=params["norm_g"] if last else None,
                         final_ln_b=params["norm_b"] if last else None)
    return x


# ------------------------- Pure-JAX reference (check) --------------------------
def _ref_layernorm(x, g, b):
    d = x.shape[-1]
    mean = jnp.mean(x, axis=-1, keepdims=True)
    diff = x - mean
    std = jnp.sqrt(jnp.sum(diff * diff, axis=-1, keepdims=True) / (d - 1))
    return g * diff / (std + EPS) + b


def _ref_mha(q_in, k_in, v_in, mask, p, h):
    D = q_in.shape[-1]
    d_k = D // h
    q = q_in @ p["wq"] + p["bq"]
    k = k_in @ p["wk"] + p["bk"]
    v = v_in @ p["wv"] + p["bv"]

    def split(t):  # (B,S,D) -> (B,h,S,d_k)
        B, S, _ = t.shape
        return t.reshape(B, S, h, d_k).transpose(0, 2, 1, 3)

    qh, kh, vh = split(q), split(k), split(v)
    s = jnp.einsum("bhqd,bhkd->bhqk", qh, kh) / math.sqrt(d_k)
    s = jnp.where(mask[:, None, :, :] == 0.0, -1e9, s)
    p_att = jax.nn.softmax(s, axis=-1)
    o = jnp.einsum("bhqk,bhkd->bhqd", p_att, vh)
    B, _, Sq, _ = o.shape
    o = o.transpose(0, 2, 1, 3).reshape(B, Sq, D)
    return o @ p["wo"] + p["bo"]


def _ref_decoder(x, memory, src_mask, tgt_mask, params, h):
    for lp in params["layers"]:
        xn = _ref_layernorm(x, lp["ln0_g"], lp["ln0_b"])
        x = x + _ref_mha(xn, xn, xn, tgt_mask, lp["self_attn"], h)
        xn = _ref_layernorm(x, lp["ln1_g"], lp["ln1_b"])
        x = x + _ref_mha(memory, xn, xn, src_mask, lp["src_attn"], h)
        xn = _ref_layernorm(x, lp["ln2_g"], lp["ln2_b"])
        ff = jnp.maximum(xn @ lp["ffn"]["w1"] + lp["ffn"]["b1"], 0.0) @ lp["ffn"]["w2"] + lp["ffn"]["b2"]
        x = x + ff
    return _ref_layernorm(x, params["norm_g"], params["norm_b"])


# ----------------------------- Parameter creation ------------------------------
def _init_attn(key, D):
    ks = jax.random.split(key, 4)
    scale = 0.02
    return {
        "wq": scale * jax.random.normal(ks[0], (D, D), jnp.float32), "bq": jnp.zeros((1, D), jnp.float32),
        "wk": scale * jax.random.normal(ks[1], (D, D), jnp.float32), "bk": jnp.zeros((1, D), jnp.float32),
        "wv": scale * jax.random.normal(ks[2], (D, D), jnp.float32), "bv": jnp.zeros((1, D), jnp.float32),
        "wo": scale * jax.random.normal(ks[3], (D, D), jnp.float32), "bo": jnp.zeros((1, D), jnp.float32),
    }


def init_decoder_params(key, D, Dff, N):
    keys = jax.random.split(key, N)
    layers = []
    for lk in keys:
        k_sa, k_ca, k_f1, k_f2 = jax.random.split(lk, 4)
        layers.append({
            "self_attn": _init_attn(k_sa, D),
            "src_attn": _init_attn(k_ca, D),
            "ffn": {
                "w1": 0.02 * jax.random.normal(k_f1, (D, Dff), jnp.float32),
                "b1": jnp.zeros((1, Dff), jnp.float32),
                "w2": 0.02 * jax.random.normal(k_f2, (Dff, D), jnp.float32),
                "b2": jnp.zeros((1, D), jnp.float32),
            },
            "ln0_g": jnp.ones((1, D), jnp.float32), "ln0_b": jnp.zeros((1, D), jnp.float32),
            "ln1_g": jnp.ones((1, D), jnp.float32), "ln1_b": jnp.zeros((1, D), jnp.float32),
            "ln2_g": jnp.ones((1, D), jnp.float32), "ln2_b": jnp.zeros((1, D), jnp.float32),
        })
    return {"layers": layers,
            "norm_g": jnp.ones((1, D), jnp.float32),
            "norm_b": jnp.zeros((1, D), jnp.float32)}


# ------------------------------------ main -------------------------------------
if __name__ == "__main__":
    B, S, D, H, DFF, N = 2, 8, 32, 4, 64, 2

    key = jax.random.PRNGKey(0)
    k_x, k_mem, k_par = jax.random.split(key, 3)
    x = jax.random.normal(k_x, (B, S, D), jnp.float32)
    memory = jax.random.normal(k_mem, (B, S, D), jnp.float32)

    # target mask: causal; source mask: all ones
    target_mask = jnp.broadcast_to(
        jnp.tril(jnp.ones((S, S), jnp.float32))[None], (B, S, S))
    source_mask = jnp.ones((B, S, S), jnp.float32)

    params = init_decoder_params(k_par, D, DFF, N)
    ref = _ref_decoder(x, memory, source_mask, target_mask, params, H)

    # Optimized path: causal target mask generated in-kernel, all-ones source mask skipped
    # (no (B,S,S) mask DMA at all).
    fwd = jax.jit(functools.partial(decoder_forward, num_heads=H,
                                    source_mask_mode="none",
                                    target_mask_mode="causal"))
    out = jax.block_until_ready(fwd(x, memory, source_mask, target_mask, params))
    assert out.shape == (B, S, D)
    # Tolerance covers the bf16 MXU operands + approx EUP reciprocal in the softmax denom.
    assert jnp.allclose(out, ref, atol=2e-2, rtol=2e-2), "mismatch (fused masks) vs JAX reference"

    # General path: arbitrary dense masks streamed as (Tq, S) tiles.
    fwd_dense = jax.jit(functools.partial(decoder_forward, num_heads=H))
    out_d = jax.block_until_ready(fwd_dense(x, memory, source_mask, target_mask, params))
    assert jnp.allclose(out_d, ref, atol=2e-2, rtol=2e-2), "mismatch (dense masks) vs JAX reference"

    print("KERNEL_OK")
</pallas_src>

<mosaic_0001>
module attributes {stable_mosaic.version = 11 : i64} {
  func.func @_attn_sublayer_kernel(%arg0: i32, %arg1: i32, %arg2: memref<1x8x32xf32, #tpu.memory_space<vmem>>, %arg3: memref<1x8x32xf32, #tpu.memory_space<vmem>>, %arg4: memref<1x32xf32, #tpu.memory_space<vmem>>, %arg5: memref<1x32xf32, #tpu.memory_space<vmem>>, %arg6: memref<32x32xbf16, #tpu.memory_space<vmem>>, %arg7: memref<1x32xf32, #tpu.memory_space<vmem>>, %arg8: memref<32x32xbf16, #tpu.memory_space<vmem>>, %arg9: memref<1x32xf32, #tpu.memory_space<vmem>>, %arg10: memref<32x32xbf16, #tpu.memory_space<vmem>>, %arg11: memref<1x32xf32, #tpu.memory_space<vmem>>, %arg12: memref<32x32xbf16, #tpu.memory_space<vmem>>, %arg13: memref<1x32xf32, #tpu.memory_space<vmem>>, %arg14: memref<1x8x32xf32, #tpu.memory_space<vmem>>, %arg15: memref<8x32xbf16, #tpu.memory_space<vmem>>, %arg16: memref<8x32xbf16, #tpu.memory_space<vmem>>, %arg17: memref<8x32xf32, #tpu.memory_space<vmem>>) attributes {dimension_semantics = [#tpu.dimension_semantics<parallel>, #tpu.dimension_semantics<arbitrary>], iteration_bounds = array<i64: 2, 1>, scalar_prefetch = 0 : i64, scratch_operands = 3 : i64, tpu.core_type = #tpu.core_type<tc>, window_params = [{transform_indices = @transform_0, window_bounds = array<i64: 1, 8, 32>}, {transform_indices = @transform_1, window_bounds = array<i64: 1, 8, 32>}, {pipeline_mode = #tpu.pipeline_mode<synchronous>, transform_indices = @transform_2, window_bounds = array<i64: 1, 32>}, {pipeline_mode = #tpu.pipeline_mode<synchronous>, transform_indices = @transform_3, window_bounds = array<i64: 1, 32>}, {pipeline_mode = #tpu.pipeline_mode<synchronous>, transform_indices = @transform_4, window_bounds = array<i64: 32, 32>}, {pipeline_mode = #tpu.pipeline_mode<synchronous>, transform_indices = @transform_5, window_bounds = array<i64: 1, 32>}, {pipeline_mode = #tpu.pipeline_mode<synchronous>, transform_indices = @transform_6, window_bounds = array<i64: 32, 32>}, {pipeline_mode = #tpu.pipeline_mode<synchronous>, transform_indices = @transform_7, window_bounds = array<i64: 1, 32>}, {pipeline_mode = #tpu.pipeline_mode<synchronous>, transform_indices = @transform_8, window_bounds = array<i64: 32, 32>}, {pipeline_mode = #tpu.pipeline_mode<synchronous>, transform_indices = @transform_9, window_bounds = array<i64: 1, 32>}, {pipeline_mode = #tpu.pipeline_mode<synchronous>, transform_indices = @transform_10, window_bounds = array<i64: 32, 32>}, {pipeline_mode = #tpu.pipeline_mode<synchronous>, transform_indices = @transform_11, window_bounds = array<i64: 1, 32>}, {transform_indices = @transform_12, window_bounds = array<i64: 1, 8, 32>}]} {
    %c0 = arith.constant 0 : index
    %c0_0 = arith.constant 0 : index
    %0 = vector.load %arg4[%c0, %c0_0] : memref<1x32xf32, #tpu.memory_space<vmem>>, vector<1x32xf32>
    %c0_1 = arith.constant 0 : index
    %c0_2 = arith.constant 0 : index
    %1 = vector.load %arg5[%c0_1, %c0_2] : memref<1x32xf32, #tpu.memory_space<vmem>>, vector<1x32xf32>
    %c0_i32 = arith.constant 0 : i32
    %2 = arith.cmpi eq, %arg1, %c0_i32 : i32
    %3 = arith.extui %2 : i1 to i32
    %c0_i32_3 = arith.constant 0 : i32
    %4 = arith.cmpi ne, %3, %c0_i32_3 : i32
    scf.if %4 {
      %c0_49 = arith.constant 0 : index
      %c0_50 = arith.constant 0 : index
      %c0_51 = arith.constant 0 : index
      %101 = vector.load %arg2[%c0_49, %c0_50, %c0_51] : memref<1x8x32xf32, #tpu.memory_space<vmem>>, vector<1x8x32xf32>
      %102 = vector.shape_cast %101 : vector<1x8x32xf32> to vector<8x32xf32>
      %cst_52 = arith.constant dense<0.000000e+00> : vector<8xf32>
      %103 = vector.multi_reduction <add>, %102, %cst_52 [1] : vector<8x32xf32> to vector<8xf32>
      %104 = vector.shape_cast %103 : vector<8xf32> to vector<8x1xf32>
      %cst_53 = arith.constant 3.200000e+01 : f32
      %105 = vector.broadcast %cst_53 : f32 to vector<8x1xf32>
      %106 = arith.divf %104, %105 : vector<8x1xf32>
      %107 = vector.broadcast %106 : vector<8x1xf32> to vector<8x32xf32>
      %108 = arith.subf %102, %107 : vector<8x32xf32>
      %109 = arith.mulf %108, %108 : vector<8x32xf32>
      %cst_54 = arith.constant dense<0.000000e+00> : vector<8xf32>
      %110 = vector.multi_reduction <add>, %109, %cst_54 [1] : vector<8x32xf32> to vector<8xf32>
      %111 = vector.shape_cast %110 : vector<8xf32> to vector<8x1xf32>
      %cst_55 = arith.constant 0.0322580636 : f32
      %112 = vector.broadcast %cst_55 : f32 to vector<8x1xf32>
      %113 = arith.mulf %111, %112 : vector<8x1xf32>
      %114 = math.sqrt %113 : vector<8x1xf32>
      %cst_56 = arith.constant 9.99999997E-7 : f32
      %115 = vector.broadcast %cst_56 : f32 to vector<8x1xf32>
      %116 = arith.addf %114, %115 : vector<8x1xf32>
      %117 = tpu.reciprocal %116 : vector<8x1xf32> -> vector<8x1xf32>
      %118 = vector.broadcast %0 : vector<1x32xf32> to vector<8x32xf32>
      %119 = arith.mulf %118, %108 : vector<8x32xf32>
      %120 = vector.broadcast %117 : vector<8x1xf32> to vector<8x32xf32>
      %121 = arith.mulf %119, %120 : vector<8x32xf32>
      %122 = vector.broadcast %1 : vector<1x32xf32> to vector<8x32xf32>
      %123 = arith.addf %121, %122 : vector<8x32xf32>
      %124 = arith.truncf %123 : vector<8x32xf32> to vector<8x32xbf16>
      %c0_57 = arith.constant 0 : index
      %c0_58 = arith.constant 0 : index
      %125 = vector.load %arg8[%c0_57, %c0_58] : memref<32x32xbf16, #tpu.memory_space<vmem>>, vector<32x32xbf16>
      %cst_59 = arith.constant dense<0.000000e+00> : vector<8x32xf32>
      %126 = tpu.matmul %124, %125, %cst_59 {dimension_numbers = #tpu.dot_dimension_numbers<[1], [0], [0], [1], [0, 0, 1, 1], [], []>} : vector<8x32xbf16>, vector<32x32xbf16>, vector<8x32xf32> -> vector<8x32xf32>
      %c0_60 = arith.constant 0 : index
      %c0_61 = arith.constant 0 : index
      %127 = vector.load %arg9[%c0_60, %c0_61] : memref<1x32xf32, #tpu.memory_space<vmem>>, vector<1x32xf32>
      %128 = vector.broadcast %127 : vector<1x32xf32> to vector<8x32xf32>
      %129 = arith.addf %126, %128 : vector<8x32xf32>
      %130 = arith.truncf %129 : vector<8x32xf32> to vector<8x32xbf16>
      %c0_62 = arith.constant 0 : index
      %c0_63 = arith.constant 0 : index
      %131 = vector.load %arg15[%c0_62, %c0_63] : memref<8x32xbf16, #tpu.memory_space<vmem>>, vector<8x32xbf16>
      tpu.vector_store %arg15[%c0_62, %c0_63], %130 {strides = array<i32>} : memref<8x32xbf16, #tpu.memory_space<vmem>>, vector<8x32xbf16>,
      %c0_64 = arith.constant 0 : index
      %c0_65 = arith.constant 0 : index
      %132 = vector.load %arg10[%c0_64, %c0_65] : memref<32x32xbf16, #tpu.memory_space<vmem>>, vector<32x32xbf16>
      %cst_66 = arith.constant dense<0.000000e+00> : vector<8x32xf32>
      %133 = tpu.matmul %124, %132, %cst_66 {dimension_numbers = #tpu.dot_dimension_numbers<[1], [0], [0], [1], [0, 0, 1, 1], [], []>} : vector<8x32xbf16>, vector<32x32xbf16>, vector<8x32xf32> -> vector<8x32xf32>
      %c0_67 = arith.constant 0 : index
      %c0_68 = arith.constant 0 : index
      %134 = vector.load %arg11[%c0_67, %c0_68] : memref<1x32xf32, #tpu.memory_space<vmem>>, vector<1x32xf32>
      %135 = vector.broadcast %134 : vector<1x32xf32> to vector<8x32xf32>
      %136 = arith.addf %133, %135 : vector<8x32xf32>
      %137 = arith.truncf %136 : vector<8x32xf32> to vector<8x32xbf16>
      %c0_69 = arith.constant 0 : index
      %c0_70 = arith.constant 0 : index
      %138 = vector.load %arg16[%c0_69, %c0_70] : memref<8x32xbf16, #tpu.memory_space<vmem>>, vector<8x32xbf16>
      tpu.vector_store %arg16[%c0_69, %c0_70], %137 {strides = array<i32>} : memref<8x32xbf16, #tpu.memory_space<vmem>>, vector<8x32xbf16>,
    } else {
    }
    %c8_i32 = arith.constant 8 : i32
    %5 = arith.muli %arg1, %c8_i32 : i32
    %6 = tpu.assume_multiple %5, 8 : i32
    %c0_4 = arith.constant 0 : index
    %7 = arith.index_cast %6 : i32 to index
    %c0_5 = arith.constant 0 : index
    %8 = vector.load %arg2[%c0_4, %7, %c0_5] : memref<1x8x32xf32, #tpu.memory_space<vmem>>, vector<1x8x32xf32>
    %9 = vector.shape_cast %8 : vector<1x8x32xf32> to vector<8x32xf32>
    %c0_6 = arith.constant 0 : index
    %c0_7 = arith.constant 0 : index
    %c0_8 = arith.constant 0 : index
    %10 = vector.load %arg3[%c0_6, %c0_7, %c0_8] : memref<1x8x32xf32, #tpu.memory_space<vmem>>, vector<1x8x32xf32>
    %11 = vector.shape_cast %10 : vector<1x8x32xf32> to vector<8x32xf32>
    %12 = arith.truncf %11 : vector<8x32xf32> to vector<8x32xbf16>
    %c0_9 = arith.constant 0 : index
    %c0_10 = arith.constant 0 : index
    %13 = vector.load %arg6[%c0_9, %c0_10] : memref<32x32xbf16, #tpu.memory_space<vmem>>, vector<32x32xbf16>
    %cst = arith.constant dense<0.000000e+00> : vector<8x32xf32>
    %14 = tpu.matmul %12, %13, %cst {dimension_numbers = #tpu.dot_dimension_numbers<[1], [0], [0], [1], [0, 0, 1, 1], [], []>} : vector<8x32xbf16>, vector<32x32xbf16>, vector<8x32xf32> -> vector<8x32xf32>
    %c0_11 = arith.constant 0 : index
    %c0_12 = arith.constant 0 : index
    %15 = vector.load %arg7[%c0_11, %c0_12] : memref<1x32xf32, #tpu.memory_space<vmem>>, vector<1x32xf32>
    %16 = vector.broadcast %15 : vector<1x32xf32> to vector<8x32xf32>
    %17 = arith.addf %14, %16 : vector<8x32xf32>
    %cst_13 = arith.constant 0.353553385 : f32
    %18 = vector.broadcast %cst_13 : f32 to vector<8x32xf32>
    %19 = arith.mulf %17, %18 : vector<8x32xf32>
    %20 = arith.truncf %19 : vector<8x32xf32> to vector<8x32xbf16>
    %c0_14 = arith.constant 0 : index
    %c0_15 = arith.constant 0 : index
    %21 = vector.load %arg15[%c0_14, %c0_15] : memref<8x32xbf16, #tpu.memory_space<vmem>>, vector<8x32xbf16>
    %c0_16 = arith.constant 0 : index
    %c0_17 = arith.constant 0 : index
    %22 = vector.load %arg16[%c0_16, %c0_17] : memref<8x32xbf16, #tpu.memory_space<vmem>>, vector<8x32xbf16>
    %23 = vector.extract_strided_slice %20 {offsets = [0, 0], sizes = [8, 8], strides = [1, 1]} : vector<8x32xbf16> to vector<8x8xbf16>
    %24 = vector.extract_strided_slice %21 {offsets = [0, 0], sizes = [8, 8], strides = [1, 1]} : vector<8x32xbf16> to vector<8x8xbf16>
    %cst_18 = arith.constant dense<0.000000e+00> : vector<8x8xf32>
    %25 = tpu.matmul %23, %24, %cst_18 {dimension_numbers = #tpu.dot_dimension_numbers<[1], [1], [0], [0], [0, 0, 1, 0], [], []>} : vector<8x8xbf16>, vector<8x8xbf16>, vector<8x8xf32> -> vector<8x8xf32>
    %cst_19 = arith.constant dense<0xFF800000> : vector<8xf32>
    %26 = vector.multi_reduction <maximumf>, %25, %cst_19 [1] : vector<8x8xf32> to vector<8xf32>
    %27 = vector.shape_cast %26 : vector<8xf32> to vector<8x1xf32>
    %28 = vector.broadcast %27 : vector<8x1xf32> to vector<8x8xf32>
    %29 = arith.subf %25, %28 : vector<8x8xf32>
    %30 = math.exp %29 : vector<8x8xf32>
    %cst_20 = arith.constant dense<0.000000e+00> : vector<8xf32>
    %31 = vector.multi_reduction <add>, %30, %cst_20 [1] : vector<8x8xf32> to vector<8xf32>
    %32 = vector.shape_cast %31 : vector<8xf32> to vector<8x1xf32>
    %33 = tpu.reciprocal %32 {approx = true} : vector<8x1xf32> -> vector<8x1xf32>
    %34 = vector.broadcast %33 : vector<8x1xf32> to vector<8x8xf32>
    %35 = arith.mulf %30, %34 : vector<8x8xf32>
    %36 = arith.truncf %35 : vector<8x8xf32> to vector<8x8xbf16>
    %37 = vector.extract_strided_slice %22 {offsets = [0, 0], sizes = [8, 8], strides = [1, 1]} : vector<8x32xbf16> to vector<8x8xbf16>
    %cst_21 = arith.constant dense<0.000000e+00> : vector<8x8xf32>
    %38 = tpu.matmul %36, %37, %cst_21 {dimension_numbers = #tpu.dot_dimension_numbers<[1], [0], [0], [1], [0, 0, 1, 1], [], []>} : vector<8x8xbf16>, vector<8x8xbf16>, vector<8x8xf32> -> vector<8x8xf32>
    %c0_22 = arith.constant 0 : index
    %c0_23 = arith.constant 0 : index
    %39 = vector.load %arg17[%c0_22, %c0_23] : memref<8x32xf32, #tpu.memory_space<vmem>>, vector<8x8xf32>
    tpu.vector_store %arg17[%c0_22, %c0_23], %38 {strides = array<i32>} : memref<8x32xf32, #tpu.memory_space<vmem>>, vector<8x8xf32>,
    %40 = vector.extract_strided_slice %20 {offsets = [0, 8], sizes = [8, 8], strides = [1, 1]} : vector<8x32xbf16> to vector<8x8xbf16>
    %41 = vector.extract_strided_slice %21 {offsets = [0, 8], sizes = [8, 8], strides = [1, 1]} : vector<8x32xbf16> to vector<8x8xbf16>
    %cst_24 = arith.constant dense<0.000000e+00> : vector<8x8xf32>
    %42 = tpu.matmul %40, %41, %cst_24 {dimension_numbers = #tpu.dot_dimension_numbers<[1], [1], [0], [0], [0, 0, 1, 0], [], []>} : vector<8x8xbf16>, vector<8x8xbf16>, vector<8x8xf32> -> vector<8x8xf32>
    %cst_25 = arith.constant dense<0xFF800000> : vector<8xf32>
    %43 = vector.multi_reduction <maximumf>, %42, %cst_25 [1] : vector<8x8xf32> to vector<8xf32>
    %44 = vector.shape_cast %43 : vector<8xf32> to vector<8x1xf32>
    %45 = vector.broadcast %44 : vector<8x1xf32> to vector<8x8xf32>
    %46 = arith.subf %42, %45 : vector<8x8xf32>
    %47 = math.exp %46 : vector<8x8xf32>
    %cst_26 = arith.constant dense<0.000000e+00> : vector<8xf32>
    %48 = vector.multi_reduction <add>, %47, %cst_26 [1] : vector<8x8xf32> to vector<8xf32>
    %49 = vector.shape_cast %48 : vector<8xf32> to vector<8x1xf32>
    %50 = tpu.reciprocal %49 {approx = true} : vector<8x1xf32> -> vector<8x1xf32>
    %51 = vector.broadcast %50 : vector<8x1xf32> to vector<8x8xf32>
    %52 = arith.mulf %47, %51 : vector<8x8xf32>
    %53 = arith.truncf %52 : vector<8x8xf32> to vector<8x8xbf16>
    %54 = vector.extract_strided_slice %22 {offsets = [0, 8], sizes = [8, 8], strides = [1, 1]} : vector<8x32xbf16> to vector<8x8xbf16>
    %cst_27 = arith.constant dense<0.000000e+00> : vector<8x8xf32>
    %55 = tpu.matmul %53, %54, %cst_27 {dimension_numbers = #tpu.dot_dimension_numbers<[1], [0], [0], [1], [0, 0, 1, 1], [], []>} : vector<8x8xbf16>, vector<8x8xbf16>, vector<8x8xf32> -> vector<8x8xf32>
    %c0_28 = arith.constant 0 : index
    %c8 = arith.constant 8 : index
    %56 = vector.load %arg17[%c0_28, %c8] : memref<8x32xf32, #tpu.memory_space<vmem>>, vector<8x8xf32>
    tpu.vector_store %arg17[%c0_28, %c8], %55 {strides = array<i32>} : memref<8x32xf32, #tpu.memory_space<vmem>>, vector<8x8xf32>,
    %57 = vector.extract_strided_slice %20 {offsets = [0, 16], sizes = [8, 8], strides = [1, 1]} : vector<8x32xbf16> to vector<8x8xbf16>
    %58 = vector.extract_strided_slice %21 {offsets = [0, 16], sizes = [8, 8], strides = [1, 1]} : vector<8x32xbf16> to vector<8x8xbf16>
    %cst_29 = arith.constant dense<0.000000e+00> : vector<8x8xf32>
    %59 = tpu.matmul %57, %58, %cst_29 {dimension_numbers = #tpu.dot_dimension_numbers<[1], [1], [0], [0], [0, 0, 1, 0], [], []>} : vector<8x8xbf16>, vector<8x8xbf16>, vector<8x8xf32> -> vector<8x8xf32>
    %cst_30 = arith.constant dense<0xFF800000> : vector<8xf32>
    %60 = vector.multi_reduction <maximumf>, %59, %cst_30 [1] : vector<8x8xf32> to vector<8xf32>
    %61 = vector.shape_cast %60 : vector<8xf32> to vector<8x1xf32>
    %62 = vector.broadcast %61 : vector<8x1xf32> to vector<8x8xf32>
    %63 = arith.subf %59, %62 : vector<8x8xf32>
    %64 = math.exp %63 : vector<8x8xf32>
    %cst_31 = arith.constant dense<0.000000e+00> : vector<8xf32>
    %65 = vector.multi_reduction <add>, %64, %cst_31 [1] : vector<8x8xf32> to vector<8xf32>
    %66 = vector.shape_cast %65 : vector<8xf32> to vector<8x1xf32>
    %67 = tpu.reciprocal %66 {approx = true} : vector<8x1xf32> -> vector<8x1xf32>
    %68 = vector.broadcast %67 : vector<8x1xf32> to vector<8x8xf32>
    %69 = arith.mulf %64, %68 : vector<8x8xf32>
    %70 = arith.truncf %69 : vector<8x8xf32> to vector<8x8xbf16>
    %71 = vector.extract_strided_slice %22 {offsets = [0, 16], sizes = [8, 8], strides = [1, 1]} : vector<8x32xbf16> to vector<8x8xbf16>
    %cst_32 = arith.constant dense<0.000000e+00> : vector<8x8xf32>
    %72 = tpu.matmul %70, %71, %cst_32 {dimension_numbers = #tpu.dot_dimension_numbers<[1], [0], [0], [1], [0, 0, 1, 1], [], []>} : vector<8x8xbf16>, vector<8x8xbf16>, vector<8x8xf32> -> vector<8x8xf32>
    %c0_33 = arith.constant 0 : index
    %c16 = arith.constant 16 : index
    %73 = vector.load %arg17[%c0_33, %c16] : memref<8x32xf32, #tpu.memory_space<vmem>>, vector<8x8xf32>
    tpu.vector_store %arg17[%c0_33, %c16], %72 {strides = array<i32>} : memref<8x32xf32, #tpu.memory_space<vmem>>, vector<8x8xf32>,
    %74 = vector.extract_strided_slice %20 {offsets = [0, 24], sizes = [8, 8], strides = [1, 1]} : vector<8x32xbf16> to vector<8x8xbf16>
    %75 = vector.extract_strided_slice %21 {offsets = [0, 24], sizes = [8, 8], strides = [1, 1]} : vector<8x32xbf16> to vector<8x8xbf16>
    %cst_34 = arith.constant dense<0.000000e+00> : vector<8x8xf32>
    %76 = tpu.matmul %74, %75, %cst_34 {dimension_numbers = #tpu.dot_dimension_numbers<[1], [1], [0], [0], [0, 0, 1, 0], [], []>} : vector<8x8xbf16>, vector<8x8xbf16>, vector<8x8xf32> -> vector<8x8xf32>
    %cst_35 = arith.constant dense<0xFF800000> : vector<8xf32>
    %77 = vector.multi_reduction <maximumf>, %76, %cst_35 [1] : vector<8x8xf32> to vector<8xf32>
    %78 = vector.shape_cast %77 : vector<8xf32> to vector<8x1xf32>
    %79 = vector.broadcast %78 : vector<8x1xf32> to vector<8x8xf32>
    %80 = arith.subf %76, %79 : vector<8x8xf32>
    %81 = math.exp %80 : vector<8x8xf32>
    %cst_36 = arith.constant dense<0.000000e+00> : vector<8xf32>
    %82 = vector.multi_reduction <add>, %81, %cst_36 [1] : vector<8x8xf32> to vector<8xf32>
    %83 = vector.shape_cast %82 : vector<8xf32> to vector<8x1xf32>
    %84 = tpu.reciprocal %83 {approx = true} : vector<8x1xf32> -> vector<8x1xf32>
    %85 = vector.broadcast %84 : vector<8x1xf32> to vector<8x8xf32>
    %86 = arith.mulf %81, %85 : vector<8x8xf32>
    %87 = arith.truncf %86 : vector<8x8xf32> to vector<8x8xbf16>
    %88 = vector.extract_strided_slice %22 {offsets = [0, 24], sizes = [8, 8], strides = [1, 1]} : vector<8x32xbf16> to vector<8x8xbf16>
    %cst_37 = arith.constant dense<0.000000e+00> : vector<8x8xf32>
    %89 = tpu.matmul %87, %88, %cst_37 {dimension_numbers = #tpu.dot_dimension_numbers<[1], [0], [0], [1], [0, 0, 1, 1], [], []>} : vector<8x8xbf16>, vector<8x8xbf16>, vector<8x8xf32> -> vector<8x8xf32>
    %c0_38 = arith.constant 0 : index
    %c24 = arith.constant 24 : index
    %90 = vector.load %arg17[%c0_38, %c24] : memref<8x32xf32, #tpu.memory_space<vmem>>, vector<8x8xf32>
    tpu.vector_store %arg17[%c0_38, %c24], %89 {strides = array<i32>} : memref<8x32xf32, #tpu.memory_space<vmem>>, vector<8x8xf32>,
    %c0_39 = arith.constant 0 : index
    %c0_40 = arith.constant 0 : index
    %91 = vector.load %arg17[%c0_39, %c0_40] : memref<8x32xf32, #tpu.memory_space<vmem>>, vector<8x32xf32>
    %92 = arith.truncf %91 : vector<8x32xf32> to vector<8x32xbf16>
    %c0_41 = arith.constant 0 : index
    %c0_42 = arith.constant 0 : index
    %93 = vector.load %arg12[%c0_41, %c0_42] : memref<32x32xbf16, #tpu.memory_space<vmem>>, vector<32x32xbf16>
    %cst_43 = arith.constant dense<0.000000e+00> : vector<8x32xf32>
    %94 = tpu.matmul %92, %93, %cst_43 {dimension_numbers = #tpu.dot_dimension_numbers<[1], [0], [0], [1], [0, 0, 1, 1], [], []>} : vector<8x32xbf16>, vector<32x32xbf16>, vector<8x32xf32> -> vector<8x32xf32>
    %c0_44 = arith.constant 0 : index
    %c0_45 = arith.constant 0 : index
    %95 = vector.load %arg13[%c0_44, %c0_45] : memref<1x32xf32, #tpu.memory_space<vmem>>, vector<1x32xf32>
    %96 = vector.broadcast %95 : vector<1x32xf32> to vector<8x32xf32>
    %97 = arith.addf %94, %96 : vector<8x32xf32>
    %98 = arith.addf %9, %97 : vector<8x32xf32>
    %99 = vector.shape_cast %98 : vector<8x32xf32> to vector<1x8x32xf32>
    %c0_46 = arith.constant 0 : index
    %c0_47 = arith.constant 0 : index
    %c0_48 = arith.constant 0 : index
    %100 = vector.load %arg14[%c0_46, %c0_47, %c0_48] : memref<1x8x32xf32, #tpu.memory_space<vmem>>, vector<1x8x32xf32>
    tpu.vector_store %arg14[%c0_46, %c0_47, %c0_48], %99 {strides = array<i32>} : memref<1x8x32xf32, #tpu.memory_space<vmem>>, vector<1x8x32xf32>,
    return
  }
  func.func @transform_0(%arg0: i32, %arg1: i32) -> (i32, i32, i32) {
    %c0_i32 = arith.constant 0 : i32
    %c0_i32_0 = arith.constant 0 : i32
    %c0_i32_1 = arith.constant 0 : i32
    return %arg0, %c0_i32, %c0_i32_0 : i32, i32, i32
  }
  func.func @transform_1(%arg0: i32, %arg1: i32) -> (i32, i32, i32) {
    %c0_i32 = arith.constant 0 : i32
    %c0_i32_0 = arith.constant 0 : i32
    return %arg0, %arg1, %c0_i32 : i32, i32, i32
  }
  func.func @transform_2(%arg0: i32, %arg1: i32) -> (i32, i32) {
    %c0_i32 = arith.constant 0 : i32
    %c0_i32_0 = arith.constant 0 : i32
    %c0_i32_1 = arith.constant 0 : i32
    return %c0_i32, %c0_i32_0 : i32, i32
  }
  func.func @transform_3(%arg0: i32, %arg1: i32) -> (i32, i32) {
    %c0_i32 = arith.constant 0 : i32
    %c0_i32_0 = arith.constant 0 : i32
    %c0_i32_1 = arith.constant 0 : i32
    return %c0_i32, %c0_i32_0 : i32, i32
  }
  func.func @transform_4(%arg0: i32, %arg1: i32) -> (i32, i32) {
    %c0_i32 = arith.constant 0 : i32
    %c0_i32_0 = arith.constant 0 : i32
    %c0_i32_1 = arith.constant 0 : i32
    return %c0_i32, %c0_i32_0 : i32, i32
  }
  func.func @transform_5(%arg0: i32, %arg1: i32) -> (i32, i32) {
    %c0_i32 = arith.constant 0 : i32
    %c0_i32_0 = arith.constant 0 : i32
    %c0_i32_1 = arith.constant 0 : i32
    return %c0_i32, %c0_i32_0 : i32, i32
  }
  func.func @transform_6(%arg0: i32, %arg1: i32) -> (i32, i32) {
    %c0_i32 = arith.constant 0 : i32
    %c0_i32_0 = arith.constant 0 : i32
    %c0_i32_1 = arith.constant 0 : i32
    return %c0_i32, %c0_i32_0 : i32, i32
  }
  func.func @transform_7(%arg0: i32, %arg1: i32) -> (i32, i32) {
    %c0_i32 = arith.constant 0 : i32
    %c0_i32_0 = arith.constant 0 : i32
    %c0_i32_1 = arith.constant 0 : i32
    return %c0_i32, %c0_i32_0 : i32, i32
  }
  func.func @transform_8(%arg0: i32, %arg1: i32) -> (i32, i32) {
    %c0_i32 = arith.constant 0 : i32
    %c0_i32_0 = arith.constant 0 : i32
    %c0_i32_1 = arith.constant 0 : i32
    return %c0_i32, %c0_i32_0 : i32, i32
  }
  func.func @transform_9(%arg0: i32, %arg1: i32) -> (i32, i32) {
    %c0_i32 = arith.constant 0 : i32
    %c0_i32_0 = arith.constant 0 : i32
    %c0_i32_1 = arith.constant 0 : i32
    return %c0_i32, %c0_i32_0 : i32, i32
  }
  func.func @transform_10(%arg0: i32, %arg1: i32) -> (i32, i32) {
    %c0_i32 = arith.constant 0 : i32
    %c0_i32_0 = arith.constant 0 : i32
    %c0_i32_1 = arith.constant 0 : i32
    return %c0_i32, %c0_i32_0 : i32, i32
  }
  func.func @transform_11(%arg0: i32, %arg1: i32) -> (i32, i32) {
    %c0_i32 = arith.constant 0 : i32
    %c0_i32_0 = arith.constant 0 : i32
    %c0_i32_1 = arith.constant 0 : i32
    return %c0_i32, %c0_i32_0 : i32, i32
  }
  func.func @transform_12(%arg0: i32, %arg1: i32) -> (i32, i32, i32) {
    %c0_i32 = arith.constant 0 : i32
    %c0_i32_0 = arith.constant 0 : i32
    return %arg0, %arg1, %c0_i32 : i32, i32, i32
  }
}

module attributes {stable_mosaic.version = 11 : i64} {
  func.func @_attn_sublayer_kernel(%arg0: i32, %arg1: i32, %arg2: memref<1x8x32xf32, #tpu.memory_space<vmem>>, %arg3: memref<1x32xf32, #tpu.memory_space<vmem>>, %arg4: memref<1x32xf32, #tpu.memory_space<vmem>>, %arg5: memref<32x32xbf16, #tpu.memory_space<vmem>>, %arg6: memref<1x32xf32, #tpu.memory_space<vmem>>, %arg7: memref<32x32xbf16, #tpu.memory_space<vmem>>, %arg8: memref<1x32xf32, #tpu.memory_space<vmem>>, %arg9: memref<32x32xbf16, #tpu.memory_space<vmem>>, %arg10: memref<1x32xf32, #tpu.memory_space<vmem>>, %arg11: memref<32x32xbf16, #tpu.memory_space<vmem>>, %arg12: memref<1x32xf32, #tpu.memory_space<vmem>>, %arg13: memref<1x8x32xf32, #tpu.memory_space<vmem>>, %arg14: memref<8x32xbf16, #tpu.memory_space<vmem>>, %arg15: memref<8x32xbf16, #tpu.memory_space<vmem>>, %arg16: memref<8x32xf32, #tpu.memory_space<vmem>>) attributes {dimension_semantics = [#tpu.dimension_semantics<parallel>, #tpu.dimension_semantics<arbitrary>], iteration_bounds = array<i64: 2, 1>, scalar_prefetch = 0 : i64, scratch_operands = 3 : i64, tpu.core_type = #tpu.core_type<tc>, window_params = [{transform_indices = @transform_0, window_bounds = array<i64: 1, 8, 32>}, {pipeline_mode = #tpu.pipeline_mode<synchronous>, transform_indices = @transform_1, window_bounds = array<i64: 1, 32>}, {pipeline_mode = #tpu.pipeline_mode<synchronous>, transform_indices = @transform_2, window_bounds = array<i64: 1, 32>}, {pipeline_mode = #tpu.pipeline_mode<synchronous>, transform_indices = @transform_3, window_bounds = array<i64: 32, 32>}, {pipeline_mode = #tpu.pipeline_mode<synchronous>, transform_indices = @transform_4, window_bounds = array<i64: 1, 32>}, {pipeline_mode = #tpu.pipeline_mode<synchronous>, transform_indices = @transform_5, window_bounds = array<i64: 32, 32>}, {pipeline_mode = #tpu.pipeline_mode<synchronous>, transform_indices = @transform_6, window_bounds = array<i64: 1, 32>}, {pipeline_mode = #tpu.pipeline_mode<synchronous>, transform_indices = @transform_7, window_bounds = array<i64: 32, 32>}, {pipeline_mode = #tpu.pipeline_mode<synchronous>, transform_indices = @transform_8, window_bounds = array<i64: 1, 32>}, {pipeline_mode = #tpu.pipeline_mode<synchronous>, transform_indices = @transform_9, window_bounds = array<i64: 32, 32>}, {pipeline_mode = #tpu.pipeline_mode<synchronous>, transform_indices = @transform_10, window_bounds = array<i64: 1, 32>}, {transform_indices = @transform_11, window_bounds = array<i64: 1, 8, 32>}]} {
    %c0 = arith.constant 0 : index
    %c0_0 = arith.constant 0 : index
    %0 = vector.load %arg3[%c0, %c0_0] : memref<1x32xf32, #tpu.memory_space<vmem>>, vector<1x32xf32>
    %c0_1 = arith.constant 0 : index
    %c0_2 = arith.constant 0 : index
    %1 = vector.load %arg4[%c0_1, %c0_2] : memref<1x32xf32, #tpu.memory_space<vmem>>, vector<1x32xf32>
    %c0_i32 = arith.constant 0 : i32
    %2 = arith.cmpi eq, %arg1, %c0_i32 : i32
    %3 = arith.extui %2 : i1 to i32
    %c0_i32_3 = arith.constant 0 : i32
    %4 = arith.cmpi ne, %3, %c0_i32_3 : i32
    scf.if %4 {
      %c0_53 = arith.constant 0 : index
      %c0_54 = arith.constant 0 : index
      %c0_55 = arith.constant 0 : index
      %132 = vector.load %arg2[%c0_53, %c0_54, %c0_55] : memref<1x8x32xf32, #tpu.memory_space<vmem>>, vector<1x8x32xf32>
      %133 = vector.shape_cast %132 : vector<1x8x32xf32> to vector<8x32xf32>
      %cst_56 = arith.constant dense<0.000000e+00> : vector<8xf32>
      %134 = vector.multi_reduction <add>, %133, %cst_56 [1] : vector<8x32xf32> to vector<8xf32>
      %135 = vector.shape_cast %134 : vector<8xf32> to vector<8x1xf32>
      %cst_57 = arith.constant 3.200000e+01 : f32
      %136 = vector.broadcast %cst_57 : f32 to vector<8x1xf32>
      %137 = arith.divf %135, %136 : vector<8x1xf32>
      %138 = vector.broadcast %137 : vector<8x1xf32> to vector<8x32xf32>
      %139 = arith.subf %133, %138 : vector<8x32xf32>
      %140 = arith.mulf %139, %139 : vector<8x32xf32>
      %cst_58 = arith.constant dense<0.000000e+00> : vector<8xf32>
      %141 = vector.multi_reduction <add>, %140, %cst_58 [1] : vector<8x32xf32> to vector<8xf32>
      %142 = vector.shape_cast %141 : vector<8xf32> to vector<8x1xf32>
      %cst_59 = arith.constant 0.0322580636 : f32
      %143 = vector.broadcast %cst_59 : f32 to vector<8x1xf32>
      %144 = arith.mulf %142, %143 : vector<8x1xf32>
      %145 = math.sqrt %144 : vector<8x1xf32>
      %cst_60 = arith.constant 9.99999997E-7 : f32
      %146 = vector.broadcast %cst_60 : f32 to vector<8x1xf32>
      %147 = arith.addf %145, %146 : vector<8x1xf32>
      %148 = tpu.reciprocal %147 : vector<8x1xf32> -> vector<8x1xf32>
      %149 = vector.broadcast %0 : vector<1x32xf32> to vector<8x32xf32>
      %150 = arith.mulf %149, %139 : vector<8x32xf32>
      %151 = vector.broadcast %148 : vector<8x1xf32> to vector<8x32xf32>
      %152 = arith.mulf %150, %151 : vector<8x32xf32>
      %153 = vector.broadcast %1 : vector<1x32xf32> to vector<8x32xf32>
      %154 = arith.addf %152, %153 : vector<8x32xf32>
      %155 = arith.truncf %154 : vector<8x32xf32> to vector<8x32xbf16>
      %c0_61 = arith.constant 0 : index
      %c0_62 = arith.constant 0 : index
      %156 = vector.load %arg7[%c0_61, %c0_62] : memref<32x32xbf16, #tpu.memory_space<vmem>>, vector<32x32xbf16>
      %cst_63 = arith.constant dense<0.000000e+00> : vector<8x32xf32>
      %157 = tpu.matmul %155, %156, %cst_63 {dimension_numbers = #tpu.dot_dimension_numbers<[1], [0], [0], [1], [0, 0, 1, 1], [], []>} : vector<8x32xbf16>, vector<32x32xbf16>, vector<8x32xf32> -> vector<8x32xf32>
      %c0_64 = arith.constant 0 : index
      %c0_65 = arith.constant 0 : index
      %158 = vector.load %arg8[%c0_64, %c0_65] : memref<1x32xf32, #tpu.memory_space<vmem>>, vector<1x32xf32>
      %159 = vector.broadcast %158 : vector<1x32xf32> to vector<8x32xf32>
      %160 = arith.addf %157, %159 : vector<8x32xf32>
      %161 = arith.truncf %160 : vector<8x32xf32> to vector<8x32xbf16>
      %c0_66 = arith.constant 0 : index
      %c0_67 = arith.constant 0 : index
      %162 = vector.load %arg14[%c0_66, %c0_67] : memref<8x32xbf16, #tpu.memory_space<vmem>>, vector<8x32xbf16>
      tpu.vector_store %arg14[%c0_66, %c0_67], %161 {strides = array<i32>} : memref<8x32xbf16, #tpu.memory_space<vmem>>, vector<8x32xbf16>,
      %c0_68 = arith.constant 0 : index
      %c0_69 = arith.constant 0 : index
      %163 = vector.load %arg9[%c0_68, %c0_69] : memref<32x32xbf16, #tpu.memory_space<vmem>>, vector<32x32xbf16>
      %cst_70 = arith.constant dense<0.000000e+00> : vector<8x32xf32>
      %164 = tpu.matmul %155, %163, %cst_70 {dimension_numbers = #tpu.dot_dimension_numbers<[1], [0], [0], [1], [0, 0, 1, 1], [], []>} : vector<8x32xbf16>, vector<32x32xbf16>, vector<8x32xf32> -> vector<8x32xf32>
      %c0_71 = arith.constant 0 : index
      %c0_72 = arith.constant 0 : index
      %165 = vector.load %arg10[%c0_71, %c0_72] : memref<1x32xf32, #tpu.memory_space<vmem>>, vector<1x32xf32>
      %166 = vector.broadcast %165 : vector<1x32xf32> to vector<8x32xf32>
      %167 = arith.addf %164, %166 : vector<8x32xf32>
      %168 = arith.truncf %167 : vector<8x32xf32> to vector<8x32xbf16>
      %c0_73 = arith.constant 0 : index
      %c0_74 = arith.constant 0 : index
      %169 = vector.load %arg15[%c0_73, %c0_74] : memref<8x32xbf16, #tpu.memory_space<vmem>>, vector<8x32xbf16>
      tpu.vector_store %arg15[%c0_73, %c0_74], %168 {strides = array<i32>} : memref<8x32xbf16, #tpu.memory_space<vmem>>, vector<8x32xbf16>,
    } else {
    }
    %c8_i32 = arith.constant 8 : i32
    %5 = arith.muli %arg1, %c8_i32 : i32
    %6 = tpu.assume_multiple %5, 8 : i32
    %c0_4 = arith.constant 0 : index
    %7 = arith.index_cast %6 : i32 to index
    %c0_5 = arith.constant 0 : index
    %8 = vector.load %arg2[%c0_4, %7, %c0_5] : memref<1x8x32xf32, #tpu.memory_space<vmem>>, vector<1x8x32xf32>
    %9 = vector.shape_cast %8 : vector<1x8x32xf32> to vector<8x32xf32>
    %cst = arith.constant dense<0.000000e+00> : vector<8xf32>
    %10 = vector.multi_reduction <add>, %9, %cst [1] : vector<8x32xf32> to vector<8xf32>
    %11 = vector.shape_cast %10 : vector<8xf32> to vector<8x1xf32>
    %cst_6 = arith.constant 3.200000e+01 : f32
    %12 = vector.broadcast %cst_6 : f32 to vector<8x1xf32>
    %13 = arith.divf %11, %12 : vector<8x1xf32>
    %14 = vector.broadcast %13 : vector<8x1xf32> to vector<8x32xf32>
    %15 = arith.subf %9, %14 : vector<8x32xf32>
    %16 = arith.mulf %15, %15 : vector<8x32xf32>
    %cst_7 = arith.constant dense<0.000000e+00> : vector<8xf32>
    %17 = vector.multi_reduction <add>, %16, %cst_7 [1] : vector<8x32xf32> to vector<8xf32>
    %18 = vector.shape_cast %17 : vector<8xf32> to vector<8x1xf32>
    %cst_8 = arith.constant 0.0322580636 : f32
    %19 = vector.broadcast %cst_8 : f32 to vector<8x1xf32>
    %20 = arith.mulf %18, %19 : vector<8x1xf32>
    %21 = math.sqrt %20 : vector<8x1xf32>
    %cst_9 = arith.constant 9.99999997E-7 : f32
    %22 = vector.broadcast %cst_9 : f32 to vector<8x1xf32>
    %23 = arith.addf %21, %22 : vector<8x1xf32>
    %24 = tpu.reciprocal %23 : vector<8x1xf32> -> vector<8x1xf32>
    %25 = vector.broadcast %0 : vector<1x32xf32> to vector<8x32xf32>
    %26 = arith.mulf %25, %15 : vector<8x32xf32>
    %27 = vector.broadcast %24 : vector<8x1xf32> to vector<8x32xf32>
    %28 = arith.mulf %26, %27 : vector<8x32xf32>
    %29 = vector.broadcast %1 : vector<1x32xf32> to vector<8x32xf32>
    %30 = arith.addf %28, %29 : vector<8x32xf32>
    %31 = arith.truncf %30 : vector<8x32xf32> to vector<8x32xbf16>
    %c0_10 = arith.constant 0 : index
    %c0_11 = arith.constant 0 : index
    %32 = vector.load %arg5[%c0_10, %c0_11] : memref<32x32xbf16, #tpu.memory_space<vmem>>, vector<32x32xbf16>
    %cst_12 = arith.constant dense<0.000000e+00> : vector<8x32xf32>
    %33 = tpu.matmul %31, %32, %cst_12 {dimension_numbers = #tpu.dot_dimension_numbers<[1], [0], [0], [1], [0, 0, 1, 1], [], []>} : vector<8x32xbf16>, vector<32x32xbf16>, vector<8x32xf32> -> vector<8x32xf32>
    %c0_13 = arith.constant 0 : index
    %c0_14 = arith.constant 0 : index
    %34 = vector.load %arg6[%c0_13, %c0_14] : memref<1x32xf32, #tpu.memory_space<vmem>>, vector<1x32xf32>
    %35 = vector.broadcast %34 : vector<1x32xf32> to vector<8x32xf32>
    %36 = arith.addf %33, %35 : vector<8x32xf32>
    %cst_15 = arith.constant 0.353553385 : f32
    %37 = vector.broadcast %cst_15 : f32 to vector<8x32xf32>
    %38 = arith.mulf %36, %37 : vector<8x32xf32>
    %39 = arith.truncf %38 : vector<8x32xf32> to vector<8x32xbf16>
    %40 = tpu.iota {dimensions = array<i32: 0>} : vector<8x8xi32>
    %41 = vector.broadcast %6 : i32 to vector<8x8xi32>
    %42 = arith.addi %41, %40 : vector<8x8xi32>
    %43 = tpu.iota {dimensions = array<i32: 1>} : vector<8x8xi32>
    %44 = arith.cmpi sgt, %43, %42 : vector<8x8xi32>
    %cst_16 = arith.constant -1.000000e+09 : f32
    %cst_17 = arith.constant 0.000000e+00 : f32
    %45 = vector.broadcast %cst_16 : f32 to vector<8x8xf32>
    %46 = vector.broadcast %cst_17 : f32 to vector<8x8xf32>
    %47 = arith.select %44, %45, %46 : vector<8x8xi1>, vector<8x8xf32>
    %c0_18 = arith.constant 0 : index
    %c0_19 = arith.constant 0 : index
    %48 = vector.load %arg14[%c0_18, %c0_19] : memref<8x32xbf16, #tpu.memory_space<vmem>>, vector<8x32xbf16>
    %c0_20 = arith.constant 0 : index
    %c0_21 = arith.constant 0 : index
    %49 = vector.load %arg15[%c0_20, %c0_21] : memref<8x32xbf16, #tpu.memory_space<vmem>>, vector<8x32xbf16>
    %50 = vector.extract_strided_slice %39 {offsets = [0, 0], sizes = [8, 8], strides = [1, 1]} : vector<8x32xbf16> to vector<8x8xbf16>
    %51 = vector.extract_strided_slice %48 {offsets = [0, 0], sizes = [8, 8], strides = [1, 1]} : vector<8x32xbf16> to vector<8x8xbf16>
    %cst_22 = arith.constant dense<0.000000e+00> : vector<8x8xf32>
    %52 = tpu.matmul %50, %51, %cst_22 {dimension_numbers = #tpu.dot_dimension_numbers<[1], [1], [0], [0], [0, 0, 1, 0], [], []>} : vector<8x8xbf16>, vector<8x8xbf16>, vector<8x8xf32> -> vector<8x8xf32>
    %53 = arith.addf %52, %47 : vector<8x8xf32>
    %cst_23 = arith.constant dense<0xFF800000> : vector<8xf32>
    %54 = vector.multi_reduction <maximumf>, %53, %cst_23 [1] : vector<8x8xf32> to vector<8xf32>
    %55 = vector.shape_cast %54 : vector<8xf32> to vector<8x1xf32>
    %56 = vector.broadcast %55 : vector<8x1xf32> to vector<8x8xf32>
    %57 = arith.subf %53, %56 : vector<8x8xf32>
    %58 = math.exp %57 : vector<8x8xf32>
    %cst_24 = arith.constant dense<0.000000e+00> : vector<8xf32>
    %59 = vector.multi_reduction <add>, %58, %cst_24 [1] : vector<8x8xf32> to vector<8xf32>
    %60 = vector.shape_cast %59 : vector<8xf32> to vector<8x1xf32>
    %61 = tpu.reciprocal %60 {approx = true} : vector<8x1xf32> -> vector<8x1xf32>
    %62 = vector.broadcast %61 : vector<8x1xf32> to vector<8x8xf32>
    %63 = arith.mulf %58, %62 : vector<8x8xf32>
    %64 = arith.truncf %63 : vector<8x8xf32> to vector<8x8xbf16>
    %65 = vector.extract_strided_slice %49 {offsets = [0, 0], sizes = [8, 8], strides = [1, 1]} : vector<8x32xbf16> to vector<8x8xbf16>
    %cst_25 = arith.constant dense<0.000000e+00> : vector<8x8xf32>
    %66 = tpu.matmul %64, %65, %cst_25 {dimension_numbers = #tpu.dot_dimension_numbers<[1], [0], [0], [1], [0, 0, 1, 1], [], []>} : vector<8x8xbf16>, vector<8x8xbf16>, vector<8x8xf32> -> vector<8x8xf32>
    %c0_26 = arith.constant 0 : index
    %c0_27 = arith.constant 0 : index
    %67 = vector.load %arg16[%c0_26, %c0_27] : memref<8x32xf32, #tpu.memory_space<vmem>>, vector<8x8xf32>
    tpu.vector_store %arg16[%c0_26, %c0_27], %66 {strides = array<i32>} : memref<8x32xf32, #tpu.memory_space<vmem>>, vector<8x8xf32>,
    %68 = vector.extract_strided_slice %39 {offsets = [0, 8], sizes = [8, 8], strides = [1, 1]} : vector<8x32xbf16> to vector<8x8xbf16>
    %69 = vector.extract_strided_slice %48 {offsets = [0, 8], sizes = [8, 8], strides = [1, 1]} : vector<8x32xbf16> to vector<8x8xbf16>
    %cst_28 = arith.constant dense<0.000000e+00> : vector<8x8xf32>
    %70 = tpu.matmul %68, %69, %cst_28 {dimension_numbers = #tpu.dot_dimension_numbers<[1], [1], [0], [0], [0, 0, 1, 0], [], []>} : vector<8x8xbf16>, vector<8x8xbf16>, vector<8x8xf32> -> vector<8x8xf32>
    %71 = arith.addf %70, %47 : vector<8x8xf32>
    %cst_29 = arith.constant dense<0xFF800000> : vector<8xf32>
    %72 = vector.multi_reduction <maximumf>, %71, %cst_29 [1] : vector<8x8xf32> to vector<8xf32>
    %73 = vector.shape_cast %72 : vector<8xf32> to vector<8x1xf32>
    %74 = vector.broadcast %73 : vector<8x1xf32> to vector<8x8xf32>
    %75 = arith.subf %71, %74 : vector<8x8xf32>
    %76 = math.exp %75 : vector<8x8xf32>
    %cst_30 = arith.constant dense<0.000000e+00> : vector<8xf32>
    %77 = vector.multi_reduction <add>, %76, %cst_30 [1] : vector<8x8xf32> to vector<8xf32>
    %78 = vector.shape_cast %77 : vector<8xf32> to vector<8x1xf32>
    %79 = tpu.reciprocal %78 {approx = true} : vector<8x1xf32> -> vector<8x1xf32>
    %80 = vector.broadcast %79 : vector<8x1xf32> to vector<8x8xf32>
    %81 = arith.mulf %76, %80 : vector<8x8xf32>
    %82 = arith.truncf %81 : vector<8x8xf32> to vector<8x8xbf16>
    %83 = vector.extract_strided_slice %49 {offsets = [0, 8], sizes = [8, 8], strides = [1, 1]} : vector<8x32xbf16> to vector<8x8xbf16>
    %cst_31 = arith.constant dense<0.000000e+00> : vector<8x8xf32>
    %84 = tpu.matmul %82, %83, %cst_31 {dimension_numbers = #tpu.dot_dimension_numbers<[1], [0], [0], [1], [0, 0, 1, 1], [], []>} : vector<8x8xbf16>, vector<8x8xbf16>, vector<8x8xf32> -> vector<8x8xf32>
    %c0_32 = arith.constant 0 : index
    %c8 = arith.constant 8 : index
    %85 = vector.load %arg16[%c0_32, %c8] : memref<8x32xf32, #tpu.memory_space<vmem>>, vector<8x8xf32>
    tpu.vector_store %arg16[%c0_32, %c8], %84 {strides = array<i32>} : memref<8x32xf32, #tpu.memory_space<vmem>>, vector<8x8xf32>,
    %86 = vector.extract_strided_slice %39 {offsets = [0, 16], sizes = [8, 8], strides = [1, 1]} : vector<8x32xbf16> to vector<8x8xbf16>
    %87 = vector.extract_strided_slice %48 {offsets = [0, 16], sizes = [8, 8], strides = [1, 1]} : vector<8x32xbf16> to vector<8x8xbf16>
    %cst_33 = arith.constant dense<0.000000e+00> : vector<8x8xf32>
    %88 = tpu.matmul %86, %87, %cst_33 {dimension_numbers = #tpu.dot_dimension_numbers<[1], [1], [0], [0], [0, 0, 1, 0], [], []>} : vector<8x8xbf16>, vector<8x8xbf16>, vector<8x8xf32> -> vector<8x8xf32>
    %89 = arith.addf %88, %47 : vector<8x8xf32>
    %cst_34 = arith.constant dense<0xFF800000> : vector<8xf32>
    %90 = vector.multi_reduction <maximumf>, %89, %cst_34 [1] : vector<8x8xf32> to vector<8xf32>
    %91 = vector.shape_cast %90 : vector<8xf32> to vector<8x1xf32>
    %92 = vector.broadcast %91 : vector<8x1xf32> to vector<8x8xf32>
    %93 = arith.subf %89, %92 : vector<8x8xf32>
    %94 = math.exp %93 : vector<8x8xf32>
    %cst_35 = arith.constant dense<0.000000e+00> : vector<8xf32>
    %95 = vector.multi_reduction <add>, %94, %cst_35 [1] : vector<8x8xf32> to vector<8xf32>
    %96 = vector.shape_cast %95 : vector<8xf32> to vector<8x1xf32>
    %97 = tpu.reciprocal %96 {approx = true} : vector<8x1xf32> -> vector<8x1xf32>
    %98 = vector.broadcast %97 : vector<8x1xf32> to vector<8x8xf32>
    %99 = arith.mulf %94, %98 : vector<8x8xf32>
    %100 = arith.truncf %99 : vector<8x8xf32> to vector<8x8xbf16>
    %101 = vector.extract_strided_slice %49 {offsets = [0, 16], sizes = [8, 8], strides = [1, 1]} : vector<8x32xbf16> to vector<8x8xbf16>
    %cst_36 = arith.constant dense<0.000000e+00> : vector<8x8xf32>
    %102 = tpu.matmul %100, %101, %cst_36 {dimension_numbers = #tpu.dot_dimension_numbers<[1], [0], [0], [1], [0, 0, 1, 1], [], []>} : vector<8x8xbf16>, vector<8x8xbf16>, vector<8x8xf32> -> vector<8x8xf32>
    %c0_37 = arith.constant 0 : index
    %c16 = arith.constant 16 : index
    %103 = vector.load %arg16[%c0_37, %c16] : memref<8x32xf32, #tpu.memory_space<vmem>>, vector<8x8xf32>
    tpu.vector_store %arg16[%c0_37, %c16], %102 {strides = array<i32>} : memref<8x32xf32, #tpu.memory_space<vmem>>, vector<8x8xf32>,
    %104 = vector.extract_strided_slice %39 {offsets = [0, 24], sizes = [8, 8], strides = [1, 1]} : vector<8x32xbf16> to vector<8x8xbf16>
    %105 = vector.extract_strided_slice %48 {offsets = [0, 24], sizes = [8, 8], strides = [1, 1]} : vector<8x32xbf16> to vector<8x8xbf16>
    %cst_38 = arith.constant dense<0.000000e+00> : vector<8x8xf32>
    %106 = tpu.matmul %104, %105, %cst_38 {dimension_numbers = #tpu.dot_dimension_numbers<[1], [1], [0], [0], [0, 0, 1, 0], [], []>} : vector<8x8xbf16>, vector<8x8xbf16>, vector<8x8xf32> -> vector<8x8xf32>
    %107 = arith.addf %106, %47 : vector<8x8xf32>
    %cst_39 = arith.constant dense<0xFF800000> : vector<8xf32>
    %108 = vector.multi_reduction <maximumf>, %107, %cst_39 [1] : vector<8x8xf32> to vector<8xf32>
    %109 = vector.shape_cast %108 : vector<8xf32> to vector<8x1xf32>
    %110 = vector.broadcast %109 : vector<8x1xf32> to vector<8x8xf32>
    %111 = arith.subf %107, %110 : vector<8x8xf32>
    %112 = math.exp %111 : vector<8x8xf32>
    %cst_40 = arith.constant dense<0.000000e+00> : vector<8xf32>
    %113 = vector.multi_reduction <add>, %112, %cst_40 [1] : vector<8x8xf32> to vector<8xf32>
    %114 = vector.shape_cast %113 : vector<8xf32> to vector<8x1xf32>
    %115 = tpu.reciprocal %114 {approx = true} : vector<8x1xf32> -> vector<8x1xf32>
    %116 = vector.broadcast %115 : vector<8x1xf32> to vector<8x8xf32>
    %117 = arith.mulf %112, %116 : vector<8x8xf32>
    %118 = arith.truncf %117 : vector<8x8xf32> to vector<8x8xbf16>
    %119 = vector.extract_strided_slice %49 {offsets = [0, 24], sizes = [8, 8], strides = [1, 1]} : vector<8x32xbf16> to vector<8x8xbf16>
    %cst_41 = arith.constant dense<0.000000e+00> : vector<8x8xf32>
    %120 = tpu.matmul %118, %119, %cst_41 {dimension_numbers = #tpu.dot_dimension_numbers<[1], [0], [0], [1], [0, 0, 1, 1], [], []>} : vector<8x8xbf16>, vector<8x8xbf16>, vector<8x8xf32> -> vector<8x8xf32>
    %c0_42 = arith.constant 0 : index
    %c24 = arith.constant 24 : index
    %121 = vector.load %arg16[%c0_42, %c24] : memref<8x32xf32, #tpu.memory_space<vmem>>, vector<8x8xf32>
    tpu.vector_store %arg16[%c0_42, %c24], %120 {strides = array<i32>} : memref<8x32xf32, #tpu.memory_space<vmem>>, vector<8x8xf32>,
    %c0_43 = arith.constant 0 : index
    %c0_44 = arith.constant 0 : index
    %122 = vector.load %arg16[%c0_43, %c0_44] : memref<8x32xf32, #tpu.memory_space<vmem>>, vector<8x32xf32>
    %123 = arith.truncf %122 : vector<8x32xf32> to vector<8x32xbf16>
    %c0_45 = arith.constant 0 : index
    %c0_46 = arith.constant 0 : index
    %124 = vector.load %arg11[%c0_45, %c0_46] : memref<32x32xbf16, #tpu.memory_space<vmem>>, vector<32x32xbf16>
    %cst_47 = arith.constant dense<0.000000e+00> : vector<8x32xf32>
    %125 = tpu.matmul %123, %124, %cst_47 {dimension_numbers = #tpu.dot_dimension_numbers<[1], [0], [0], [1], [0, 0, 1, 1], [], []>} : vector<8x32xbf16>, vector<32x32xbf16>, vector<8x32xf32> -> vector<8x32xf32>
    %c0_48 = arith.constant 0 : index
    %c0_49 = arith.constant 0 : index
    %126 = vector.load %arg12[%c0_48, %c0_49] : memref<1x32xf32, #tpu.memory_space<vmem>>, vector<1x32xf32>
    %127 = vector.broadcast %126 : vector<1x32xf32> to vector<8x32xf32>
    %128 = arith.addf %125, %127 : vector<8x32xf32>
    %129 = arith.addf %9, %128 : vector<8x32xf32>
    %130 = vector.shape_cast %129 : vector<8x32xf32> to vector<1x8x32xf32>
    %c0_50 = arith.constant 0 : index
    %c0_51 = arith.constant 0 : index
    %c0_52 = arith.constant 0 : index
    %131 = vector.load %arg13[%c0_50, %c0_51, %c0_52] : memref<1x8x32xf32, #tpu.memory_space<vmem>>, vector<1x8x32xf32>
    tpu.vector_store %arg13[%c0_50, %c0_51, %c0_52], %130 {strides = array<i32>} : memref<1x8x32xf32, #tpu.memory_space<vmem>>, vector<1x8x32xf32>,
    return
  }
  func.func @transform_0(%arg0: i32, %arg1: i32) -> (i32, i32, i32) {
    %c0_i32 = arith.constant 0 : i32
    %c0_i32_0 = arith.constant 0 : i32
    %c0_i32_1 = arith.constant 0 : i32
    return %arg0, %c0_i32, %c0_i32_0 : i32, i32, i32
  }
  func.func @transform_1(%arg0: i32, %arg1: i32) -> (i32, i32) {
    %c0_i32 = arith.constant 0 : i32
    %c0_i32_0 = arith.constant 0 : i32
    %c0_i32_1 = arith.constant 0 : i32
    return %c0_i32, %c0_i32_0 : i32, i32
  }
  func.func @transform_2(%arg0: i32, %arg1: i32) -> (i32, i32) {
    %c0_i32 = arith.constant 0 : i32
    %c0_i32_0 = arith.constant 0 : i32
    %c0_i32_1 = arith.constant 0 : i32
    return %c0_i32, %c0_i32_0 : i32, i32
  }
  func.func @transform_3(%arg0: i32, %arg1: i32) -> (i32, i32) {
    %c0_i32 = arith.constant 0 : i32
    %c0_i32_0 = arith.constant 0 : i32
    %c0_i32_1 = arith.constant 0 : i32
    return %c0_i32, %c0_i32_0 : i32, i32
  }
  func.func @transform_4(%arg0: i32, %arg1: i32) -> (i32, i32) {
    %c0_i32 = arith.constant 0 : i32
    %c0_i32_0 = arith.constant 0 : i32
    %c0_i32_1 = arith.constant 0 : i32
    return %c0_i32, %c0_i32_0 : i32, i32
  }
  func.func @transform_5(%arg0: i32, %arg1: i32) -> (i32, i32) {
    %c0_i32 = arith.constant 0 : i32
    %c0_i32_0 = arith.constant 0 : i32
    %c0_i32_1 = arith.constant 0 : i32
    return %c0_i32, %c0_i32_0 : i32, i32
  }
  func.func @transform_6(%arg0: i32, %arg1: i32) -> (i32, i32) {
    %c0_i32 = arith.constant 0 : i32
    %c0_i32_0 = arith.constant 0 : i32
    %c0_i32_1 = arith.constant 0 : i32
    return %c0_i32, %c0_i32_0 : i32, i32
  }
  func.func @transform_7(%arg0: i32, %arg1: i32) -> (i32, i32) {
    %c0_i32 = arith.constant 0 : i32
    %c0_i32_0 = arith.constant 0 : i32
    %c0_i32_1 = arith.constant 0 : i32
    return %c0_i32, %c0_i32_0 : i32, i32
  }
  func.func @transform_8(%arg0: i32, %arg1: i32) -> (i32, i32) {
    %c0_i32 = arith.constant 0 : i32
    %c0_i32_0 = arith.constant 0 : i32
    %c0_i32_1 = arith.constant 0 : i32
    return %c0_i32, %c0_i32_0 : i32, i32
  }
  func.func @transform_9(%arg0: i32, %arg1: i32) -> (i32, i32) {
    %c0_i32 = arith.constant 0 : i32
    %c0_i32_0 = arith.constant 0 : i32
    %c0_i32_1 = arith.constant 0 : i32
    return %c0_i32, %c0_i32_0 : i32, i32
  }
  func.func @transform_10(%arg0: i32, %arg1: i32) -> (i32, i32) {
    %c0_i32 = arith.constant 0 : i32
    %c0_i32_0 = arith.constant 0 : i32
    %c0_i32_1 = arith.constant 0 : i32
    return %c0_i32, %c0_i32_0 : i32, i32
  }
  func.func @transform_11(%arg0: i32, %arg1: i32) -> (i32, i32, i32) {
    %c0_i32 = arith.constant 0 : i32
    %c0_i32_0 = arith.constant 0 : i32
    return %arg0, %arg1, %c0_i32 : i32, i32, i32
  }
}

module attributes {stable_mosaic.version = 11 : i64} {
  func.func @_ffn_sublayer_kernel(%arg0: i32, %arg1: memref<16x32xf32, #tpu.memory_space<vmem>>, %arg2: memref<1x32xf32, #tpu.memory_space<vmem>>, %arg3: memref<1x32xf32, #tpu.memory_space<vmem>>, %arg4: memref<32x64xbf16, #tpu.memory_space<vmem>>, %arg5: memref<1x64xf32, #tpu.memory_space<vmem>>, %arg6: memref<64x32xbf16, #tpu.memory_space<vmem>>, %arg7: memref<1x32xf32, #tpu.memory_space<vmem>>, %arg8: memref<16x32xf32, #tpu.memory_space<vmem>>) attributes {dimension_semantics = [#tpu.dimension_semantics<parallel>], iteration_bounds = array<i64: 1>, scalar_prefetch = 0 : i64, scratch_operands = 0 : i64, tpu.core_type = #tpu.core_type<tc>, window_params = [{transform_indices = @transform_0, window_bounds = array<i64: 16, 32>}, {pipeline_mode = #tpu.pipeline_mode<synchronous>, transform_indices = @transform_1, window_bounds = array<i64: 1, 32>}, {pipeline_mode = #tpu.pipeline_mode<synchronous>, transform_indices = @transform_2, window_bounds = array<i64: 1, 32>}, {pipeline_mode = #tpu.pipeline_mode<synchronous>, transform_indices = @transform_3, window_bounds = array<i64: 32, 64>}, {pipeline_mode = #tpu.pipeline_mode<synchronous>, transform_indices = @transform_4, window_bounds = array<i64: 1, 64>}, {pipeline_mode = #tpu.pipeline_mode<synchronous>, transform_indices = @transform_5, window_bounds = array<i64: 64, 32>}, {pipeline_mode = #tpu.pipeline_mode<synchronous>, transform_indices = @transform_6, window_bounds = array<i64: 1, 32>}, {transform_indices = @transform_7, window_bounds = array<i64: 16, 32>}]} {
    %c0 = arith.constant 0 : index
    %c0_0 = arith.constant 0 : index
    %0 = vector.load %arg1[%c0, %c0_0] : memref<16x32xf32, #tpu.memory_space<vmem>>, vector<16x32xf32>
    %c0_1 = arith.constant 0 : index
    %c0_2 = arith.constant 0 : index
    %1 = vector.load %arg2[%c0_1, %c0_2] : memref<1x32xf32, #tpu.memory_space<vmem>>, vector<1x32xf32>
    %c0_3 = arith.constant 0 : index
    %c0_4 = arith.constant 0 : index
    %2 = vector.load %arg3[%c0_3, %c0_4] : memref<1x32xf32, #tpu.memory_space<vmem>>, vector<1x32xf32>
    %cst = arith.constant dense<0.000000e+00> : vector<16xf32>
    %3 = vector.multi_reduction <add>, %0, %cst [1] : vector<16x32xf32> to vector<16xf32>
    %4 = vector.shape_cast %3 : vector<16xf32> to vector<16x1xf32>
    %cst_5 = arith.constant 3.200000e+01 : f32
    %5 = vector.broadcast %cst_5 : f32 to vector<16x1xf32>
    %6 = arith.divf %4, %5 : vector<16x1xf32>
    %7 = vector.broadcast %6 : vector<16x1xf32> to vector<16x32xf32>
    %8 = arith.subf %0, %7 : vector<16x32xf32>
    %9 = arith.mulf %8, %8 : vector<16x32xf32>
    %cst_6 = arith.constant dense<0.000000e+00> : vector<16xf32>
    %10 = vector.multi_reduction <add>, %9, %cst_6 [1] : vector<16x32xf32> to vector<16xf32>
    %11 = vector.shape_cast %10 : vector<16xf32> to vector<16x1xf32>
    %cst_7 = arith.constant 0.0322580636 : f32
    %12 = vector.broadcast %cst_7 : f32 to vector<16x1xf32>
    %13 = arith.mulf %11, %12 : vector<16x1xf32>
    %14 = math.sqrt %13 : vector<16x1xf32>
    %cst_8 = arith.constant 9.99999997E-7 : f32
    %15 = vector.broadcast %cst_8 : f32 to vector<16x1xf32>
    %16 = arith.addf %14, %15 : vector<16x1xf32>
    %17 = tpu.reciprocal %16 : vector<16x1xf32> -> vector<16x1xf32>
    %18 = vector.broadcast %1 : vector<1x32xf32> to vector<16x32xf32>
    %19 = arith.mulf %18, %8 : vector<16x32xf32>
    %20 = vector.broadcast %17 : vector<16x1xf32> to vector<16x32xf32>
    %21 = arith.mulf %19, %20 : vector<16x32xf32>
    %22 = vector.broadcast %2 : vector<1x32xf32> to vector<16x32xf32>
    %23 = arith.addf %21, %22 : vector<16x32xf32>
    %24 = arith.truncf %23 : vector<16x32xf32> to vector<16x32xbf16>
    %c0_9 = arith.constant 0 : index
    %c0_10 = arith.constant 0 : index
    %25 = vector.load %arg4[%c0_9, %c0_10] : memref<32x64xbf16, #tpu.memory_space<vmem>>, vector<32x64xbf16>
    %cst_11 = arith.constant dense<0.000000e+00> : vector<16x64xf32>
    %26 = tpu.matmul %24, %25, %cst_11 {dimension_numbers = #tpu.dot_dimension_numbers<[1], [0], [0], [1], [0, 0, 1, 1], [], []>} : vector<16x32xbf16>, vector<32x64xbf16>, vector<16x64xf32> -> vector<16x64xf32>
    %c0_12 = arith.constant 0 : index
    %c0_13 = arith.constant 0 : index
    %27 = vector.load %arg5[%c0_12, %c0_13] : memref<1x64xf32, #tpu.memory_space<vmem>>, vector<1x64xf32>
    %28 = vector.broadcast %27 : vector<1x64xf32> to vector<16x64xf32>
    %29 = arith.addf %26, %28 : vector<16x64xf32>
    %cst_14 = arith.constant 0.000000e+00 : f32
    %30 = vector.broadcast %cst_14 : f32 to vector<16x64xf32>
    %31 = arith.maximumf %29, %30 : vector<16x64xf32>
    %32 = arith.truncf %31 : vector<16x64xf32> to vector<16x64xbf16>
    %c0_15 = arith.constant 0 : index
    %c0_16 = arith.constant 0 : index
    %33 = vector.load %arg6[%c0_15, %c0_16] : memref<64x32xbf16, #tpu.memory_space<vmem>>, vector<64x32xbf16>
    %cst_17 = arith.constant dense<0.000000e+00> : vector<16x32xf32>
    %34 = tpu.matmul %32, %33, %cst_17 {dimension_numbers = #tpu.dot_dimension_numbers<[1], [0], [0], [1], [0, 0, 1, 1], [], []>} : vector<16x64xbf16>, vector<64x32xbf16>, vector<16x32xf32> -> vector<16x32xf32>
    %35 = arith.addf %0, %34 : vector<16x32xf32>
    %c0_18 = arith.constant 0 : index
    %c0_19 = arith.constant 0 : index
    %36 = vector.load %arg7[%c0_18, %c0_19] : memref<1x32xf32, #tpu.memory_space<vmem>>, vector<1x32xf32>
    %37 = vector.broadcast %36 : vector<1x32xf32> to vector<16x32xf32>
    %38 = arith.addf %35, %37 : vector<16x32xf32>
    %c0_20 = arith.constant 0 : index
    %c0_21 = arith.constant 0 : index
    %39 = vector.load %arg8[%c0_20, %c0_21] : memref<16x32xf32, #tpu.memory_space<vmem>>, vector<16x32xf32>
    tpu.vector_store %arg8[%c0_20, %c0_21], %38 {strides = array<i32>} : memref<16x32xf32, #tpu.memory_space<vmem>>, vector<16x32xf32>,
    return
  }
  func.func @transform_0(%arg0: i32) -> (i32, i32) {
    %c0_i32 = arith.constant 0 : i32
    %c0_i32_0 = arith.constant 0 : i32
    return %arg0, %c0_i32 : i32, i32
  }
  func.func @transform_1(%arg0: i32) -> (i32, i32) {
    %c0_i32 = arith.constant 0 : i32
    %c0_i32_0 = arith.constant 0 : i32
    %c0_i32_1 = arith.constant 0 : i32
    return %c0_i32, %c0_i32_0 : i32, i32
  }
  func.func @transform_2(%arg0: i32) -> (i32, i32) {
    %c0_i32 = arith.constant 0 : i32
    %c0_i32_0 = arith.constant 0 : i32
    %c0_i32_1 = arith.constant 0 : i32
    return %c0_i32, %c0_i32_0 : i32, i32
  }
  func.func @transform_3(%arg0: i32) -> (i32, i32) {
    %c0_i32 = arith.constant 0 : i32
    %c0_i32_0 = arith.constant 0 : i32
    %c0_i32_1 = arith.constant 0 : i32
    return %c0_i32, %c0_i32_0 : i32, i32
  }
  func.func @transform_4(%arg0: i32) -> (i32, i32) {
    %c0_i32 = arith.constant 0 : i32
    %c0_i32_0 = arith.constant 0 : i32
    %c0_i32_1 = arith.constant 0 : i32
    return %c0_i32, %c0_i32_0 : i32, i32
  }
  func.func @transform_5(%arg0: i32) -> (i32, i32) {
    %c0_i32 = arith.constant 0 : i32
    %c0_i32_0 = arith.constant 0 : i32
    %c0_i32_1 = arith.constant 0 : i32
    return %c0_i32, %c0_i32_0 : i32, i32
  }
  func.func @transform_6(%arg0: i32) -> (i32, i32) {
    %c0_i32 = arith.constant 0 : i32
    %c0_i32_0 = arith.constant 0 : i32
    %c0_i32_1 = arith.constant 0 : i32
    return %c0_i32, %c0_i32_0 : i32, i32
  }
  func.func @transform_7(%arg0: i32) -> (i32, i32) {
    %c0_i32 = arith.constant 0 : i32
    %c0_i32_0 = arith.constant 0 : i32
    return %arg0, %c0_i32 : i32, i32
  }
}

module attributes {stable_mosaic.version = 11 : i64} {
  func.func @_ffn_sublayer_kernel(%arg0: i32, %arg1: memref<16x32xf32, #tpu.memory_space<vmem>>, %arg2: memref<1x32xf32, #tpu.memory_space<vmem>>, %arg3: memref<1x32xf32, #tpu.memory_space<vmem>>, %arg4: memref<32x64xbf16, #tpu.memory_space<vmem>>, %arg5: memref<1x64xf32, #tpu.memory_space<vmem>>, %arg6: memref<64x32xbf16, #tpu.memory_space<vmem>>, %arg7: memref<1x32xf32, #tpu.memory_space<vmem>>, %arg8: memref<1x32xf32, #tpu.memory_space<vmem>>, %arg9: memref<1x32xf32, #tpu.memory_space<vmem>>, %arg10: memref<16x32xf32, #tpu.memory_space<vmem>>) attributes {dimension_semantics = [#tpu.dimension_semantics<parallel>], iteration_bounds = array<i64: 1>, scalar_prefetch = 0 : i64, scratch_operands = 0 : i64, tpu.core_type = #tpu.core_type<tc>, window_params = [{transform_indices = @transform_0, window_bounds = array<i64: 16, 32>}, {pipeline_mode = #tpu.pipeline_mode<synchronous>, transform_indices = @transform_1, window_bounds = array<i64: 1, 32>}, {pipeline_mode = #tpu.pipeline_mode<synchronous>, transform_indices = @transform_2, window_bounds = array<i64: 1, 32>}, {pipeline_mode = #tpu.pipeline_mode<synchronous>, transform_indices = @transform_3, window_bounds = array<i64: 32, 64>}, {pipeline_mode = #tpu.pipeline_mode<synchronous>, transform_indices = @transform_4, window_bounds = array<i64: 1, 64>}, {pipeline_mode = #tpu.pipeline_mode<synchronous>, transform_indices = @transform_5, window_bounds = array<i64: 64, 32>}, {pipeline_mode = #tpu.pipeline_mode<synchronous>, transform_indices = @transform_6, window_bounds = array<i64: 1, 32>}, {pipeline_mode = #tpu.pipeline_mode<synchronous>, transform_indices = @transform_7, window_bounds = array<i64: 1, 32>}, {pipeline_mode = #tpu.pipeline_mode<synchronous>, transform_indices = @transform_8, window_bounds = array<i64: 1, 32>}, {transform_indices = @transform_9, window_bounds = array<i64: 16, 32>}]} {
    %c0 = arith.constant 0 : index
    %c0_0 = arith.constant 0 : index
    %0 = vector.load %arg1[%c0, %c0_0] : memref<16x32xf32, #tpu.memory_space<vmem>>, vector<16x32xf32>
    %c0_1 = arith.constant 0 : index
    %c0_2 = arith.constant 0 : index
    %1 = vector.load %arg2[%c0_1, %c0_2] : memref<1x32xf32, #tpu.memory_space<vmem>>, vector<1x32xf32>
    %c0_3 = arith.constant 0 : index
    %c0_4 = arith.constant 0 : index
    %2 = vector.load %arg3[%c0_3, %c0_4] : memref<1x32xf32, #tpu.memory_space<vmem>>, vector<1x32xf32>
    %cst = arith.constant dense<0.000000e+00> : vector<16xf32>
    %3 = vector.multi_reduction <add>, %0, %cst [1] : vector<16x32xf32> to vector<16xf32>
    %4 = vector.shape_cast %3 : vector<16xf32> to vector<16x1xf32>
    %cst_5 = arith.constant 3.200000e+01 : f32
    %5 = vector.broadcast %cst_5 : f32 to vector<16x1xf32>
    %6 = arith.divf %4, %5 : vector<16x1xf32>
    %7 = vector.broadcast %6 : vector<16x1xf32> to vector<16x32xf32>
    %8 = arith.subf %0, %7 : vector<16x32xf32>
    %9 = arith.mulf %8, %8 : vector<16x32xf32>
    %cst_6 = arith.constant dense<0.000000e+00> : vector<16xf32>
    %10 = vector.multi_reduction <add>, %9, %cst_6 [1] : vector<16x32xf32> to vector<16xf32>
    %11 = vector.shape_cast %10 : vector<16xf32> to vector<16x1xf32>
    %cst_7 = arith.constant 0.0322580636 : f32
    %12 = vector.broadcast %cst_7 : f32 to vector<16x1xf32>
    %13 = arith.mulf %11, %12 : vector<16x1xf32>
    %14 = math.sqrt %13 : vector<16x1xf32>
    %cst_8 = arith.constant 9.99999997E-7 : f32
    %15 = vector.broadcast %cst_8 : f32 to vector<16x1xf32>
    %16 = arith.addf %14, %15 : vector<16x1xf32>
    %17 = tpu.reciprocal %16 : vector<16x1xf32> -> vector<16x1xf32>
    %18 = vector.broadcast %1 : vector<1x32xf32> to vector<16x32xf32>
    %19 = arith.mulf %18, %8 : vector<16x32xf32>
    %20 = vector.broadcast %17 : vector<16x1xf32> to vector<16x32xf32>
    %21 = arith.mulf %19, %20 : vector<16x32xf32>
    %22 = vector.broadcast %2 : vector<1x32xf32> to vector<16x32xf32>
    %23 = arith.addf %21, %22 : vector<16x32xf32>
    %24 = arith.truncf %23 : vector<16x32xf32> to vector<16x32xbf16>
    %c0_9 = arith.constant 0 : index
    %c0_10 = arith.constant 0 : index
    %25 = vector.load %arg4[%c0_9, %c0_10] : memref<32x64xbf16, #tpu.memory_space<vmem>>, vector<32x64xbf16>
    %cst_11 = arith.constant dense<0.000000e+00> : vector<16x64xf32>
    %26 = tpu.matmul %24, %25, %cst_11 {dimension_numbers = #tpu.dot_dimension_numbers<[1], [0], [0], [1], [0, 0, 1, 1], [], []>} : vector<16x32xbf16>, vector<32x64xbf16>, vector<16x64xf32> -> vector<16x64xf32>
    %c0_12 = arith.constant 0 : index
    %c0_13 = arith.constant 0 : index
    %27 = vector.load %arg5[%c0_12, %c0_13] : memref<1x64xf32, #tpu.memory_space<vmem>>, vector<1x64xf32>
    %28 = vector.broadcast %27 : vector<1x64xf32> to vector<16x64xf32>
    %29 = arith.addf %26, %28 : vector<16x64xf32>
    %cst_14 = arith.constant 0.000000e+00 : f32
    %30 = vector.broadcast %cst_14 : f32 to vector<16x64xf32>
    %31 = arith.maximumf %29, %30 : vector<16x64xf32>
    %32 = arith.truncf %31 : vector<16x64xf32> to vector<16x64xbf16>
    %c0_15 = arith.constant 0 : index
    %c0_16 = arith.constant 0 : index
    %33 = vector.load %arg6[%c0_15, %c0_16] : memref<64x32xbf16, #tpu.memory_space<vmem>>, vector<64x32xbf16>
    %cst_17 = arith.constant dense<0.000000e+00> : vector<16x32xf32>
    %34 = tpu.matmul %32, %33, %cst_17 {dimension_numbers = #tpu.dot_dimension_numbers<[1], [0], [0], [1], [0, 0, 1, 1], [], []>} : vector<16x64xbf16>, vector<64x32xbf16>, vector<16x32xf32> -> vector<16x32xf32>
    %35 = arith.addf %0, %34 : vector<16x32xf32>
    %c0_18 = arith.constant 0 : index
    %c0_19 = arith.constant 0 : index
    %36 = vector.load %arg7[%c0_18, %c0_19] : memref<1x32xf32, #tpu.memory_space<vmem>>, vector<1x32xf32>
    %37 = vector.broadcast %36 : vector<1x32xf32> to vector<16x32xf32>
    %38 = arith.addf %35, %37 : vector<16x32xf32>
    %c0_20 = arith.constant 0 : index
    %c0_21 = arith.constant 0 : index
    %39 = vector.load %arg8[%c0_20, %c0_21] : memref<1x32xf32, #tpu.memory_space<vmem>>, vector<1x32xf32>
    %c0_22 = arith.constant 0 : index
    %c0_23 = arith.constant 0 : index
    %40 = vector.load %arg9[%c0_22, %c0_23] : memref<1x32xf32, #tpu.memory_space<vmem>>, vector<1x32xf32>
    %cst_24 = arith.constant dense<0.000000e+00> : vector<16xf32>
    %41 = vector.multi_reduction <add>, %38, %cst_24 [1] : vector<16x32xf32> to vector<16xf32>
    %42 = vector.shape_cast %41 : vector<16xf32> to vector<16x1xf32>
    %cst_25 = arith.constant 3.200000e+01 : f32
    %43 = vector.broadcast %cst_25 : f32 to vector<16x1xf32>
    %44 = arith.divf %42, %43 : vector<16x1xf32>
    %45 = vector.broadcast %44 : vector<16x1xf32> to vector<16x32xf32>
    %46 = arith.subf %38, %45 : vector<16x32xf32>
    %47 = arith.mulf %46, %46 : vector<16x32xf32>
    %cst_26 = arith.constant dense<0.000000e+00> : vector<16xf32>
    %48 = vector.multi_reduction <add>, %47, %cst_26 [1] : vector<16x32xf32> to vector<16xf32>
    %49 = vector.shape_cast %48 : vector<16xf32> to vector<16x1xf32>
    %cst_27 = arith.constant 0.0322580636 : f32
    %50 = vector.broadcast %cst_27 : f32 to vector<16x1xf32>
    %51 = arith.mulf %49, %50 : vector<16x1xf32>
    %52 = math.sqrt %51 : vector<16x1xf32>
    %cst_28 = arith.constant 9.99999997E-7 : f32
    %53 = vector.broadcast %cst_28 : f32 to vector<16x1xf32>
    %54 = arith.addf %52, %53 : vector<16x1xf32>
    %55 = tpu.reciprocal %54 : vector<16x1xf32> -> vector<16x1xf32>
    %56 = vector.broadcast %39 : vector<1x32xf32> to vector<16x32xf32>
    %57 = arith.mulf %56, %46 : vector<16x32xf32>
    %58 = vector.broadcast %55 : vector<16x1xf32> to vector<16x32xf32>
    %59 = arith.mulf %57, %58 : vector<16x32xf32>
    %60 = vector.broadcast %40 : vector<1x32xf32> to vector<16x32xf32>
    %61 = arith.addf %59, %60 : vector<16x32xf32>
    %c0_29 = arith.constant 0 : index
    %c0_30 = arith.constant 0 : index
    %62 = vector.load %arg10[%c0_29, %c0_30] : memref<16x32xf32, #tpu.memory_space<vmem>>, vector<16x32xf32>
    tpu.vector_store %arg10[%c0_29, %c0_30], %61 {strides = array<i32>} : memref<16x32xf32, #tpu.memory_space<vmem>>, vector<16x32xf32>,
    return
  }
  func.func @transform_0(%arg0: i32) -> (i32, i32) {
    %c0_i32 = arith.constant 0 : i32
    %c0_i32_0 = arith.constant 0 : i32
    return %arg0, %c0_i32 : i32, i32
  }
  func.func @transform_1(%arg0: i32) -> (i32, i32) {
    %c0_i32 = arith.constant 0 : i32
    %c0_i32_0 = arith.constant 0 : i32
    %c0_i32_1 = arith.constant 0 : i32
    return %c0_i32, %c0_i32_0 : i32, i32
  }
  func.func @transform_2(%arg0: i32) -> (i32, i32) {
    %c0_i32 = arith.constant 0 : i32
    %c0_i32_0 = arith.constant 0 : i32
    %c0_i32_1 = arith.constant 0 : i32
    return %c0_i32, %c0_i32_0 : i32, i32
  }
  func.func @transform_3(%arg0: i32) -> (i32, i32) {
    %c0_i32 = arith.constant 0 : i32
    %c0_i32_0 = arith.constant 0 : i32
    %c0_i32_1 = arith.constant 0 : i32
    return %c0_i32, %c0_i32_0 : i32, i32
  }
  func.func @transform_4(%arg0: i32) -> (i32, i32) {
    %c0_i32 = arith.constant 0 : i32
    %c0_i32_0 = arith.constant 0 : i32
    %c0_i32_1 = arith.constant 0 : i32
    return %c0_i32, %c0_i32_0 : i32, i32
  }
  func.func @transform_5(%arg0: i32) -> (i32, i32) {
    %c0_i32 = arith.constant 0 : i32
    %c0_i32_0 = arith.constant 0 : i32
    %c0_i32_1 = arith.constant 0 : i32
    return %c0_i32, %c0_i32_0 : i32, i32
  }
  func.func @transform_6(%arg0: i32) -> (i32, i32) {
    %c0_i32 = arith.constant 0 : i32
    %c0_i32_0 = arith.constant 0 : i32
    %c0_i32_1 = arith.constant 0 : i32
    return %c0_i32, %c0_i32_0 : i32, i32
  }
  func.func @transform_7(%arg0: i32) -> (i32, i32) {
    %c0_i32 = arith.constant 0 : i32
    %c0_i32_0 = arith.constant 0 : i32
    %c0_i32_1 = arith.constant 0 : i32
    return %c0_i32, %c0_i32_0 : i32, i32
  }
  func.func @transform_8(%arg0: i32) -> (i32, i32) {
    %c0_i32 = arith.constant 0 : i32
    %c0_i32_0 = arith.constant 0 : i32
    %c0_i32_1 = arith.constant 0 : i32
    return %c0_i32, %c0_i32_0 : i32, i32
  }
  func.func @transform_9(%arg0: i32) -> (i32, i32) {
    %c0_i32 = arith.constant 0 : i32
    %c0_i32_0 = arith.constant 0 : i32
    return %arg0, %c0_i32 : i32, i32
  }
}

</mosaic_0001>

<llo_original>
// kernel: decoder_forward.8
$region0: #{decoder_forward.8}
  #allocation0 [shape = 'u32[]', space=smem, size = 0x4, offset = 0x4, fixed_abs, tag = 'smem constant byte address 0x4 - core index']
  #allocation1 [shape = 'u32[72,128]{1,0:T(1,128)}', space=vmem, size = 0x9000, scoped, tag = 'internal scratch']
  %s0 = inlined_call_operand.vmem [shape: f32[16,32], index: 0, kind: input, shape index: {}]
  %s1 = inlined_call_operand.vmem [shape: f32[1,32], index: 1, kind: input, shape index: {}]
  %s2 = inlined_call_operand.vmem [shape: f32[1,32], index: 2, kind: input, shape index: {}]
  %s3 = inlined_call_operand.vmem [shape: bf16[32,64], index: 3, kind: input, shape index: {}]
  %s4 = inlined_call_operand.vmem [shape: f32[1,64], index: 4, kind: input, shape index: {}]
  %s5 = inlined_call_operand.vmem [shape: bf16[64,32], index: 5, kind: input, shape index: {}]
  %s6 = inlined_call_operand.vmem [shape: f32[1,32], index: 6, kind: input, shape index: {}]
  %s7 = inlined_call_operand.vmem [shape: f32[16,32], index: 7, kind: output, shape index: {}]
  %s8 = sld [smem:[#allocation0]]
  $region38: #{decoder_forward.8} parent=0
    _
  %s10 = ssub.s32 1, %s8
  %s11 = scalar_select 0, %s10, %s8
  // Predicated region
  $region2: #{decoder_forward.8} parent=0 // pred_check
    _
  $region3: #{decoder_forward.8} parent=0 // pred_check_branch
    %13 = sbr.rel (0) target = $region5
  $region4: #{decoder_forward.8} parent=0 // pred_region
    _
  $region5: #{decoder_forward.8} parent=0 // pred_fallthru
    _
  // Predicated region
  $region6: #{decoder_forward.8} parent=0 // pred_check
    _
  $region7: #{decoder_forward.8} parent=0 // pred_check_branch
    %15 = sbr.rel (0) target = $region9
  $region8: #{decoder_forward.8} parent=0 // pred_region
    _
  $region9: #{decoder_forward.8} parent=0 // pred_fallthru
    _
  // Predicated region
  $region10: #{decoder_forward.8} parent=0 // pred_check
    _
  $region11: #{decoder_forward.8} parent=0 // pred_check_branch
    %17 = sbr.rel (0) target = $region13
  $region12: #{decoder_forward.8} parent=0 // pred_region
    _
  $region13: #{decoder_forward.8} parent=0 // pred_fallthru
    _
  // Predicated region
  $region14: #{decoder_forward.8} parent=0 // pred_check
    _
  $region15: #{decoder_forward.8} parent=0 // pred_check_branch
    %19 = sbr.rel (0) target = $region17
  $region16: #{decoder_forward.8} parent=0 // pred_region
    _
  $region17: #{decoder_forward.8} parent=0 // pred_fallthru
    _
  // Predicated region
  $region18: #{decoder_forward.8} parent=0 // pred_check
    _
  $region19: #{decoder_forward.8} parent=0 // pred_check_branch
    %21 = sbr.rel (0) target = $region21
  $region20: #{decoder_forward.8} parent=0 // pred_region
    _
  $region21: #{decoder_forward.8} parent=0 // pred_fallthru
    _
  // Predicated region
  $region22: #{decoder_forward.8} parent=0 // pred_check
    _
  $region23: #{decoder_forward.8} parent=0 // pred_check_branch
    %23 = sbr.rel (0) target = $region25
  $region24: #{decoder_forward.8} parent=0 // pred_region
    _
  $region25: #{decoder_forward.8} parent=0 // pred_fallthru
    _
  // Predicated region
  $region26: #{decoder_forward.8} parent=0 // pred_check
    _
  $region27: #{decoder_forward.8} parent=0 // pred_check_branch
    %25 = sbr.rel (0) target = $region29
  $region28: #{decoder_forward.8} parent=0 // pred_region
    _
  $region29: #{decoder_forward.8} parent=0 // pred_fallthru
    _
  %v27 = vld [vmem:[%s0] sm:$0xff]
  %v28 = vld [vmem:[%s0 + $0x8] sm:$0xff]
  %v29 = vld [vmem:[%s1] sm:$0x1]
  %v30 = vld [vmem:[%s2] sm:$0x1]
  %vm31 = vcmask 261120
  %v32 = vsel %vm31, %v27, 0.0
  %33 = vadd.xlane.f32.xlu0 %v32
  %v34 = vpop.xlane.xlu0 %33
  %v35 = vsel %vm31, %v28, 0.0
  %36 = vadd.xlane.f32.xlu0 %v35
  %v37 = vpop.xlane.xlu0 %36
  %v38 = vrcp.pop 32.0
  %v39 = vmul.f32 32.0, %v38
  %v40 = vsub.f32 1.0, %v39
  %v41 = vmul.f32 %v38, %v40
  %v42 = vadd.f32 %v38, %v41
  %vm43 = vweird.f32 %v38
  %v44 = vsel %vm43, %v38, %v42
  %v45 = vmul.f32 %v34, %v44
  %v46 = vmul.f32 %v37, %v44
  %v47 = vsub.f32 %v27, %v45
  %v48 = vsub.f32 %v28, %v46
  %v49 = vmul.f32 %v47, %v47
  %v50 = vmul.f32 %v48, %v48
  %v51 = vsel %vm31, %v49, 0.0
  %52 = vadd.xlane.f32.xlu0 %v51
  %v53 = vpop.xlane.xlu0 %52
  %v54 = vsel %vm31, %v50, 0.0
  %55 = vadd.xlane.f32.xlu0 %v54
  %v56 = vpop.xlane.xlu0 %55
  %v57 = vmul.f32 %v53, 0.032258064
  %v58 = vmul.f32 %v56, 0.032258064
  %v59 = vrsqrt.pop %v57
  %v60 = vmul.f32 %v59, %v57
  %v61 = vmul.f32 %v60, %v59
  %v62 = vmul.f32 0.5, %v61
  %v63 = vsub.f32 1.5, %v62
  %v64 = vmul.f32 %v59, %v63
  %v65 = vmul.f32 %v57, %v64
  %vm66 = vcmp.eq.f32.partialorder %v57, inf
  %v67 = vsel %vm66, %v57, %v65
  %vm68 = vcmp.eq.f32.partialorder %v57, 0.0
  %v69 = vand.u32 %v57, 2147483648
  %v70 = vsel %vm68, %v69, %v67
  %v71 = vrsqrt.pop %v58
  %v72 = vmul.f32 %v71, %v58
  %v73 = vmul.f32 %v72, %v71
  %v74 = vmul.f32 0.5, %v73
  %v75 = vsub.f32 1.5, %v74
  %v76 = vmul.f32 %v71, %v75
  %v77 = vmul.f32 %v58, %v76
  %vm78 = vcmp.eq.f32.partialorder %v58, inf
  %v79 = vsel %vm78, %v58, %v77
  %vm80 = vcmp.eq.f32.partialorder %v58, 0.0
  %v81 = vand.u32 %v58, 2147483648
  %v82 = vsel %vm80, %v81, %v79
  %v83 = vadd.f32 %v70, 1e-06
  %v84 = vadd.f32 %v82, 1e-06
  %v85 = vrcp.pop %v83
  %v86 = vmul.f32 %v83, %v85
  %v87 = vsub.f32 1.0, %v86
  %v88 = vmul.f32 %v85, %v87
  %v89 = vadd.f32 %v85, %v88
  %vm90 = vweird.f32 %v83
  %vm91 = vweird.f32 %v85
  %vm92 = vmor %vm90, %vm91
  %v93 = vsel %vm92, %v85, %v89
  %v94 = vand.u32 2147483647, %v83
  %vm95 = vcmp.eq.f32.partialorder %v94, 8.507059e+37
  %v96 = vand.u32 %v83, 2147483648
  %v97 = vor.u32 1.1754944e-38, %v96
  %v98 = vsel %vm95, %v97, %v93
  %v99 = vrcp.pop %v84
  %v100 = vmul.f32 %v84, %v99
  %v101 = vsub.f32 1.0, %v100
  %v102 = vmul.f32 %v99, %v101
  %v103 = vadd.f32 %v99, %v102
  %vm104 = vweird.f32 %v84
  %vm105 = vweird.f32 %v99
  %vm106 = vmor %vm104, %vm105
  %v107 = vsel %vm106, %v99, %v103
  %v108 = vand.u32 2147483647, %v84
  %vm109 = vcmp.eq.f32.partialorder %v108, 8.507059e+37
  %v110 = vand.u32 %v84, 2147483648
  %v111 = vor.u32 1.1754944e-38, %v110
  %v112 = vsel %vm109, %v111, %v107
  %v114 = vperm.slane %v29, 0
  %v116 = vmul.f32 %v114, %v47
  %v117 = vmul.f32 %v114, %v48
  %v118 = vmul.f32 %v116, %v98
  %v119 = vmul.f32 %v117, %v112
  %v121 = vperm.slane %v30, 0
  %v123 = vadd.f32 %v118, %v121
  %v124 = vadd.f32 %v119, %v121
  %v125 = vpack.c.bf16 %v124, %v123
  %v126 = vld [vmem:[%s3] sm:$0xf]
  %v127 = vld [vmem:[%s3 + $0x4] sm:$0xf]
  %v128 = vld [vmem:[%s3 + $0x8] sm:$0xf]
  %v129 = vld [vmem:[%s3 + $0xc] sm:$0xf]
  %v130 = vld [vmem:[%s4] sm:$0x1]
  %v132 = vperm.slane %v130, 0
  %v138 = vunpack.c.l.b16 %v126
  %v139 = vunpack.c.l.b16 %v127
  %v140 = vunpack.c.l.b16 %v128
  %v141 = vunpack.c.l.b16 %v129
  %v142 = vpack.c.b16 %v139, %v138
  %v143 = vpack.c.b16 %v141, %v140
  %v147 = vsel %vm31, %v125, 0
  %149 = vmatpush.bf16.msra.mxu0 0
  %150 = vmatpush.bf16.msra.mxu0 0
  %151 = vmatpush.bf16.msra.mxu0 0
  %152 = vmatpush.bf16.msra.mxu0 0
  %153 = vmatpush.bf16.msra.mxu0 0
  %154 = vmatpush.bf16.msra.mxu0 0
  %155 = vmatpush.bf16.msra.mxu0 %v143
  %156 = vmatpush.bf16.msra.mxu0 %v142
  %157 = vmatmul.bf16.gmra.mxu0 %v147
  %v158 = vpop.f32.mrf.mxu0
  %v159 = vadd.f32 %v132, %v158
  %v160 = vpop.f32.mrf.mxu0
  %v161 = vadd.f32 %v132, %v160
  %162 = vdwg.mxu0
  %v163 = vmax.f32 %v159, 0.0
  %v164 = vmax.f32 %v161, 0.0
  %v165 = vpack.c.bf16 %v164, %v163
  %v166 = vld [vmem:[%s5] sm:$0xf]
  %v167 = vld [vmem:[%s5 + $0x4] sm:$0xf]
  %v168 = vld [vmem:[%s5 + $0x8] sm:$0xf]
  %v169 = vld [vmem:[%s5 + $0xc] sm:$0xf]
  %v170 = vld [vmem:[%s5 + $0x10] sm:$0xf]
  %v171 = vld [vmem:[%s5 + $0x14] sm:$0xf]
  %v172 = vld [vmem:[%s5 + $0x18] sm:$0xf]
  %v173 = vld [vmem:[%s5 + $0x1c] sm:$0xf]
  %v182 = vunpack.c.l.b16 %v166
  %v183 = vunpack.c.l.b16 %v167
  %v184 = vunpack.c.l.b16 %v168
  %v185 = vunpack.c.l.b16 %v169
  %v186 = vunpack.c.l.b16 %v170
  %v187 = vunpack.c.l.b16 %v171
  %v188 = vunpack.c.l.b16 %v172
  %v189 = vunpack.c.l.b16 %v173
  %v190 = vpack.c.b16 %v183, %v182
  %v191 = vpack.c.b16 %v185, %v184
  %v192 = vpack.c.b16 %v187, %v186
  %v193 = vpack.c.b16 %v189, %v188
  %vm198 = vcmask 523264
  %v200 = vsel %vm198, %v165, 0
  %202 = vmatpush.bf16.msra.mxu0 0
  %203 = vmatpush.bf16.msra.mxu0 0
  %204 = vmatpush.bf16.msra.mxu0 0
  %205 = vmatpush.bf16.msra.mxu0 0
  %206 = vmatpush.bf16.msra.mxu0 %v193
  %207 = vmatpush.bf16.msra.mxu0 %v192
  %208 = vmatpush.bf16.msra.mxu0 %v191
  %209 = vmatpush.bf16.msra.mxu0 %v190
  %210 = vmatmul.bf16.gmra.mxu0 %v200
  %v211 = vpop.f32.mrf.mxu0
  %v212 = vadd.f32 0.0, %v211
  %v213 = vpop.f32.mrf.mxu0
  %v214 = vadd.f32 0.0, %v213
  %215 = vdwg.mxu0
  %v216 = vadd.f32 %v27, %v212
  %v217 = vadd.f32 %v28, %v214
  %v218 = vld [vmem:[%s6] sm:$0x1]
  %v220 = vperm.slane %v218, 0
  %v222 = vadd.f32 %v216, %v220
  %v223 = vadd.f32 %v217, %v220
  %224 = vst.msk [vmem:[%s7] sm:$0xff] %vm31, %v222
  %225 = vst.msk [vmem:[%s7 + $0x8] sm:$0xff] %vm31, %v223
  // Predicated region
  $region30: #{decoder_forward.8} parent=0 // pred_check
    _
  $region31: #{decoder_forward.8} parent=0 // pred_check_branch
    %227 = sbr.rel (0) target = $region33
  $region32: #{decoder_forward.8} parent=0 // pred_region
    _
  $region33: #{decoder_forward.8} parent=0 // pred_fallthru
    _
  // Predicated region
  $region34: #{decoder_forward.8} parent=0 // pred_check
    _
  $region35: #{decoder_forward.8} parent=0 // pred_check_branch
    %229 = sbr.rel (0) target = $region37
  $region36: #{decoder_forward.8} parent=0 // pred_region
    _
  $region37: #{decoder_forward.8} parent=0 // pred_fallthru
    _

// kernel: decoder_forward.7
$region0: #{decoder_forward.7}
  #allocation0 [shape = 'u32[]', space=smem, size = 0x4, offset = 0x4, fixed_abs, tag = 'smem constant byte address 0x4 - core index']
  #allocation1 [shape = 'u32[72,128]{1,0:T(1,128)}', space=vmem, size = 0x9000, scoped, tag = 'internal scratch']
  #allocation2 [shape = 'bf16[8,32]{1,0:T(8,128)(2,1)}', space=vmem, size = 0x800, scoped, tag = 'scratch operand']
  #allocation3 [shape = 'bf16[8,32]{1,0:T(8,128)(2,1)}', space=vmem, size = 0x800, scoped, tag = 'scratch operand']
  #allocation4 [shape = 'f32[8,32]{1,0:T(8,128)}', space=vmem, size = 0x1000, scoped, tag = 'scratch operand']
  %s0 = inlined_call_operand.vmem [shape: f32[2,8,32], index: 0, kind: input, shape index: {}]
  %s1 = inlined_call_operand.vmem [shape: f32[2,8,32], index: 1, kind: input, shape index: {}]
  %s2 = inlined_call_operand.vmem [shape: f32[1,32], index: 2, kind: input, shape index: {}]
  %s3 = inlined_call_operand.vmem [shape: f32[1,32], index: 3, kind: input, shape index: {}]
  %s4 = inlined_call_operand.vmem [shape: bf16[32,32], index: 4, kind: input, shape index: {}]
  %s5 = inlined_call_operand.vmem [shape: f32[1,32], index: 5, kind: input, shape index: {}]
  %s6 = inlined_call_operand.vmem [shape: bf16[32,32], index: 6, kind: input, shape index: {}]
  %s7 = inlined_call_operand.vmem [shape: f32[1,32], index: 7, kind: input, shape index: {}]
  %s8 = inlined_call_operand.vmem [shape: bf16[32,32], index: 8, kind: input, shape index: {}]
  %s9 = inlined_call_operand.vmem [shape: f32[1,32], index: 9, kind: input, shape index: {}]
  %s10 = inlined_call_operand.vmem [shape: bf16[32,32], index: 10, kind: input, shape index: {}]
  %s11 = inlined_call_operand.vmem [shape: f32[1,32], index: 11, kind: input, shape index: {}]
  %s12 = inlined_call_operand.vmem [shape: f32[2,8,32], index: 12, kind: output, shape index: {}]
  %s13 = sld [smem:[#allocation0]]
  $region85: #{decoder_forward.7} parent=0
    _
  %s15 = ssub.s32 1, %s13
  %s16 = scalar_select 0, %s15, %s13
  loop: start=0, step=1, limit=4
  $region2: #{decoder_forward.7} parent=0 // loop_pre_header
    _
  $region3: #{decoder_forward.7} parent=0 // loop_header
    %s18 = sphi 0, %s22
    %p19 = scmp.ge.s32.totalorder %s18, 4
    %s25 = sphi 0, %s37
    %s26 = sphi 0, %s33
    %s27 = sphi 0, %s25
    %s28 = sphi 0, %s26
    %s29 = sphi 0, %s27
    %s30 = sphi 0, %s28
    %s40 = sphi 0, %s42
    %s43 = sphi 0, %s40
    %s44 = sphi 0, %s43
    %s60 = sphi 0, %s44
    %s68 = sphi 0, %s70
    %s71 = sphi 0, %s68
    %s72 = sphi 0, %s71
    %s88 = sphi 0, %s72
    %s92 = sphi 0, %s92
    %s94 = sphi 0, %s92
    %s95 = sphi 0, %s94
    %s109 = sphi 0, %s95
    %s113 = sphi 0, %s113
    %s115 = sphi 0, %s113
    %s116 = sphi 0, %s115
    %s130 = sphi 0, %s116
    %s134 = sphi 0, %s134
    %s136 = sphi 0, %s134
    %s137 = sphi 0, %s136
    %s151 = sphi 0, %s137
    %s155 = sphi 0, %s155
    %s157 = sphi 0, %s155
    %s158 = sphi 0, %s157
    %s172 = sphi 0, %s158
    %s176 = sphi 0, %s176
    %s178 = sphi 0, %s176
    %s179 = sphi 0, %s178
    %s193 = sphi 0, %s179
    %s197 = sphi 0, %s197
    %s199 = sphi 0, %s197
    %s200 = sphi 0, %s199
    %s214 = sphi 0, %s200
    %s218 = sphi 0, %s218
    %s220 = sphi 0, %s218
    %s221 = sphi 0, %s220
    %s235 = sphi 0, %s221
    %s239 = sphi 0, %s239
    %s241 = sphi 0, %s239
    %s242 = sphi 0, %s241
    %s256 = sphi 0, %s242
    %s260 = sphi 0, %s260
    %s262 = sphi 0, %s260
    %s263 = sphi 0, %s262
    %s277 = sphi 0, %s263
    %s281 = sphi 0, %s281
    %s283 = sphi 0, %s281
    %s284 = sphi 0, %s283
    %s298 = sphi 0, %s284
    %s306 = sphi 0, %s308
    %s309 = sphi 0, %s306
    %s310 = sphi 0, %s309
    %s326 = sphi 0, %s310
  $region4: #{decoder_forward.7} parent=0 // loop_header_branch
    %21 = sbr.rel (%p19) target = $region8
  $region5: #{decoder_forward.7} parent=0 // loop_body
    %s23 = ssub.s32 %s18, 1
    %s24 = ssub.s32 %s18, 2
    %s31 = sadd.s32 1, %s26
    %p32 = scmp.ge.s32.totalorder %s31, 1
    %s33 = scalar_select %p32, 0, %s31
    %s34 = sadd.s32 1, %s25
    %s35 = scalar_select %p32, %s34, %s25
    %p36 = scmp.ge.s32.totalorder %s35, 2
    %s37 = scalar_select %p36, 0, %s35
    %s38 = ssub.s32 %s25, %s37
    %p39 = scmp.eq.s32.totalorder %s38, 0
    %s41 = sadd.s32 %s40, 1
    %s42 = scalar_select %p39, %s40, %s41
    %p45 = pneg %p39
    %p46 = scmp.eq.s32.totalorder %s18, 1
    %p47 = por %p45, %p46
    %p48 = scmp.ne.s32.totalorder %s40, %s43
    %p49 = scmp.eq.s32.totalorder %s18, 0
    %p50 = por %p48, %p49
    %p51 = scmp.ne.s32.totalorder %s40, %s43
    %p52 = scmp.eq.s32.totalorder %s23, 1
    %p53 = por %p51, %p52
    %p54 = scmp.ne.s32.totalorder %s43, %s44
    %p55 = scmp.eq.s32.totalorder %s23, 0
    %p56 = por %p54, %p55
    %p57 = scmp.ne.s32.totalorder %s43, %s44
    %p58 = scmp.eq.s32.totalorder %s24, 1
    %p59 = por %p57, %p58
    %p61 = scmp.ne.s32.totalorder %s44, %s60
    %p62 = scmp.eq.s32.totalorder %s24, 0
    %p63 = por %p61, %p62
    %s64 = ssub.s32 %s25, %s37
    %s65 = ssub.s32 %s26, %s33
    %s66 = sor.u32 %s64, %s65
    %p67 = scmp.eq.s32.totalorder %s66, 0
    %s69 = sadd.s32 %s68, 1
    %s70 = scalar_select %p67, %s68, %s69
    %p73 = pneg %p67
    %p74 = scmp.eq.s32.totalorder %s18, 1
    %p75 = por %p73, %p74
    %p76 = scmp.ne.s32.totalorder %s68, %s71
    %p77 = scmp.eq.s32.totalorder %s18, 0
    %p78 = por %p76, %p77
    %p79 = scmp.ne.s32.totalorder %s68, %s71
    %p80 = scmp.eq.s32.totalorder %s23, 1
    %p81 = por %p79, %p80
    %p82 = scmp.ne.s32.totalorder %s71, %s72
    %p83 = scmp.eq.s32.totalorder %s23, 0
    %p84 = por %p82, %p83
    %p85 = scmp.ne.s32.totalorder %s71, %s72
    %p86 = scmp.eq.s32.totalorder %s24, 1
    %p87 = por %p85, %p86
    %p89 = scmp.ne.s32.totalorder %s72, %s88
    %p90 = scmp.eq.s32.totalorder %s24, 0
    %p91 = por %p89, %p90
    %s93 = sadd.s32 %s92, 1
    %p96 = scmp.eq.s32.totalorder %s18, 1
    %p97 = scmp.ne.s32.totalorder %s92, %s94
    %p98 = scmp.eq.s32.totalorder %s18, 0
    %p99 = por %p97, %p98
    %p100 = scmp.ne.s32.totalorder %s92, %s94
    %p101 = scmp.eq.s32.totalorder %s23, 1
    %p102 = por %p100, %p101
    %p103 = scmp.ne.s32.totalorder %s94, %s95
    %p104 = scmp.eq.s32.totalorder %s23, 0
    %p105 = por %p103, %p104
    %p106 = scmp.ne.s32.totalorder %s94, %s95
    %p107 = scmp.eq.s32.totalorder %s24, 1
    %p108 = por %p106, %p107
    %p110 = scmp.ne.s32.totalorder %s95, %s109
    %p111 = scmp.eq.s32.totalorder %s24, 0
    %p112 = por %p110, %p111
    %s114 = sadd.s32 %s113, 1
    %p117 = scmp.eq.s32.totalorder %s18, 1
    %p118 = scmp.ne.s32.totalorder %s113, %s115
    %p119 = scmp.eq.s32.totalorder %s18, 0
    %p120 = por %p118, %p119
    %p121 = scmp.ne.s32.totalorder %s113, %s115
    %p122 = scmp.eq.s32.totalorder %s23, 1
    %p123 = por %p121, %p122
    %p124 = scmp.ne.s32.totalorder %s115, %s116
    %p125 = scmp.eq.s32.totalorder %s23, 0
    %p126 = por %p124, %p125
    %p127 = scmp.ne.s32.totalorder %s115, %s116
    %p128 = scmp.eq.s32.totalorder %s24, 1
    %p129 = por %p127, %p128
    %p131 = scmp.ne.s32.totalorder %s116, %s130
    %p132 = scmp.eq.s32.totalorder %s24, 0
    %p133 = por %p131, %p132
    %s135 = sadd.s32 %s134, 1
    %p138 = scmp.eq.s32.totalorder %s18, 1
    %p139 = scmp.ne.s32.totalorder %s134, %s136
    %p140 = scmp.eq.s32.totalorder %s18, 0
    %p141 = por %p139, %p140
    %p142 = scmp.ne.s32.totalorder %s134, %s136
    %p143 = scmp.eq.s32.totalorder %s23, 1
    %p144 = por %p142, %p143
    %p145 = scmp.ne.s32.totalorder %s136, %s137
    %p146 = scmp.eq.s32.totalorder %s23, 0
    %p147 = por %p145, %p146
    %p148 = scmp.ne.s32.totalorder %s136, %s137
    %p149 = scmp.eq.s32.totalorder %s24, 1
    %p150 = por %p148, %p149
    %p152 = scmp.ne.s32.totalorder %s137, %s151
    %p153 = scmp.eq.s32.totalorder %s24, 0
    %p154 = por %p152, %p153
    %s156 = sadd.s32 %s155, 1
    %p159 = scmp.eq.s32.totalorder %s18, 1
    %p160 = scmp.ne.s32.totalorder %s155, %s157
    %p161 = scmp.eq.s32.totalorder %s18, 0
    %p162 = por %p160, %p161
    %p163 = scmp.ne.s32.totalorder %s155, %s157
    %p164 = scmp.eq.s32.totalorder %s23, 1
    %p165 = por %p163, %p164
    %p166 = scmp.ne.s32.totalorder %s157, %s158
    %p167 = scmp.eq.s32.totalorder %s23, 0
    %p168 = por %p166, %p167
    %p169 = scmp.ne.s32.totalorder %s157, %s158
    %p170 = scmp.eq.s32.totalorder %s24, 1
    %p171 = por %p169, %p170
    %p173 = scmp.ne.s32.totalorder %s158, %s172
    %p174 = scmp.eq.s32.totalorder %s24, 0
    %p175 = por %p173, %p174
    %s177 = sadd.s32 %s176, 1
    %p180 = scmp.eq.s32.totalorder %s18, 1
    %p181 = scmp.ne.s32.totalorder %s176, %s178
    %p182 = scmp.eq.s32.totalorder %s18, 0
    %p183 = por %p181, %p182
    %p184 = scmp.ne.s32.totalorder %s176, %s178
    %p185 = scmp.eq.s32.totalorder %s23, 1
    %p186 = por %p184, %p185
    %p187 = scmp.ne.s32.totalorder %s178, %s179
    %p188 = scmp.eq.s32.totalorder %s23, 0
    %p189 = por %p187, %p188
    %p190 = scmp.ne.s32.totalorder %s178, %s179
    %p191 = scmp.eq.s32.totalorder %s24, 1
    %p192 = por %p190, %p191
    %p194 = scmp.ne.s32.totalorder %s179, %s193
    %p195 = scmp.eq.s32.totalorder %s24, 0
    %p196 = por %p194, %p195
    %s198 = sadd.s32 %s197, 1
    %p201 = scmp.eq.s32.totalorder %s18, 1
    %p202 = scmp.ne.s32.totalorder %s197, %s199
    %p203 = scmp.eq.s32.totalorder %s18, 0
    %p204 = por %p202, %p203
    %p205 = scmp.ne.s32.totalorder %s197, %s199
    %p206 = scmp.eq.s32.totalorder %s23, 1
    %p207 = por %p205, %p206
    %p208 = scmp.ne.s32.totalorder %s199, %s200
    %p209 = scmp.eq.s32.totalorder %s23, 0
    %p210 = por %p208, %p209
    %p211 = scmp.ne.s32.totalorder %s199, %s200
    %p212 = scmp.eq.s32.totalorder %s24, 1
    %p213 = por %p211, %p212
    %p215 = scmp.ne.s32.totalorder %s200, %s214
    %p216 = scmp.eq.s32.totalorder %s24, 0
    %p217 = por %p215, %p216
    %s219 = sadd.s32 %s218, 1
    %p222 = scmp.eq.s32.totalorder %s18, 1
    %p223 = scmp.ne.s32.totalorder %s218, %s220
    %p224 = scmp.eq.s32.totalorder %s18, 0
    %p225 = por %p223, %p224
    %p226 = scmp.ne.s32.totalorder %s218, %s220
    %p227 = scmp.eq.s32.totalorder %s23, 1
    %p228 = por %p226, %p227
    %p229 = scmp.ne.s32.totalorder %s220, %s221
    %p230 = scmp.eq.s32.totalorder %s23, 0
    %p231 = por %p229, %p230
    %p232 = scmp.ne.s32.totalorder %s220, %s221
    %p233 = scmp.eq.s32.totalorder %s24, 1
    %p234 = por %p232, %p233
    %p236 = scmp.ne.s32.totalorder %s221, %s235
    %p237 = scmp.eq.s32.totalorder %s24, 0
    %p238 = por %p236, %p237
    %s240 = sadd.s32 %s239, 1
    %p243 = scmp.eq.s32.totalorder %s18, 1
    %p244 = scmp.ne.s32.totalorder %s239, %s241
    %p245 = scmp.eq.s32.totalorder %s18, 0
    %p246 = por %p244, %p245
    %p247 = scmp.ne.s32.totalorder %s239, %s241
    %p248 = scmp.eq.s32.totalorder %s23, 1
    %p249 = por %p247, %p248
    %p250 = scmp.ne.s32.totalorder %s241, %s242
    %p251 = scmp.eq.s32.totalorder %s23, 0
    %p252 = por %p250, %p251
    %p253 = scmp.ne.s32.totalorder %s241, %s242
    %p254 = scmp.eq.s32.totalorder %s24, 1
    %p255 = por %p253, %p254
    %p257 = scmp.ne.s32.totalorder %s242, %s256
    %p258 = scmp.eq.s32.totalorder %s24, 0
    %p259 = por %p257, %p258
    %s261 = sadd.s32 %s260, 1
    %p264 = scmp.eq.s32.totalorder %s18, 1
    %p265 = scmp.ne.s32.totalorder %s260, %s262
    %p266 = scmp.eq.s32.totalorder %s18, 0
    %p267 = por %p265, %p266
    %p268 = scmp.ne.s32.totalorder %s260, %s262
    %p269 = scmp.eq.s32.totalorder %s23, 1
    %p270 = por %p268, %p269
    %p271 = scmp.ne.s32.totalorder %s262, %s263
    %p272 = scmp.eq.s32.totalorder %s23, 0
    %p273 = por %p271, %p272
    %p274 = scmp.ne.s32.totalorder %s262, %s263
    %p275 = scmp.eq.s32.totalorder %s24, 1
    %p276 = por %p274, %p275
    %p278 = scmp.ne.s32.totalorder %s263, %s277
    %p279 = scmp.eq.s32.totalorder %s24, 0
    %p280 = por %p278, %p279
    %s282 = sadd.s32 %s281, 1
    %p285 = scmp.eq.s32.totalorder %s18, 1
    %p286 = scmp.ne.s32.totalorder %s281, %s283
    %p287 = scmp.eq.s32.totalorder %s18, 0
    %p288 = por %p286, %p287
    %p289 = scmp.ne.s32.totalorder %s281, %s283
    %p290 = scmp.eq.s32.totalorder %s23, 1
    %p291 = por %p289, %p290
    %p292 = scmp.ne.s32.totalorder %s283, %s284
    %p293 = scmp.eq.s32.totalorder %s23, 0
    %p294 = por %p292, %p293
    %p295 = scmp.ne.s32.totalorder %s283, %s284
    %p296 = scmp.eq.s32.totalorder %s24, 1
    %p297 = por %p295, %p296
    %p299 = scmp.ne.s32.totalorder %s284, %s298
    %p300 = scmp.eq.s32.totalorder %s24, 0
    %p301 = por %p299, %p300
    %s302 = ssub.s32 %s25, %s37
    %s303 = ssub.s32 %s26, %s33
    %s304 = sor.u32 %s302, %s303
    %p305 = scmp.eq.s32.totalorder %s304, 0
    %s307 = sadd.s32 %s306, 1
    %s308 = scalar_select %p305, %s306, %s307
    %p311 = pneg %p305
    %p312 = scmp.eq.s32.totalorder %s18, 1
    %p313 = por %p311, %p312
    %p314 = scmp.ne.s32.totalorder %s306, %s309
    %p315 = scmp.eq.s32.totalorder %s18, 0
    %p316 = por %p314, %p315
    %p317 = scmp.ne.s32.totalorder %s306, %s309
    %p318 = scmp.eq.s32.totalorder %s23, 1
    %p319 = por %p317, %p318
    %p320 = scmp.ne.s32.totalorder %s309, %s310
    %p321 = scmp.eq.s32.totalorder %s23, 0
    %p322 = por %p320, %p321
    %p323 = scmp.ne.s32.totalorder %s309, %s310
    %p324 = scmp.eq.s32.totalorder %s24, 1
    %p325 = por %p323, %p324
    %p327 = scmp.ne.s32.totalorder %s310, %s326
    %p328 = scmp.eq.s32.totalorder %s24, 0
    %p329 = por %p327, %p328
    %p330 = scmp.le.s32.totalorder 1, %s18
    %p331 = scmp.lt.s32.totalorder %s18, 3
    %p332 = pnand %p330, %p331
    %p333 = pneg %p332
    // Predicated region
    $region9: #{decoder_forward.7} parent=5 // pred_check
      _
    $region10: #{decoder_forward.7} parent=5 // pred_check_branch
      %335 = sbr.rel (%p332) target = $region12
    $region11: #{decoder_forward.7} parent=5 // pred_region
      %s336 = ssub.s32 %s18, 1
      // Predicated region
      $region13: #{decoder_forward.7} parent=11 // pred_check
        %p337 = pneg %p105
      $region14: #{decoder_forward.7} parent=11 // pred_check_branch
        %339 = sbr.rel (%p337) target = $region16
      $region15: #{decoder_forward.7} parent=11 // pred_region
        _
      $region16: #{decoder_forward.7} parent=11 // pred_fallthru
        _
      // Predicated region
      $region17: #{decoder_forward.7} parent=11 // pred_check
        %p340 = pneg %p126
      $region18: #{decoder_forward.7} parent=11 // pred_check_branch
        %342 = sbr.rel (%p340) target = $region20
      $region19: #{decoder_forward.7} parent=11 // pred_region
        _
      $region20: #{decoder_forward.7} parent=11 // pred_fallthru
        _
      // Predicated region
      $region21: #{decoder_forward.7} parent=11 // pred_check
        %p343 = pneg %p147
      $region22: #{decoder_forward.7} parent=11 // pred_check_branch
        %345 = sbr.rel (%p343) target = $region24
      $region23: #{decoder_forward.7} parent=11 // pred_region
        _
      $region24: #{decoder_forward.7} parent=11 // pred_fallthru
        _
      // Predicated region
      $region25: #{decoder_forward.7} parent=11 // pred_check
        %p346 = pneg %p168
      $region26: #{decoder_forward.7} parent=11 // pred_check_branch
        %348 = sbr.rel (%p346) target = $region28
      $region27: #{decoder_forward.7} parent=11 // pred_region
        _
      $region28: #{decoder_forward.7} parent=11 // pred_fallthru
        _
      // Predicated region
      $region29: #{decoder_forward.7} parent=11 // pred_check
        %p349 = pneg %p189
      $region30: #{decoder_forward.7} parent=11 // pred_check_branch
        %351 = sbr.rel (%p349) target = $region32
      $region31: #{decoder_forward.7} parent=11 // pred_region
        _
      $region32: #{decoder_forward.7} parent=11 // pred_fallthru
        _
      // Predicated region
      $region33: #{decoder_forward.7} parent=11 // pred_check
        %p352 = pneg %p210
      $region34: #{decoder_forward.7} parent=11 // pred_check_branch
        %354 = sbr.rel (%p352) target = $region36
      $region35: #{decoder_forward.7} parent=11 // pred_region
        _
      $region36: #{decoder_forward.7} parent=11 // pred_fallthru
        _
      // Predicated region
      $region37: #{decoder_forward.7} parent=11 // pred_check
        %p355 = pneg %p231
      $region38: #{decoder_forward.7} parent=11 // pred_check_branch
        %357 = sbr.rel (%p355) target = $region40
      $region39: #{decoder_forward.7} parent=11 // pred_region
        _
      $region40: #{decoder_forward.7} parent=11 // pred_fallthru
        _
      // Predicated region
      $region41: #{decoder_forward.7} parent=11 // pred_check
        %p358 = pneg %p252
      $region42: #{decoder_forward.7} parent=11 // pred_check_branch
        %360 = sbr.rel (%p358) target = $region44
      $region43: #{decoder_forward.7} parent=11 // pred_region
        _
      $region44: #{decoder_forward.7} parent=11 // pred_fallthru
        _
      // Predicated region
      $region45: #{decoder_forward.7} parent=11 // pred_check
        %p361 = pneg %p273
      $region46: #{decoder_forward.7} parent=11 // pred_check_branch
        %363 = sbr.rel (%p361) target = $region48
      $region47: #{decoder_forward.7} parent=11 // pred_region
        _
      $region48: #{decoder_forward.7} parent=11 // pred_fallthru
        _
      // Predicated region
      $region49: #{decoder_forward.7} parent=11 // pred_check
        %p364 = pneg %p294
      $region50: #{decoder_forward.7} parent=11 // pred_check_branch
        %366 = sbr.rel (%p364) target = $region52
      $region51: #{decoder_forward.7} parent=11 // pred_region
        _
      $region52: #{decoder_forward.7} parent=11 // pred_fallthru
        _
    $region12: #{decoder_forward.7} parent=5 // pred_fallthru
      _
    %p367 = scmp.lt.s32.totalorder %s18, 2
    // Predicated region
    $region53: #{decoder_forward.7} parent=5 // pred_check
      %p368 = pneg %p367
    $region54: #{decoder_forward.7} parent=5 // pred_check_branch
      %370 = sbr.rel (%p368) target = $region56
    $region55: #{decoder_forward.7} parent=5 // pred_region
      // Predicated region
      $region57: #{decoder_forward.7} parent=55 // pred_check
        %p371 = pneg %p50
      $region58: #{decoder_forward.7} parent=55 // pred_check_branch
        %373 = sbr.rel (%p371) target = $region60
      $region59: #{decoder_forward.7} parent=55 // pred_region
        %p374 = scmp.lt.s32.totalorder %s25, 1
        %s375 = scalar_select %p374, %s25, 1
        %s376 = smul.addr %s375, 8
        %s377 = scalar_lea.vmem %s0, %s376
      $region60: #{decoder_forward.7} parent=55 // pred_fallthru
        _
      // Predicated region
      $region61: #{decoder_forward.7} parent=55 // pred_check
        %p378 = pneg %p78
      $region62: #{decoder_forward.7} parent=55 // pred_check_branch
        %380 = sbr.rel (%p378) target = $region64
      $region63: #{decoder_forward.7} parent=55 // pred_region
        %p381 = scmp.lt.s32.totalorder %s25, 1
        %s382 = scalar_select %p381, %s25, 1
        %p383 = scmp.lt.s32.totalorder %s26, 0
        %s384 = scalar_select %p383, %s26, 0
        %s385 = sadd.s32 %s384, %s382
        %s386 = smul.addr %s385, 8
        %s387 = scalar_lea.vmem %s1, %s386
      $region64: #{decoder_forward.7} parent=55 // pred_fallthru
        _
    $region56: #{decoder_forward.7} parent=5 // pred_fallthru
      _
    %p388 = scmp.le.s32.totalorder 1, %s18
    %p389 = scmp.lt.s32.totalorder %s18, 3
    %p390 = pnand %p388, %p389
    %p391 = pneg %p390
    // Predicated region
    $region65: #{decoder_forward.7} parent=5 // pred_check
      _
    $region66: #{decoder_forward.7} parent=5 // pred_check_branch
      %393 = sbr.rel (%p390) target = $region68
    $region67: #{decoder_forward.7} parent=5 // pred_region
      %s394 = ssub.s32 %s18, 1
      %p395 = scmp.lt.s32.totalorder %s27, 1
      %s396 = scalar_select %p395, %s27, 1
      %s397 = smul.addr %s396, 8
      %s398 = scalar_lea.vmem %s0, %s397
      %p399 = pneg %p56
      %p400 = pneg %p53
      %p401 = scmp.lt.s32.totalorder %s27, 1
      %s402 = scalar_select %p401, %s27, 1
      %p403 = scmp.lt.s32.totalorder %s28, 0
      %s404 = scalar_select %p403, %s28, 0
      %s405 = sadd.s32 %s404, %s402
      %s406 = smul.addr %s405, 8
      %s407 = scalar_lea.vmem %s1, %s406
      %p408 = pneg %p84
      %p409 = pneg %p81
      %p410 = pneg %p105
      %p411 = pneg %p102
      %p412 = pneg %p126
      %p413 = pneg %p123
      %p414 = pneg %p147
      %p415 = pneg %p144
      %p416 = pneg %p168
      %p417 = pneg %p165
      %p418 = pneg %p189
      %p419 = pneg %p186
      %p420 = pneg %p210
      %p421 = pneg %p207
      %p422 = pneg %p231
      %p423 = pneg %p228
      %p424 = pneg %p252
      %p425 = pneg %p249
      %p426 = pneg %p273
      %p427 = pneg %p270
      %p428 = pneg %p294
      %p429 = pneg %p291
      %p430 = pneg %p322
      %p431 = pneg %p319
      %p432 = scmp.lt.s32.totalorder %s27, 1
      %s433 = scalar_select %p432, %s27, 1
      %p434 = scmp.lt.s32.totalorder %s28, 0
      %s435 = scalar_select %p434, %s28, 0
      %s436 = sadd.s32 %s435, %s433
      %s437 = smul.addr %s436, 8
      %s438 = scalar_lea.vmem %s12, %s437
      %p439 = scmp.lt.s32.totalorder %s27, 1
      %s440 = scalar_select %p439, %s27, 1
      %s441 = smul.addr %s440, 8
      %s442 = scalar_lea.vmem %s0, %s441
      %p443 = scmp.lt.s32.totalorder %s27, 1
      %s444 = scalar_select %p443, %s27, 1
      %p445 = scmp.lt.s32.totalorder %s28, 0
      %s446 = scalar_select %p445, %s28, 0
      %s447 = sadd.s32 %s446, %s444
      %s448 = smul.addr %s447, 8
      %s449 = scalar_lea.vmem %s1, %s448
      %p450 = scmp.lt.s32.totalorder %s27, 1
      %s451 = scalar_select %p450, %s27, 1
      %p452 = scmp.lt.s32.totalorder %s28, 0
      %s453 = scalar_select %p452, %s28, 0
      %s454 = sadd.s32 %s453, %s451
      %s455 = smul.addr %s454, 8
      %s456 = scalar_lea.vmem %s12, %s455
      %v458 = vld [vmem:[%s2] sm:$0x1]
      %v459 = vld [vmem:[%s3] sm:$0x1]
      %p460 = scmp.eq.s32.totalorder %s28, 0
      // Predicated region
      $region69: #{decoder_forward.7} parent=67 // pred_check
        %p461 = pneg %p460
      $region70: #{decoder_forward.7} parent=67 // pred_check_branch
        %463 = sbr.rel (%p461) target = $region72
      $region71: #{decoder_forward.7} parent=67 // pred_region
        %v464 = vld [vmem:[%s442] sm:$0xff]
        %vm465 = vcmask 261120
        %v466 = vsel %vm465, %v464, 0.0
        %467 = vadd.xlane.f32.xlu0 %v466
        %v468 = vpop.xlane.xlu0 %467
        %v469 = vrcp.pop 32.0
        %v470 = vmul.f32 32.0, %v469
        %v471 = vsub.f32 1.0, %v470
        %v472 = vmul.f32 %v469, %v471
        %v473 = vadd.f32 %v469, %v472
        %vm474 = vweird.f32 %v469
        %v475 = vsel %vm474, %v469, %v473
        %v476 = vmul.f32 %v468, %v475
        %v477 = vsub.f32 %v464, %v476
        %v478 = vmul.f32 %v477, %v477
        %v479 = vsel %vm465, %v478, 0.0
        %480 = vadd.xlane.f32.xlu0 %v479
        %v481 = vpop.xlane.xlu0 %480
        %v482 = vmul.f32 %v481, 0.032258064
        %v483 = vrsqrt.pop %v482
        %v484 = vmul.f32 %v483, %v482
        %v485 = vmul.f32 %v484, %v483
        %v486 = vmul.f32 0.5, %v485
        %v487 = vsub.f32 1.5, %v486
        %v488 = vmul.f32 %v483, %v487
        %v489 = vmul.f32 %v482, %v488
        %vm490 = vcmp.eq.f32.partialorder %v482, inf
        %v491 = vsel %vm490, %v482, %v489
        %vm492 = vcmp.eq.f32.partialorder %v482, 0.0
        %v493 = vand.u32 %v482, 2147483648
        %v494 = vsel %vm492, %v493, %v491
        %v495 = vadd.f32 %v494, 1e-06
        %v496 = vrcp.pop %v495
        %v497 = vmul.f32 %v495, %v496
        %v498 = vsub.f32 1.0, %v497
        %v499 = vmul.f32 %v496, %v498
        %v500 = vadd.f32 %v496, %v499
        %vm501 = vweird.f32 %v495
        %vm502 = vweird.f32 %v496
        %vm503 = vmor %vm501, %vm502
        %v504 = vsel %vm503, %v496, %v500
        %v505 = vand.u32 2147483647, %v495
        %vm506 = vcmp.eq.f32.partialorder %v505, 8.507059e+37
        %v507 = vand.u32 %v495, 2147483648
        %v508 = vor.u32 1.1754944e-38, %v507
        %v509 = vsel %vm506, %v508, %v504
        %v511 = vperm.slane %v458, 0
        %v513 = vmul.f32 %v511, %v477
        %v514 = vmul.f32 %v513, %v509
        %v516 = vperm.slane %v459, 0
        %v518 = vadd.f32 %v514, %v516
        %v519 = vpack.c.bf16 %v518, %v518
        %v520 = vld [vmem:[%s6] sm:$0xf]
        %v521 = vld [vmem:[%s6 + $0x4] sm:$0xf]
        %v522 = vld [vmem:[%s6 + $0x8] sm:$0xf]
        %v523 = vld [vmem:[%s6 + $0xc] sm:$0xf]
        %v524 = vld [vmem:[%s7] sm:$0x1]
        %v526 = vperm.slane %v524, 0
        %v532 = vunpack.c.l.b16 %v520
        %v533 = vunpack.c.l.b16 %v521
        %v534 = vunpack.c.l.b16 %v522
        %v535 = vunpack.c.l.b16 %v523
        %v536 = vpack.c.b16 %v533, %v532
        %v537 = vpack.c.b16 %v535, %v534
        %v541 = vsel %vm465, %v519, 0
        %543 = vmatpush.bf16.msra.mxu0 0
        %544 = vmatpush.bf16.msra.mxu0 0
        %545 = vmatpush.bf16.msra.mxu0 0
        %546 = vmatpush.bf16.msra.mxu0 0
        %547 = vmatpush.bf16.msra.mxu0 0
        %548 = vmatpush.bf16.msra.mxu0 0
        %549 = vmatpush.bf16.msra.mxu0 %v537
        %550 = vmatpush.bf16.msra.mxu0 %v536
        %551 = vmatmul.bf16.gmra.mxu0 %v541
        %v552 = vpop.f32.mrf.mxu0
        %v553 = vadd.f32 %v526, %v552
        %v554 = vpop.f32.mrf.mxu0
        %555 = vdwg.mxu0
        %v556 = vpack.c.bf16 %v553, %v553
        %vm557 = vcmask 257024
        %558 = vst.msk [vmem:[#allocation2] sm:$0xf] %vm557, %v556
        %v559 = vld [vmem:[%s8] sm:$0xf]
        %v560 = vld [vmem:[%s8 + $0x4] sm:$0xf]
        %v561 = vld [vmem:[%s8 + $0x8] sm:$0xf]
        %v562 = vld [vmem:[%s8 + $0xc] sm:$0xf]
        %v563 = vld [vmem:[%s9] sm:$0x1]
        %v565 = vperm.slane %v563, 0
        %v571 = vunpack.c.l.b16 %v559
        %v572 = vunpack.c.l.b16 %v560
        %v573 = vunpack.c.l.b16 %v561
        %v574 = vunpack.c.l.b16 %v562
        %v575 = vpack.c.b16 %v572, %v571
        %v576 = vpack.c.b16 %v574, %v573
        %579 = vmatpush.bf16.msra.mxu0 0
        %580 = vmatpush.bf16.msra.mxu0 0
        %581 = vmatpush.bf16.msra.mxu0 0
        %582 = vmatpush.bf16.msra.mxu0 0
        %583 = vmatpush.bf16.msra.mxu0 0
        %584 = vmatpush.bf16.msra.mxu0 0
        %585 = vmatpush.bf16.msra.mxu0 %v576
        %586 = vmatpush.bf16.msra.mxu0 %v575
        %587 = vmatmul.bf16.gmra.mxu0 %v541
        %v588 = vpop.f32.mrf.mxu0
        %v589 = vadd.f32 %v565, %v588
        %v590 = vpop.f32.mrf.mxu0
        %591 = vdwg.mxu0
        %v592 = vpack.c.bf16 %v589, %v589
        %593 = vst.msk [vmem:[#allocation3] sm:$0xf] %vm557, %v592
      $region72: #{decoder_forward.7} parent=67 // pred_fallthru
        _
      %s594 = smul.u32 %s28, 8
      %s595 = scalar_lea.vmem %s442, %s594
      %v596 = vld [vmem:[%s595] sm:$0xff]
      %v597 = vld [vmem:[%s449] sm:$0xff]
      %v598 = vpack.c.bf16 %v597, %v597
      %v599 = vld [vmem:[%s4] sm:$0xf]
      %v600 = vld [vmem:[%s4 + $0x4] sm:$0xf]
      %v601 = vld [vmem:[%s4 + $0x8] sm:$0xf]
      %v602 = vld [vmem:[%s4 + $0xc] sm:$0xf]
      %v603 = vld [vmem:[%s5] sm:$0x1]
      %v605 = vperm.slane %v603, 0
      %v611 = vunpack.c.l.b16 %v599
      %v612 = vunpack.c.l.b16 %v600
      %v613 = vunpack.c.l.b16 %v601
      %v614 = vunpack.c.l.b16 %v602
      %v615 = vpack.c.b16 %v612, %v611
      %v616 = vpack.c.b16 %v614, %v613
      %vm619 = vcmask 261120
      %v621 = vsel %vm619, %v598, 0
      %623 = vmatpush.bf16.msra.mxu0 0
      %624 = vmatpush.bf16.msra.mxu0 0
      %625 = vmatpush.bf16.msra.mxu0 0
      %626 = vmatpush.bf16.msra.mxu0 0
      %627 = vmatpush.bf16.msra.mxu0 0
      %628 = vmatpush.bf16.msra.mxu0 0
      %629 = vmatpush.bf16.msra.mxu0 %v616
      %630 = vmatpush.bf16.msra.mxu0 %v615
      %631 = vmatmul.bf16.gmra.mxu0 %v621
      %v632 = vpop.f32.mrf.mxu0
      %v633 = vadd.f32 %v605, %v632
      %v634 = vpop.f32.mrf.mxu0
      %635 = vdwg.mxu0
      %v636 = vmul.f32 %v633, 0.35355338
      %v637 = vpack.c.bf16 %v636, %v636
      %v638 = vld [vmem:[#allocation2] sm:$0xf]
      %v639 = vld [vmem:[#allocation3] sm:$0xf]
      %vm640 = vcmask 64512
      %v642 = vsel %vm640, %v637, 0
      %v645 = vsel %vm640, %v638, 0
      %647 = vmatpush.bf16.xpose.msra.mxu0 0
      %648 = vmatpush.bf16.xpose.msra.mxu0 0
      %649 = vmatpush.bf16.xpose.msra.mxu0 0
      %650 = vmatpush.bf16.xpose.msra.mxu0 0
      %651 = vmatpush.bf16.xpose.msra.mxu0 0
      %652 = vmatpush.bf16.xpose.msra.mxu0 0
      %653 = vmatpush.bf16.xpose.msra.mxu0 0
      %654 = vmatpush.bf16.xpose.msra.mxu0 %v645
      %655 = vmatmul.bf16.gmra.mxu0 %v642
      %v656 = vpop.f32.mrf.mxu0
      %v657 = vadd.f32 0.0, %v656
      %v658 = vpop.f32.mrf.mxu0
      %659 = vdwg.mxu0
      %v660 = vsel %vm640, %v657, -inf
      %661 = vmax.xlane.f32.xlu0 %v660
      %v662 = vpop.xlane.xlu0 %661
      %v663 = vsub.f32 %v657, %v662
      %v664 = vmul.f32 %v663, 1.442695
      %v665 = vpow.pop %v664
      %v666 = vsel %vm640, %v665, 0.0
      %667 = vadd.xlane.f32.xlu0 %v666
      %v668 = vpop.xlane.xlu0 %667
      %v669 = vrcp.pop %v668
      %v670 = vmul.f32 %v665, %v669
      %v671 = vpack.c.bf16 %v670, %v670
      %v673 = vsel %vm640, %v671, 0
      %vm675 = vcmask 1043456
      %v677 = vsel %vm675, %v639, 0
      %679 = vmatpush.bf16.msra.mxu0 0
      %680 = vmatpush.bf16.msra.mxu0 0
      %681 = vmatpush.bf16.msra.mxu0 0
      %682 = vmatpush.bf16.msra.mxu0 0
      %683 = vmatpush.bf16.msra.mxu0 0
      %684 = vmatpush.bf16.msra.mxu0 0
      %685 = vmatpush.bf16.msra.mxu0 0
      %686 = vmatpush.bf16.msra.mxu0 %v677
      %687 = vmatmul.bf16.gmra.mxu0 %v673
      %v688 = vpop.f32.mrf.mxu0
      %v689 = vadd.f32 0.0, %v688
      %v690 = vpop.f32.mrf.mxu0
      %691 = vdwg.mxu0
      %692 = vst.msk [vmem:[#allocation4] sm:$0xff] %vm640, %v689
      %v694 = vunpack.c.l.b16 %v637
      %v695 = vpack.c.b16 %v694, %v694
      %696 = vrot.lane.b32.xlu0 %v695, 120
      %v697 = vpop.permute.xlu0 %696
      %v699 = vunpack.c.l.b16 %v638
      %v700 = vpack.c.b16 %v699, %v699
      %701 = vrot.lane.b32.xlu0 %v700, 120
      %v702 = vpop.permute.xlu0 %701
      %v704 = vsel %vm640, %v697, 0
      %v707 = vsel %vm640, %v702, 0
      %709 = vmatpush.bf16.xpose.msra.mxu0 0
      %710 = vmatpush.bf16.xpose.msra.mxu0 0
      %711 = vmatpush.bf16.xpose.msra.mxu0 0
      %712 = vmatpush.bf16.xpose.msra.mxu0 0
      %713 = vmatpush.bf16.xpose.msra.mxu0 0
      %714 = vmatpush.bf16.xpose.msra.mxu0 0
      %715 = vmatpush.bf16.xpose.msra.mxu0 0
      %716 = vmatpush.bf16.xpose.msra.mxu0 %v707
      %717 = vmatmul.bf16.gmra.mxu0 %v704
      %v718 = vpop.f32.mrf.mxu0
      %v719 = vadd.f32 0.0, %v718
      %v720 = vpop.f32.mrf.mxu0
      %721 = vdwg.mxu0
      %v722 = vsel %vm640, %v719, -inf
      %723 = vmax.xlane.f32.xlu0 %v722
      %v724 = vpop.xlane.xlu0 %723
      %v725 = vsub.f32 %v719, %v724
      %v726 = vmul.f32 %v725, 1.442695
      %v727 = vpow.pop %v726
      %v728 = vsel %vm640, %v727, 0.0
      %729 = vadd.xlane.f32.xlu0 %v728
      %v730 = vpop.xlane.xlu0 %729
      %v731 = vrcp.pop %v730
      %v732 = vmul.f32 %v727, %v731
      %v733 = vpack.c.bf16 %v732, %v732
      %v735 = vunpack.c.l.b16 %v639
      %v736 = vpack.c.b16 %v735, %v735
      %737 = vrot.lane.b32.xlu0 %v736, 120
      %v738 = vpop.permute.xlu0 %737
      %v740 = vsel %vm640, %v733, 0
      %v743 = vsel %vm675, %v738, 0
      %745 = vmatpush.bf16.msra.mxu0 0
      %746 = vmatpush.bf16.msra.mxu0 0
      %747 = vmatpush.bf16.msra.mxu0 0
      %748 = vmatpush.bf16.msra.mxu0 0
      %749 = vmatpush.bf16.msra.mxu0 0
      %750 = vmatpush.bf16.msra.mxu0 0
      %751 = vmatpush.bf16.msra.mxu0 0
      %752 = vmatpush.bf16.msra.mxu0 %v743
      %753 = vmatmul.bf16.gmra.mxu0 %v740
      %v754 = vpop.f32.mrf.mxu0
      %v755 = vadd.f32 0.0, %v754
      %v756 = vpop.f32.mrf.mxu0
      %757 = vdwg.mxu0
      %759 = vrot.lane.b32.xlu0 %v755, 8
      %v760 = vpop.permute.xlu0 %759
      %vm762 = vcmask 130112
      %763 = vst.msk [vmem:[#allocation4] sm:$0xff] %vm762, %v760
      %764 = vrot.lane.b32.xlu0 %v695, 112
      %v765 = vpop.permute.xlu0 %764
      %766 = vrot.lane.b32.xlu0 %v700, 112
      %v767 = vpop.permute.xlu0 %766
      %v769 = vsel %vm640, %v765, 0
      %v772 = vsel %vm640, %v767, 0
      %774 = vmatpush.bf16.xpose.msra.mxu0 0
      %775 = vmatpush.bf16.xpose.msra.mxu0 0
      %776 = vmatpush.bf16.xpose.msra.mxu0 0
      %777 = vmatpush.bf16.xpose.msra.mxu0 0
      %778 = vmatpush.bf16.xpose.msra.mxu0 0
      %779 = vmatpush.bf16.xpose.msra.mxu0 0
      %780 = vmatpush.bf16.xpose.msra.mxu0 0
      %781 = vmatpush.bf16.xpose.msra.mxu0 %v772
      %782 = vmatmul.bf16.gmra.mxu0 %v769
      %v783 = vpop.f32.mrf.mxu0
      %v784 = vadd.f32 0.0, %v783
      %v785 = vpop.f32.mrf.mxu0
      %786 = vdwg.mxu0
      %v787 = vsel %vm640, %v784, -inf
      %788 = vmax.xlane.f32.xlu0 %v787
      %v789 = vpop.xlane.xlu0 %788
      %v790 = vsub.f32 %v784, %v789
      %v791 = vmul.f32 %v790, 1.442695
      %v792 = vpow.pop %v791
      %v793 = vsel %vm640, %v792, 0.0
      %794 = vadd.xlane.f32.xlu0 %v793
      %v795 = vpop.xlane.xlu0 %794
      %v796 = vrcp.pop %v795
      %v797 = vmul.f32 %v792, %v796
      %v798 = vpack.c.bf16 %v797, %v797
      %799 = vrot.lane.b32.xlu0 %v736, 112
      %v800 = vpop.permute.xlu0 %799
      %v802 = vsel %vm640, %v798, 0
      %v805 = vsel %vm675, %v800, 0
      %807 = vmatpush.bf16.msra.mxu0 0
      %808 = vmatpush.bf16.msra.mxu0 0
      %809 = vmatpush.bf16.msra.mxu0 0
      %810 = vmatpush.bf16.msra.mxu0 0
      %811 = vmatpush.bf16.msra.mxu0 0
      %812 = vmatpush.bf16.msra.mxu0 0
      %813 = vmatpush.bf16.msra.mxu0 0
      %814 = vmatpush.bf16.msra.mxu0 %v805
      %815 = vmatmul.bf16.gmra.mxu0 %v802
      %v816 = vpop.f32.mrf.mxu0
      %v817 = vadd.f32 0.0, %v816
      %v818 = vpop.f32.mrf.mxu0
      %819 = vdwg.mxu0
      %821 = vrot.lane.b32.xlu0 %v817, 16
      %v822 = vpop.permute.xlu0 %821
      %vm824 = vcmask 195712
      %825 = vst.msk [vmem:[#allocation4] sm:$0xff] %vm824, %v822
      %826 = vrot.lane.b32.xlu0 %v695, 104
      %v827 = vpop.permute.xlu0 %826
      %828 = vrot.lane.b32.xlu0 %v700, 104
      %v829 = vpop.permute.xlu0 %828
      %v831 = vsel %vm640, %v827, 0
      %v834 = vsel %vm640, %v829, 0
      %836 = vmatpush.bf16.xpose.msra.mxu0 0
      %837 = vmatpush.bf16.xpose.msra.mxu0 0
      %838 = vmatpush.bf16.xpose.msra.mxu0 0
      %839 = vmatpush.bf16.xpose.msra.mxu0 0
      %840 = vmatpush.bf16.xpose.msra.mxu0 0
      %841 = vmatpush.bf16.xpose.msra.mxu0 0
      %842 = vmatpush.bf16.xpose.msra.mxu0 0
      %843 = vmatpush.bf16.xpose.msra.mxu0 %v834
      %844 = vmatmul.bf16.gmra.mxu0 %v831
      %v845 = vpop.f32.mrf.mxu0
      %v846 = vadd.f32 0.0, %v845
      %v847 = vpop.f32.mrf.mxu0
      %848 = vdwg.mxu0
      %v849 = vsel %vm640, %v846, -inf
      %850 = vmax.xlane.f32.xlu0 %v849
      %v851 = vpop.xlane.xlu0 %850
      %v852 = vsub.f32 %v846, %v851
      %v853 = vmul.f32 %v852, 1.442695
      %v854 = vpow.pop %v853
      %v855 = vsel %vm640, %v854, 0.0
      %856 = vadd.xlane.f32.xlu0 %v855
      %v857 = vpop.xlane.xlu0 %856
      %v858 = vrcp.pop %v857
      %v859 = vmul.f32 %v854, %v858
      %v860 = vpack.c.bf16 %v859, %v859
      %861 = vrot.lane.b32.xlu0 %v736, 104
      %v862 = vpop.permute.xlu0 %861
      %v864 = vsel %vm640, %v860, 0
      %v867 = vsel %vm675, %v862, 0
      %869 = vmatpush.bf16.msra.mxu0 0
      %870 = vmatpush.bf16.msra.mxu0 0
      %871 = vmatpush.bf16.msra.mxu0 0
      %872 = vmatpush.bf16.msra.mxu0 0
      %873 = vmatpush.bf16.msra.mxu0 0
      %874 = vmatpush.bf16.msra.mxu0 0
      %875 = vmatpush.bf16.msra.mxu0 0
      %876 = vmatpush.bf16.msra.mxu0 %v867
      %877 = vmatmul.bf16.gmra.mxu0 %v864
      %v878 = vpop.f32.mrf.mxu0
      %v879 = vadd.f32 0.0, %v878
      %v880 = vpop.f32.mrf.mxu0
      %881 = vdwg.mxu0
      %883 = vrot.lane.b32.xlu0 %v879, 24
      %v884 = vpop.permute.xlu0 %883
      %vm886 = vcmask 261312
      %887 = vst.msk [vmem:[#allocation4] sm:$0xff] %vm886, %v884
      %v888 = vld [vmem:[#allocation4] sm:$0xff]
      %v889 = vpack.c.bf16 %v888, %v888
      %v890 = vld [vmem:[%s10] sm:$0xf]
      %v891 = vld [vmem:[%s10 + $0x4] sm:$0xf]
      %v892 = vld [vmem:[%s10 + $0x8] sm:$0xf]
      %v893 = vld [vmem:[%s10 + $0xc] sm:$0xf]
      %v894 = vld [vmem:[%s11] sm:$0x1]
      %v896 = vperm.slane %v894, 0
      %v902 = vunpack.c.l.b16 %v890
      %v903 = vunpack.c.l.b16 %v891
      %v904 = vunpack.c.l.b16 %v892
      %v905 = vunpack.c.l.b16 %v893
      %v906 = vpack.c.b16 %v903, %v902
      %v907 = vpack.c.b16 %v905, %v904
      %v911 = vsel %vm619, %v889, 0
      %913 = vmatpush.bf16.msra.mxu0 0
      %914 = vmatpush.bf16.msra.mxu0 0
      %915 = vmatpush.bf16.msra.mxu0 0
      %916 = vmatpush.bf16.msra.mxu0 0
      %917 = vmatpush.bf16.msra.mxu0 0
      %918 = vmatpush.bf16.msra.mxu0 0
      %919 = vmatpush.bf16.msra.mxu0 %v907
      %920 = vmatpush.bf16.msra.mxu0 %v906
      %921 = vmatmul.bf16.gmra.mxu0 %v911
      %v922 = vpop.f32.mrf.mxu0
      %v923 = vadd.f32 %v896, %v922
      %v924 = vpop.f32.mrf.mxu0
      %925 = vdwg.mxu0
      %v926 = vadd.f32 %v596, %v923
      %927 = vst.msk [vmem:[%s456] sm:$0xff] %vm619, %v926
      %p928 = scmp.lt.s32.totalorder %s27, 1
      %s929 = scalar_select %p928, %s27, 1
      %p930 = scmp.lt.s32.totalorder %s28, 0
      %s931 = scalar_select %p930, %s28, 0
      %s932 = sadd.s32 %s931, %s929
      %s933 = smul.addr %s932, 8
      %s934 = scalar_lea.vmem %s12, %s933
      // Predicated region
      $region73: #{decoder_forward.7} parent=67 // pred_check
        %p935 = pneg %p319
      $region74: #{decoder_forward.7} parent=67 // pred_check_branch
        %937 = sbr.rel (%p935) target = $region76
      $region75: #{decoder_forward.7} parent=67 // pred_region
        _
      $region76: #{decoder_forward.7} parent=67 // pred_fallthru
        _
    $region68: #{decoder_forward.7} parent=5 // pred_fallthru
      _
    %p938 = scmp.le.s32.totalorder 2, %s18
    // Predicated region
    $region77: #{decoder_forward.7} parent=5 // pred_check
      %p939 = pneg %p938
    $region78: #{decoder_forward.7} parent=5 // pred_check_branch
      %941 = sbr.rel (%p939) target = $region80
    $region79: #{decoder_forward.7} parent=5 // pred_region
      %s942 = ssub.s32 %s18, 2
      // Predicated region
      $region81: #{decoder_forward.7} parent=79 // pred_check
        %p943 = pneg %p325
      $region82: #{decoder_forward.7} parent=79 // pred_check_branch
        %945 = sbr.rel (%p943) target = $region84
      $region83: #{decoder_forward.7} parent=79 // pred_region
        %p946 = scmp.lt.s32.totalorder %s29, 1
        %s947 = scalar_select %p946, %s29, 1
        %p948 = scmp.lt.s32.totalorder %s30, 0
        %s949 = scalar_select %p948, %s30, 0
        %s950 = sadd.s32 %s949, %s947
        %s951 = smul.addr %s950, 8
        %s952 = scalar_lea.vmem %s12, %s951
      $region84: #{decoder_forward.7} parent=79 // pred_fallthru
        _
    $region80: #{decoder_forward.7} parent=5 // pred_fallthru
      _
  $region6: #{decoder_forward.7} parent=0 // loop_footer
    %s22 = sadd.s32 1, %s18
  $region7: #{decoder_forward.7} parent=0 // loop_footer_branch
    %17 = sbr.rel target = $region3
  $region8: #{decoder_forward.7} parent=0 // loop_exit
    _

// kernel: decoder_forward.11
$region0: #{decoder_forward.11}
  #allocation0 [shape = 'u32[]', space=smem, size = 0x4, offset = 0x4, fixed_abs, tag = 'smem constant byte address 0x4 - core index']
  #allocation1 [shape = 'u32[72,128]{1,0:T(1,128)}', space=vmem, size = 0x9000, scoped, tag = 'internal scratch']
  %s0 = inlined_call_operand.vmem [shape: f32[16,32], index: 0, kind: input, shape index: {}]
  %s1 = inlined_call_operand.vmem [shape: f32[1,32], index: 1, kind: input, shape index: {}]
  %s2 = inlined_call_operand.vmem [shape: f32[1,32], index: 2, kind: input, shape index: {}]
  %s3 = inlined_call_operand.vmem [shape: bf16[32,64], index: 3, kind: input, shape index: {}]
  %s4 = inlined_call_operand.vmem [shape: f32[1,64], index: 4, kind: input, shape index: {}]
  %s5 = inlined_call_operand.vmem [shape: bf16[64,32], index: 5, kind: input, shape index: {}]
  %s6 = inlined_call_operand.vmem [shape: f32[1,32], index: 6, kind: input, shape index: {}]
  %s7 = inlined_call_operand.vmem [shape: f32[1,32], index: 7, kind: input, shape index: {}]
  %s8 = inlined_call_operand.vmem [shape: f32[1,32], index: 8, kind: input, shape index: {}]
  %s9 = inlined_call_operand.hbm [shape: f32[16,32], index: 9, kind: output, shape index: {}]
  %s10 = sld [smem:[#allocation0]]
  $region46: #{decoder_forward.11} parent=0
    _
  %s12 = ssub.s32 1, %s10
  %s13 = scalar_select 0, %s12, %s10
  $region1: #{decoder_forward.11} parent=0
    #allocation2 [shape = 'u8[8192]{0}', space=vmem, size = 0x2000, scoped, tag = 'output window, operand 0, single buffered']
    #allocation3 [shape = 's32[1]{0}', space=sflag, size = 0x4, scoped, tag = 'scoped memory for decoder_forward.11']
    %14 = vsyncpa [#allocation3], 0
    // Predicated region
    $region2: #{decoder_forward.11} parent=1 // pred_check
      _
    $region3: #{decoder_forward.11} parent=1 // pred_check_branch
      %16 = sbr.rel (0) target = $region5
    $region4: #{decoder_forward.11} parent=1 // pred_region
      _
    $region5: #{decoder_forward.11} parent=1 // pred_fallthru
      _
    // Predicated region
    $region6: #{decoder_forward.11} parent=1 // pred_check
      _
    $region7: #{decoder_forward.11} parent=1 // pred_check_branch
      %18 = sbr.rel (0) target = $region9
    $region8: #{decoder_forward.11} parent=1 // pred_region
      _
    $region9: #{decoder_forward.11} parent=1 // pred_fallthru
      _
    // Predicated region
    $region10: #{decoder_forward.11} parent=1 // pred_check
      _
    $region11: #{decoder_forward.11} parent=1 // pred_check_branch
      %20 = sbr.rel (0) target = $region13
    $region12: #{decoder_forward.11} parent=1 // pred_region
      _
    $region13: #{decoder_forward.11} parent=1 // pred_fallthru
      _
    // Predicated region
    $region14: #{decoder_forward.11} parent=1 // pred_check
      _
    $region15: #{decoder_forward.11} parent=1 // pred_check_branch
      %22 = sbr.rel (0) target = $region17
    $region16: #{decoder_forward.11} parent=1 // pred_region
      _
    $region17: #{decoder_forward.11} parent=1 // pred_fallthru
      _
    // Predicated region
    $region18: #{decoder_forward.11} parent=1 // pred_check
      _
    $region19: #{decoder_forward.11} parent=1 // pred_check_branch
      %24 = sbr.rel (0) target = $region21
    $region20: #{decoder_forward.11} parent=1 // pred_region
      _
    $region21: #{decoder_forward.11} parent=1 // pred_fallthru
      _
    // Predicated region
    $region22: #{decoder_forward.11} parent=1 // pred_check
      _
    $region23: #{decoder_forward.11} parent=1 // pred_check_branch
      %26 = sbr.rel (0) target = $region25
    $region24: #{decoder_forward.11} parent=1 // pred_region
      _
    $region25: #{decoder_forward.11} parent=1 // pred_fallthru
      _
    // Predicated region
    $region26: #{decoder_forward.11} parent=1 // pred_check
      _
    $region27: #{decoder_forward.11} parent=1 // pred_check_branch
      %28 = sbr.rel (0) target = $region29
    $region28: #{decoder_forward.11} parent=1 // pred_region
      _
    $region29: #{decoder_forward.11} parent=1 // pred_fallthru
      _
    // Predicated region
    $region30: #{decoder_forward.11} parent=1 // pred_check
      _
    $region31: #{decoder_forward.11} parent=1 // pred_check_branch
      %30 = sbr.rel (0) target = $region33
    $region32: #{decoder_forward.11} parent=1 // pred_region
      _
    $region33: #{decoder_forward.11} parent=1 // pred_fallthru
      _
    // Predicated region
    $region34: #{decoder_forward.11} parent=1 // pred_check
      _
    $region35: #{decoder_forward.11} parent=1 // pred_check_branch
      %32 = sbr.rel (0) target = $region37
    $region36: #{decoder_forward.11} parent=1 // pred_region
      _
    $region37: #{decoder_forward.11} parent=1 // pred_fallthru
      _
    %v34 = vld [vmem:[%s0] sm:$0xff]
    %v35 = vld [vmem:[%s0 + $0x8] sm:$0xff]
    %v36 = vld [vmem:[%s1] sm:$0x1]
    %v37 = vld [vmem:[%s2] sm:$0x1]
    %vm38 = vcmask 261120
    %v39 = vsel %vm38, %v34, 0.0
    %40 = vadd.xlane.f32.xlu0 %v39
    %v41 = vpop.xlane.xlu0 %40
    %v42 = vsel %vm38, %v35, 0.0
    %43 = vadd.xlane.f32.xlu0 %v42
    %v44 = vpop.xlane.xlu0 %43
    %v45 = vrcp.pop 32.0
    %v46 = vmul.f32 32.0, %v45
    %v47 = vsub.f32 1.0, %v46
    %v48 = vmul.f32 %v45, %v47
    %v49 = vadd.f32 %v45, %v48
    %vm50 = vweird.f32 %v45
    %v51 = vsel %vm50, %v45, %v49
    %v52 = vmul.f32 %v41, %v51
    %v53 = vmul.f32 %v44, %v51
    %v54 = vsub.f32 %v34, %v52
    %v55 = vsub.f32 %v35, %v53
    %v56 = vmul.f32 %v54, %v54
    %v57 = vmul.f32 %v55, %v55
    %v58 = vsel %vm38, %v56, 0.0
    %59 = vadd.xlane.f32.xlu0 %v58
    %v60 = vpop.xlane.xlu0 %59
    %v61 = vsel %vm38, %v57, 0.0
    %62 = vadd.xlane.f32.xlu0 %v61
    %v63 = vpop.xlane.xlu0 %62
    %v64 = vmul.f32 %v60, 0.032258064
    %v65 = vmul.f32 %v63, 0.032258064
    %v66 = vrsqrt.pop %v64
    %v67 = vmul.f32 %v66, %v64
    %v68 = vmul.f32 %v67, %v66
    %v69 = vmul.f32 0.5, %v68
    %v70 = vsub.f32 1.5, %v69
    %v71 = vmul.f32 %v66, %v70
    %v72 = vmul.f32 %v64, %v71
    %vm73 = vcmp.eq.f32.partialorder %v64, inf
    %v74 = vsel %vm73, %v64, %v72
    %vm75 = vcmp.eq.f32.partialorder %v64, 0.0
    %v76 = vand.u32 %v64, 2147483648
    %v77 = vsel %vm75, %v76, %v74
    %v78 = vrsqrt.pop %v65
    %v79 = vmul.f32 %v78, %v65
    %v80 = vmul.f32 %v79, %v78
    %v81 = vmul.f32 0.5, %v80
    %v82 = vsub.f32 1.5, %v81
    %v83 = vmul.f32 %v78, %v82
    %v84 = vmul.f32 %v65, %v83
    %vm85 = vcmp.eq.f32.partialorder %v65, inf
    %v86 = vsel %vm85, %v65, %v84
    %vm87 = vcmp.eq.f32.partialorder %v65, 0.0
    %v88 = vand.u32 %v65, 2147483648
    %v89 = vsel %vm87, %v88, %v86
    %v90 = vadd.f32 %v77, 1e-06
    %v91 = vadd.f32 %v89, 1e-06
    %v92 = vrcp.pop %v90
    %v93 = vmul.f32 %v90, %v92
    %v94 = vsub.f32 1.0, %v93
    %v95 = vmul.f32 %v92, %v94
    %v96 = vadd.f32 %v92, %v95
    %vm97 = vweird.f32 %v90
    %vm98 = vweird.f32 %v92
    %vm99 = vmor %vm97, %vm98
    %v100 = vsel %vm99, %v92, %v96
    %v101 = vand.u32 2147483647, %v90
    %vm102 = vcmp.eq.f32.partialorder %v101, 8.507059e+37
    %v103 = vand.u32 %v90, 2147483648
    %v104 = vor.u32 1.1754944e-38, %v103
    %v105 = vsel %vm102, %v104, %v100
    %v106 = vrcp.pop %v91
    %v107 = vmul.f32 %v91, %v106
    %v108 = vsub.f32 1.0, %v107
    %v109 = vmul.f32 %v106, %v108
    %v110 = vadd.f32 %v106, %v109
    %vm111 = vweird.f32 %v91
    %vm112 = vweird.f32 %v106
    %vm113 = vmor %vm111, %vm112
    %v114 = vsel %vm113, %v106, %v110
    %v115 = vand.u32 2147483647, %v91
    %vm116 = vcmp.eq.f32.partialorder %v115, 8.507059e+37
    %v117 = vand.u32 %v91, 2147483648
    %v118 = vor.u32 1.1754944e-38, %v117
    %v119 = vsel %vm116, %v118, %v114
    %v121 = vperm.slane %v36, 0
    %v123 = vmul.f32 %v121, %v54
    %v124 = vmul.f32 %v121, %v55
    %v125 = vmul.f32 %v123, %v105
    %v126 = vmul.f32 %v124, %v119
    %v128 = vperm.slane %v37, 0
    %v130 = vadd.f32 %v125, %v128
    %v131 = vadd.f32 %v126, %v128
    %v132 = vpack.c.bf16 %v131, %v130
    %v133 = vld [vmem:[%s3] sm:$0xf]
    %v134 = vld [vmem:[%s3 + $0x4] sm:$0xf]
    %v135 = vld [vmem:[%s3 + $0x8] sm:$0xf]
    %v136 = vld [vmem:[%s3 + $0xc] sm:$0xf]
    %v137 = vld [vmem:[%s4] sm:$0x1]
    %v139 = vperm.slane %v137, 0
    %v145 = vunpack.c.l.b16 %v133
    %v146 = vunpack.c.l.b16 %v134
    %v147 = vunpack.c.l.b16 %v135
    %v148 = vunpack.c.l.b16 %v136
    %v149 = vpack.c.b16 %v146, %v145
    %v150 = vpack.c.b16 %v148, %v147
    %v154 = vsel %vm38, %v132, 0
    %156 = vmatpush.bf16.msra.mxu0 0
    %157 = vmatpush.bf16.msra.mxu0 0
    %158 = vmatpush.bf16.msra.mxu0 0
    %159 = vmatpush.bf16.msra.mxu0 0
    %160 = vmatpush.bf16.msra.mxu0 0
    %161 = vmatpush.bf16.msra.mxu0 0
    %162 = vmatpush.bf16.msra.mxu0 %v150
    %163 = vmatpush.bf16.msra.mxu0 %v149
    %164 = vmatmul.bf16.gmra.mxu0 %v154
    %v165 = vpop.f32.mrf.mxu0
    %v166 = vadd.f32 %v139, %v165
    %v167 = vpop.f32.mrf.mxu0
    %v168 = vadd.f32 %v139, %v167
    %169 = vdwg.mxu0
    %v170 = vmax.f32 %v166, 0.0
    %v171 = vmax.f32 %v168, 0.0
    %v172 = vpack.c.bf16 %v171, %v170
    %v173 = vld [vmem:[%s5] sm:$0xf]
    %v174 = vld [vmem:[%s5 + $0x4] sm:$0xf]
    %v175 = vld [vmem:[%s5 + $0x8] sm:$0xf]
    %v176 = vld [vmem:[%s5 + $0xc] sm:$0xf]
    %v177 = vld [vmem:[%s5 + $0x10] sm:$0xf]
    %v178 = vld [vmem:[%s5 + $0x14] sm:$0xf]
    %v179 = vld [vmem:[%s5 + $0x18] sm:$0xf]
    %v180 = vld [vmem:[%s5 + $0x1c] sm:$0xf]
    %v189 = vunpack.c.l.b16 %v173
    %v190 = vunpack.c.l.b16 %v174
    %v191 = vunpack.c.l.b16 %v175
    %v192 = vunpack.c.l.b16 %v176
    %v193 = vunpack.c.l.b16 %v177
    %v194 = vunpack.c.l.b16 %v178
    %v195 = vunpack.c.l.b16 %v179
    %v196 = vunpack.c.l.b16 %v180
    %v197 = vpack.c.b16 %v190, %v189
    %v198 = vpack.c.b16 %v192, %v191
    %v199 = vpack.c.b16 %v194, %v193
    %v200 = vpack.c.b16 %v196, %v195
    %vm205 = vcmask 523264
    %v207 = vsel %vm205, %v172, 0
    %209 = vmatpush.bf16.msra.mxu0 0
    %210 = vmatpush.bf16.msra.mxu0 0
    %211 = vmatpush.bf16.msra.mxu0 0
    %212 = vmatpush.bf16.msra.mxu0 0
    %213 = vmatpush.bf16.msra.mxu0 %v200
    %214 = vmatpush.bf16.msra.mxu0 %v199
    %215 = vmatpush.bf16.msra.mxu0 %v198
    %216 = vmatpush.bf16.msra.mxu0 %v197
    %217 = vmatmul.bf16.gmra.mxu0 %v207
    %v218 = vpop.f32.mrf.mxu0
    %v219 = vadd.f32 0.0, %v218
    %v220 = vpop.f32.mrf.mxu0
    %v221 = vadd.f32 0.0, %v220
    %222 = vdwg.mxu0
    %v223 = vadd.f32 %v34, %v219
    %v224 = vadd.f32 %v35, %v221
    %v225 = vld [vmem:[%s6] sm:$0x1]
    %v227 = vperm.slane %v225, 0
    %v229 = vadd.f32 %v223, %v227
    %v230 = vadd.f32 %v224, %v227
    %v231 = vld [vmem:[%s7] sm:$0x1]
    %v232 = vld [vmem:[%s8] sm:$0x1]
    %v233 = vsel %vm38, %v229, 0.0
    %234 = vadd.xlane.f32.xlu0 %v233
    %v235 = vpop.xlane.xlu0 %234
    %v236 = vsel %vm38, %v230, 0.0
    %237 = vadd.xlane.f32.xlu0 %v236
    %v238 = vpop.xlane.xlu0 %237
    %v239 = vmul.f32 %v235, %v51
    %v240 = vmul.f32 %v238, %v51
    %v241 = vsub.f32 %v229, %v239
    %v242 = vsub.f32 %v230, %v240
    %v243 = vmul.f32 %v241, %v241
    %v244 = vmul.f32 %v242, %v242
    %v245 = vsel %vm38, %v243, 0.0
    %246 = vadd.xlane.f32.xlu0 %v245
    %v247 = vpop.xlane.xlu0 %246
    %v248 = vsel %vm38, %v244, 0.0
    %249 = vadd.xlane.f32.xlu0 %v248
    %v250 = vpop.xlane.xlu0 %249
    %v251 = vmul.f32 %v247, 0.032258064
    %v252 = vmul.f32 %v250, 0.032258064
    %v253 = vrsqrt.pop %v251
    %v254 = vmul.f32 %v253, %v251
    %v255 = vmul.f32 %v254, %v253
    %v256 = vmul.f32 0.5, %v255
    %v257 = vsub.f32 1.5, %v256
    %v258 = vmul.f32 %v253, %v257
    %v259 = vmul.f32 %v251, %v258
    %vm260 = vcmp.eq.f32.partialorder %v251, inf
    %v261 = vsel %vm260, %v251, %v259
    %vm262 = vcmp.eq.f32.partialorder %v251, 0.0
    %v263 = vand.u32 %v251, 2147483648
    %v264 = vsel %vm262, %v263, %v261
    %v265 = vrsqrt.pop %v252
    %v266 = vmul.f32 %v265, %v252
    %v267 = vmul.f32 %v266, %v265
    %v268 = vmul.f32 0.5, %v267
    %v269 = vsub.f32 1.5, %v268
    %v270 = vmul.f32 %v265, %v269
    %v271 = vmul.f32 %v252, %v270
    %vm272 = vcmp.eq.f32.partialorder %v252, inf
    %v273 = vsel %vm272, %v252, %v271
    %vm274 = vcmp.eq.f32.partialorder %v252, 0.0
    %v275 = vand.u32 %v252, 2147483648
    %v276 = vsel %vm274, %v275, %v273
    %v277 = vadd.f32 %v264, 1e-06
    %v278 = vadd.f32 %v276, 1e-06
    %v279 = vrcp.pop %v277
    %v280 = vmul.f32 %v277, %v279
    %v281 = vsub.f32 1.0, %v280
    %v282 = vmul.f32 %v279, %v281
    %v283 = vadd.f32 %v279, %v282
    %vm284 = vweird.f32 %v277
    %vm285 = vweird.f32 %v279
    %vm286 = vmor %vm284, %vm285
    %v287 = vsel %vm286, %v279, %v283
    %v288 = vand.u32 2147483647, %v277
    %vm289 = vcmp.eq.f32.partialorder %v288, 8.507059e+37
    %v290 = vand.u32 %v277, 2147483648
    %v291 = vor.u32 1.1754944e-38, %v290
    %v292 = vsel %vm289, %v291, %v287
    %v293 = vrcp.pop %v278
    %v294 = vmul.f32 %v278, %v293
    %v295 = vsub.f32 1.0, %v294
    %v296 = vmul.f32 %v293, %v295
    %v297 = vadd.f32 %v293, %v296
    %vm298 = vweird.f32 %v278
    %vm299 = vweird.f32 %v293
    %vm300 = vmor %vm298, %vm299
    %v301 = vsel %vm300, %v293, %v297
    %v302 = vand.u32 2147483647, %v278
    %vm303 = vcmp.eq.f32.partialorder %v302, 8.507059e+37
    %v304 = vand.u32 %v278, 2147483648
    %v305 = vor.u32 1.1754944e-38, %v304
    %v306 = vsel %vm303, %v305, %v301
    %v308 = vperm.slane %v231, 0
    %v310 = vmul.f32 %v308, %v241
    %v311 = vmul.f32 %v308, %v242
    %v312 = vmul.f32 %v310, %v292
    %v313 = vmul.f32 %v311, %v306
    %v315 = vperm.slane %v232, 0
    %v317 = vadd.f32 %v312, %v315
    %v318 = vadd.f32 %v313, %v315
    %319 = vst.msk [vmem:[#allocation2] sm:$0xff] %vm38, %v317
    %320 = vst.msk [vmem:[#allocation2 + $0x8] sm:$0xff] %vm38, %v318
    // Predicated region
    $region38: #{decoder_forward.11} parent=1 // pred_check
      _
    $region39: #{decoder_forward.11} parent=1 // pred_check_branch
      %322 = sbr.rel (0) target = $region41
    $region40: #{decoder_forward.11} parent=1 // pred_region
      %324 = vsyncadd [#allocation3], 0
      %s325 = sshll.u32 [#allocation2], 4
      %s326 = int_to_ptr.vmem [resolvable:$true] %s325
      %s327 = sshll.u32 %s9, 4
      %s328 = int_to_ptr.hbm [resolvable:$true] %s327
      %333 = dma.vmem_to_hbm [thread:$0]  %s326, 256, %s328, [#allocation3], 128, 128, 8
    $region41: #{decoder_forward.11} parent=1 // pred_fallthru
      _
    // Predicated region
    $region42: #{decoder_forward.11} parent=1 // pred_check
      _
    $region43: #{decoder_forward.11} parent=1 // pred_check_branch
      %335 = sbr.rel (0) target = $region45
    $region44: #{decoder_forward.11} parent=1 // pred_region
      %337 = dma.done [#allocation3], 256
    $region45: #{decoder_forward.11} parent=1 // pred_fallthru
      _
    %338 = vsyncpa [#allocation3], 1

// kernel: decoder_forward.6
$region0: #{decoder_forward.6}
  #allocation0 [shape = 'u32[]', space=smem, size = 0x4, offset = 0x4, fixed_abs, tag = 'smem constant byte address 0x4 - core index']
  #allocation1 [shape = 'u32[72,128]{1,0:T(1,128)}', space=vmem, size = 0x9000, scoped, tag = 'internal scratch']
  #allocation2 [shape = 'bf16[8,32]{1,0:T(8,128)(2,1)}', space=vmem, size = 0x800, scoped, tag = 'scratch operand']
  #allocation3 [shape = 'bf16[8,32]{1,0:T(8,128)(2,1)}', space=vmem, size = 0x800, scoped, tag = 'scratch operand']
  #allocation4 [shape = 'f32[8,32]{1,0:T(8,128)}', space=vmem, size = 0x1000, scoped, tag = 'scratch operand']
  %s0 = inlined_call_operand.vmem [shape: f32[2,8,32], index: 0, kind: input, shape index: {}]
  %s1 = inlined_call_operand.vmem [shape: f32[1,32], index: 1, kind: input, shape index: {}]
  %s2 = inlined_call_operand.vmem [shape: f32[1,32], index: 2, kind: input, shape index: {}]
  %s3 = inlined_call_operand.vmem [shape: bf16[32,32], index: 3, kind: input, shape index: {}]
  %s4 = inlined_call_operand.vmem [shape: f32[1,32], index: 4, kind: input, shape index: {}]
  %s5 = inlined_call_operand.vmem [shape: bf16[32,32], index: 5, kind: input, shape index: {}]
  %s6 = inlined_call_operand.vmem [shape: f32[1,32], index: 6, kind: input, shape index: {}]
  %s7 = inlined_call_operand.vmem [shape: bf16[32,32], index: 7, kind: input, shape index: {}]
  %s8 = inlined_call_operand.vmem [shape: f32[1,32], index: 8, kind: input, shape index: {}]
  %s9 = inlined_call_operand.vmem [shape: bf16[32,32], index: 9, kind: input, shape index: {}]
  %s10 = inlined_call_operand.vmem [shape: f32[1,32], index: 10, kind: input, shape index: {}]
  %s11 = inlined_call_operand.vmem [shape: f32[2,8,32], index: 11, kind: output, shape index: {}]
  %s12 = sld [smem:[#allocation0]]
  $region81: #{decoder_forward.6} parent=0
    _
  %s14 = ssub.s32 1, %s12
  %s15 = scalar_select 0, %s14, %s12
  loop: start=0, step=1, limit=4
  $region2: #{decoder_forward.6} parent=0 // loop_pre_header
    _
  $region3: #{decoder_forward.6} parent=0 // loop_header
    %s17 = sphi 0, %s21
    %p18 = scmp.ge.s32.totalorder %s17, 4
    %s24 = sphi 0, %s36
    %s25 = sphi 0, %s32
    %s26 = sphi 0, %s24
    %s27 = sphi 0, %s25
    %s28 = sphi 0, %s26
    %s29 = sphi 0, %s27
    %s39 = sphi 0, %s41
    %s42 = sphi 0, %s39
    %s43 = sphi 0, %s42
    %s59 = sphi 0, %s43
    %s63 = sphi 0, %s63
    %s65 = sphi 0, %s63
    %s66 = sphi 0, %s65
    %s80 = sphi 0, %s66
    %s84 = sphi 0, %s84
    %s86 = sphi 0, %s84
    %s87 = sphi 0, %s86
    %s101 = sphi 0, %s87
    %s105 = sphi 0, %s105
    %s107 = sphi 0, %s105
    %s108 = sphi 0, %s107
    %s122 = sphi 0, %s108
    %s126 = sphi 0, %s126
    %s128 = sphi 0, %s126
    %s129 = sphi 0, %s128
    %s143 = sphi 0, %s129
    %s147 = sphi 0, %s147
    %s149 = sphi 0, %s147
    %s150 = sphi 0, %s149
    %s164 = sphi 0, %s150
    %s168 = sphi 0, %s168
    %s170 = sphi 0, %s168
    %s171 = sphi 0, %s170
    %s185 = sphi 0, %s171
    %s189 = sphi 0, %s189
    %s191 = sphi 0, %s189
    %s192 = sphi 0, %s191
    %s206 = sphi 0, %s192
    %s210 = sphi 0, %s210
    %s212 = sphi 0, %s210
    %s213 = sphi 0, %s212
    %s227 = sphi 0, %s213
    %s231 = sphi 0, %s231
    %s233 = sphi 0, %s231
    %s234 = sphi 0, %s233
    %s248 = sphi 0, %s234
    %s252 = sphi 0, %s252
    %s254 = sphi 0, %s252
    %s255 = sphi 0, %s254
    %s269 = sphi 0, %s255
    %s277 = sphi 0, %s279
    %s280 = sphi 0, %s277
    %s281 = sphi 0, %s280
    %s297 = sphi 0, %s281
  $region4: #{decoder_forward.6} parent=0 // loop_header_branch
    %20 = sbr.rel (%p18) target = $region8
  $region5: #{decoder_forward.6} parent=0 // loop_body
    %s22 = ssub.s32 %s17, 1
    %s23 = ssub.s32 %s17, 2
    %s30 = sadd.s32 1, %s25
    %p31 = scmp.ge.s32.totalorder %s30, 1
    %s32 = scalar_select %p31, 0, %s30
    %s33 = sadd.s32 1, %s24
    %s34 = scalar_select %p31, %s33, %s24
    %p35 = scmp.ge.s32.totalorder %s34, 2
    %s36 = scalar_select %p35, 0, %s34
    %s37 = ssub.s32 %s24, %s36
    %p38 = scmp.eq.s32.totalorder %s37, 0
    %s40 = sadd.s32 %s39, 1
    %s41 = scalar_select %p38, %s39, %s40
    %p44 = pneg %p38
    %p45 = scmp.eq.s32.totalorder %s17, 1
    %p46 = por %p44, %p45
    %p47 = scmp.ne.s32.totalorder %s39, %s42
    %p48 = scmp.eq.s32.totalorder %s17, 0
    %p49 = por %p47, %p48
    %p50 = scmp.ne.s32.totalorder %s39, %s42
    %p51 = scmp.eq.s32.totalorder %s22, 1
    %p52 = por %p50, %p51
    %p53 = scmp.ne.s32.totalorder %s42, %s43
    %p54 = scmp.eq.s32.totalorder %s22, 0
    %p55 = por %p53, %p54
    %p56 = scmp.ne.s32.totalorder %s42, %s43
    %p57 = scmp.eq.s32.totalorder %s23, 1
    %p58 = por %p56, %p57
    %p60 = scmp.ne.s32.totalorder %s43, %s59
    %p61 = scmp.eq.s32.totalorder %s23, 0
    %p62 = por %p60, %p61
    %s64 = sadd.s32 %s63, 1
    %p67 = scmp.eq.s32.totalorder %s17, 1
    %p68 = scmp.ne.s32.totalorder %s63, %s65
    %p69 = scmp.eq.s32.totalorder %s17, 0
    %p70 = por %p68, %p69
    %p71 = scmp.ne.s32.totalorder %s63, %s65
    %p72 = scmp.eq.s32.totalorder %s22, 1
    %p73 = por %p71, %p72
    %p74 = scmp.ne.s32.totalorder %s65, %s66
    %p75 = scmp.eq.s32.totalorder %s22, 0
    %p76 = por %p74, %p75
    %p77 = scmp.ne.s32.totalorder %s65, %s66
    %p78 = scmp.eq.s32.totalorder %s23, 1
    %p79 = por %p77, %p78
    %p81 = scmp.ne.s32.totalorder %s66, %s80
    %p82 = scmp.eq.s32.totalorder %s23, 0
    %p83 = por %p81, %p82
    %s85 = sadd.s32 %s84, 1
    %p88 = scmp.eq.s32.totalorder %s17, 1
    %p89 = scmp.ne.s32.totalorder %s84, %s86
    %p90 = scmp.eq.s32.totalorder %s17, 0
    %p91 = por %p89, %p90
    %p92 = scmp.ne.s32.totalorder %s84, %s86
    %p93 = scmp.eq.s32.totalorder %s22, 1
    %p94 = por %p92, %p93
    %p95 = scmp.ne.s32.totalorder %s86, %s87
    %p96 = scmp.eq.s32.totalorder %s22, 0
    %p97 = por %p95, %p96
    %p98 = scmp.ne.s32.totalorder %s86, %s87
    %p99 = scmp.eq.s32.totalorder %s23, 1
    %p100 = por %p98, %p99
    %p102 = scmp.ne.s32.totalorder %s87, %s101
    %p103 = scmp.eq.s32.totalorder %s23, 0
    %p104 = por %p102, %p103
    %s106 = sadd.s32 %s105, 1
    %p109 = scmp.eq.s32.totalorder %s17, 1
    %p110 = scmp.ne.s32.totalorder %s105, %s107
    %p111 = scmp.eq.s32.totalorder %s17, 0
    %p112 = por %p110, %p111
    %p113 = scmp.ne.s32.totalorder %s105, %s107
    %p114 = scmp.eq.s32.totalorder %s22, 1
    %p115 = por %p113, %p114
    %p116 = scmp.ne.s32.totalorder %s107, %s108
    %p117 = scmp.eq.s32.totalorder %s22, 0
    %p118 = por %p116, %p117
    %p119 = scmp.ne.s32.totalorder %s107, %s108
    %p120 = scmp.eq.s32.totalorder %s23, 1
    %p121 = por %p119, %p120
    %p123 = scmp.ne.s32.totalorder %s108, %s122
    %p124 = scmp.eq.s32.totalorder %s23, 0
    %p125 = por %p123, %p124
    %s127 = sadd.s32 %s126, 1
    %p130 = scmp.eq.s32.totalorder %s17, 1
    %p131 = scmp.ne.s32.totalorder %s126, %s128
    %p132 = scmp.eq.s32.totalorder %s17, 0
    %p133 = por %p131, %p132
    %p134 = scmp.ne.s32.totalorder %s126, %s128
    %p135 = scmp.eq.s32.totalorder %s22, 1
    %p136 = por %p134, %p135
    %p137 = scmp.ne.s32.totalorder %s128, %s129
    %p138 = scmp.eq.s32.totalorder %s22, 0
    %p139 = por %p137, %p138
    %p140 = scmp.ne.s32.totalorder %s128, %s129
    %p141 = scmp.eq.s32.totalorder %s23, 1
    %p142 = por %p140, %p141
    %p144 = scmp.ne.s32.totalorder %s129, %s143
    %p145 = scmp.eq.s32.totalorder %s23, 0
    %p146 = por %p144, %p145
    %s148 = sadd.s32 %s147, 1
    %p151 = scmp.eq.s32.totalorder %s17, 1
    %p152 = scmp.ne.s32.totalorder %s147, %s149
    %p153 = scmp.eq.s32.totalorder %s17, 0
    %p154 = por %p152, %p153
    %p155 = scmp.ne.s32.totalorder %s147, %s149
    %p156 = scmp.eq.s32.totalorder %s22, 1
    %p157 = por %p155, %p156
    %p158 = scmp.ne.s32.totalorder %s149, %s150
    %p159 = scmp.eq.s32.totalorder %s22, 0
    %p160 = por %p158, %p159
    %p161 = scmp.ne.s32.totalorder %s149, %s150
    %p162 = scmp.eq.s32.totalorder %s23, 1
    %p163 = por %p161, %p162
    %p165 = scmp.ne.s32.totalorder %s150, %s164
    %p166 = scmp.eq.s32.totalorder %s23, 0
    %p167 = por %p165, %p166
    %s169 = sadd.s32 %s168, 1
    %p172 = scmp.eq.s32.totalorder %s17, 1
    %p173 = scmp.ne.s32.totalorder %s168, %s170
    %p174 = scmp.eq.s32.totalorder %s17, 0
    %p175 = por %p173, %p174
    %p176 = scmp.ne.s32.totalorder %s168, %s170
    %p177 = scmp.eq.s32.totalorder %s22, 1
    %p178 = por %p176, %p177
    %p179 = scmp.ne.s32.totalorder %s170, %s171
    %p180 = scmp.eq.s32.totalorder %s22, 0
    %p181 = por %p179, %p180
    %p182 = scmp.ne.s32.totalorder %s170, %s171
    %p183 = scmp.eq.s32.totalorder %s23, 1
    %p184 = por %p182, %p183
    %p186 = scmp.ne.s32.totalorder %s171, %s185
    %p187 = scmp.eq.s32.totalorder %s23, 0
    %p188 = por %p186, %p187
    %s190 = sadd.s32 %s189, 1
    %p193 = scmp.eq.s32.totalorder %s17, 1
    %p194 = scmp.ne.s32.totalorder %s189, %s191
    %p195 = scmp.eq.s32.totalorder %s17, 0
    %p196 = por %p194, %p195
    %p197 = scmp.ne.s32.totalorder %s189, %s191
    %p198 = scmp.eq.s32.totalorder %s22, 1
    %p199 = por %p197, %p198
    %p200 = scmp.ne.s32.totalorder %s191, %s192
    %p201 = scmp.eq.s32.totalorder %s22, 0
    %p202 = por %p200, %p201
    %p203 = scmp.ne.s32.totalorder %s191, %s192
    %p204 = scmp.eq.s32.totalorder %s23, 1
    %p205 = por %p203, %p204
    %p207 = scmp.ne.s32.totalorder %s192, %s206
    %p208 = scmp.eq.s32.totalorder %s23, 0
    %p209 = por %p207, %p208
    %s211 = sadd.s32 %s210, 1
    %p214 = scmp.eq.s32.totalorder %s17, 1
    %p215 = scmp.ne.s32.totalorder %s210, %s212
    %p216 = scmp.eq.s32.totalorder %s17, 0
    %p217 = por %p215, %p216
    %p218 = scmp.ne.s32.totalorder %s210, %s212
    %p219 = scmp.eq.s32.totalorder %s22, 1
    %p220 = por %p218, %p219
    %p221 = scmp.ne.s32.totalorder %s212, %s213
    %p222 = scmp.eq.s32.totalorder %s22, 0
    %p223 = por %p221, %p222
    %p224 = scmp.ne.s32.totalorder %s212, %s213
    %p225 = scmp.eq.s32.totalorder %s23, 1
    %p226 = por %p224, %p225
    %p228 = scmp.ne.s32.totalorder %s213, %s227
    %p229 = scmp.eq.s32.totalorder %s23, 0
    %p230 = por %p228, %p229
    %s232 = sadd.s32 %s231, 1
    %p235 = scmp.eq.s32.totalorder %s17, 1
    %p236 = scmp.ne.s32.totalorder %s231, %s233
    %p237 = scmp.eq.s32.totalorder %s17, 0
    %p238 = por %p236, %p237
    %p239 = scmp.ne.s32.totalorder %s231, %s233
    %p240 = scmp.eq.s32.totalorder %s22, 1
    %p241 = por %p239, %p240
    %p242 = scmp.ne.s32.totalorder %s233, %s234
    %p243 = scmp.eq.s32.totalorder %s22, 0
    %p244 = por %p242, %p243
    %p245 = scmp.ne.s32.totalorder %s233, %s234
    %p246 = scmp.eq.s32.totalorder %s23, 1
    %p247 = por %p245, %p246
    %p249 = scmp.ne.s32.totalorder %s234, %s248
    %p250 = scmp.eq.s32.totalorder %s23, 0
    %p251 = por %p249, %p250
    %s253 = sadd.s32 %s252, 1
    %p256 = scmp.eq.s32.totalorder %s17, 1
    %p257 = scmp.ne.s32.totalorder %s252, %s254
    %p258 = scmp.eq.s32.totalorder %s17, 0
    %p259 = por %p257, %p258
    %p260 = scmp.ne.s32.totalorder %s252, %s254
    %p261 = scmp.eq.s32.totalorder %s22, 1
    %p262 = por %p260, %p261
    %p263 = scmp.ne.s32.totalorder %s254, %s255
    %p264 = scmp.eq.s32.totalorder %s22, 0
    %p265 = por %p263, %p264
    %p266 = scmp.ne.s32.totalorder %s254, %s255
    %p267 = scmp.eq.s32.totalorder %s23, 1
    %p268 = por %p266, %p267
    %p270 = scmp.ne.s32.totalorder %s255, %s269
    %p271 = scmp.eq.s32.totalorder %s23, 0
    %p272 = por %p270, %p271
    %s273 = ssub.s32 %s24, %s36
    %s274 = ssub.s32 %s25, %s32
    %s275 = sor.u32 %s273, %s274
    %p276 = scmp.eq.s32.totalorder %s275, 0
    %s278 = sadd.s32 %s277, 1
    %s279 = scalar_select %p276, %s277, %s278
    %p282 = pneg %p276
    %p283 = scmp.eq.s32.totalorder %s17, 1
    %p284 = por %p282, %p283
    %p285 = scmp.ne.s32.totalorder %s277, %s280
    %p286 = scmp.eq.s32.totalorder %s17, 0
    %p287 = por %p285, %p286
    %p288 = scmp.ne.s32.totalorder %s277, %s280
    %p289 = scmp.eq.s32.totalorder %s22, 1
    %p290 = por %p288, %p289
    %p291 = scmp.ne.s32.totalorder %s280, %s281
    %p292 = scmp.eq.s32.totalorder %s22, 0
    %p293 = por %p291, %p292
    %p294 = scmp.ne.s32.totalorder %s280, %s281
    %p295 = scmp.eq.s32.totalorder %s23, 1
    %p296 = por %p294, %p295
    %p298 = scmp.ne.s32.totalorder %s281, %s297
    %p299 = scmp.eq.s32.totalorder %s23, 0
    %p300 = por %p298, %p299
    %p301 = scmp.le.s32.totalorder 1, %s17
    %p302 = scmp.lt.s32.totalorder %s17, 3
    %p303 = pnand %p301, %p302
    %p304 = pneg %p303
    // Predicated region
    $region9: #{decoder_forward.6} parent=5 // pred_check
      _
    $region10: #{decoder_forward.6} parent=5 // pred_check_branch
      %306 = sbr.rel (%p303) target = $region12
    $region11: #{decoder_forward.6} parent=5 // pred_region
      %s307 = ssub.s32 %s17, 1
      // Predicated region
      $region13: #{decoder_forward.6} parent=11 // pred_check
        %p308 = pneg %p76
      $region14: #{decoder_forward.6} parent=11 // pred_check_branch
        %310 = sbr.rel (%p308) target = $region16
      $region15: #{decoder_forward.6} parent=11 // pred_region
        _
      $region16: #{decoder_forward.6} parent=11 // pred_fallthru
        _
      // Predicated region
      $region17: #{decoder_forward.6} parent=11 // pred_check
        %p311 = pneg %p97
      $region18: #{decoder_forward.6} parent=11 // pred_check_branch
        %313 = sbr.rel (%p311) target = $region20
      $region19: #{decoder_forward.6} parent=11 // pred_region
        _
      $region20: #{decoder_forward.6} parent=11 // pred_fallthru
        _
      // Predicated region
      $region21: #{decoder_forward.6} parent=11 // pred_check
        %p314 = pneg %p118
      $region22: #{decoder_forward.6} parent=11 // pred_check_branch
        %316 = sbr.rel (%p314) target = $region24
      $region23: #{decoder_forward.6} parent=11 // pred_region
        _
      $region24: #{decoder_forward.6} parent=11 // pred_fallthru
        _
      // Predicated region
      $region25: #{decoder_forward.6} parent=11 // pred_check
        %p317 = pneg %p139
      $region26: #{decoder_forward.6} parent=11 // pred_check_branch
        %319 = sbr.rel (%p317) target = $region28
      $region27: #{decoder_forward.6} parent=11 // pred_region
        _
      $region28: #{decoder_forward.6} parent=11 // pred_fallthru
        _
      // Predicated region
      $region29: #{decoder_forward.6} parent=11 // pred_check
        %p320 = pneg %p160
      $region30: #{decoder_forward.6} parent=11 // pred_check_branch
        %322 = sbr.rel (%p320) target = $region32
      $region31: #{decoder_forward.6} parent=11 // pred_region
        _
      $region32: #{decoder_forward.6} parent=11 // pred_fallthru
        _
      // Predicated region
      $region33: #{decoder_forward.6} parent=11 // pred_check
        %p323 = pneg %p181
      $region34: #{decoder_forward.6} parent=11 // pred_check_branch
        %325 = sbr.rel (%p323) target = $region36
      $region35: #{decoder_forward.6} parent=11 // pred_region
        _
      $region36: #{decoder_forward.6} parent=11 // pred_fallthru
        _
      // Predicated region
      $region37: #{decoder_forward.6} parent=11 // pred_check
        %p326 = pneg %p202
      $region38: #{decoder_forward.6} parent=11 // pred_check_branch
        %328 = sbr.rel (%p326) target = $region40
      $region39: #{decoder_forward.6} parent=11 // pred_region
        _
      $region40: #{decoder_forward.6} parent=11 // pred_fallthru
        _
      // Predicated region
      $region41: #{decoder_forward.6} parent=11 // pred_check
        %p329 = pneg %p223
      $region42: #{decoder_forward.6} parent=11 // pred_check_branch
        %331 = sbr.rel (%p329) target = $region44
      $region43: #{decoder_forward.6} parent=11 // pred_region
        _
      $region44: #{decoder_forward.6} parent=11 // pred_fallthru
        _
      // Predicated region
      $region45: #{decoder_forward.6} parent=11 // pred_check
        %p332 = pneg %p244
      $region46: #{decoder_forward.6} parent=11 // pred_check_branch
        %334 = sbr.rel (%p332) target = $region48
      $region47: #{decoder_forward.6} parent=11 // pred_region
        _
      $region48: #{decoder_forward.6} parent=11 // pred_fallthru
        _
      // Predicated region
      $region49: #{decoder_forward.6} parent=11 // pred_check
        %p335 = pneg %p265
      $region50: #{decoder_forward.6} parent=11 // pred_check_branch
        %337 = sbr.rel (%p335) target = $region52
      $region51: #{decoder_forward.6} parent=11 // pred_region
        _
      $region52: #{decoder_forward.6} parent=11 // pred_fallthru
        _
    $region12: #{decoder_forward.6} parent=5 // pred_fallthru
      _
    %p338 = scmp.lt.s32.totalorder %s17, 2
    // Predicated region
    $region53: #{decoder_forward.6} parent=5 // pred_check
      %p339 = pneg %p338
    $region54: #{decoder_forward.6} parent=5 // pred_check_branch
      %341 = sbr.rel (%p339) target = $region56
    $region55: #{decoder_forward.6} parent=5 // pred_region
      // Predicated region
      $region57: #{decoder_forward.6} parent=55 // pred_check
        %p342 = pneg %p49
      $region58: #{decoder_forward.6} parent=55 // pred_check_branch
        %344 = sbr.rel (%p342) target = $region60
      $region59: #{decoder_forward.6} parent=55 // pred_region
        %p345 = scmp.lt.s32.totalorder %s24, 1
        %s346 = scalar_select %p345, %s24, 1
        %s347 = smul.addr %s346, 8
        %s348 = scalar_lea.vmem %s0, %s347
      $region60: #{decoder_forward.6} parent=55 // pred_fallthru
        _
    $region56: #{decoder_forward.6} parent=5 // pred_fallthru
      _
    %p349 = scmp.le.s32.totalorder 1, %s17
    %p350 = scmp.lt.s32.totalorder %s17, 3
    %p351 = pnand %p349, %p350
    %p352 = pneg %p351
    // Predicated region
    $region61: #{decoder_forward.6} parent=5 // pred_check
      _
    $region62: #{decoder_forward.6} parent=5 // pred_check_branch
      %354 = sbr.rel (%p351) target = $region64
    $region63: #{decoder_forward.6} parent=5 // pred_region
      %s355 = ssub.s32 %s17, 1
      %p356 = scmp.lt.s32.totalorder %s26, 1
      %s357 = scalar_select %p356, %s26, 1
      %s358 = smul.addr %s357, 8
      %s359 = scalar_lea.vmem %s0, %s358
      %p360 = pneg %p55
      %p361 = pneg %p52
      %p362 = pneg %p76
      %p363 = pneg %p73
      %p364 = pneg %p97
      %p365 = pneg %p94
      %p366 = pneg %p118
      %p367 = pneg %p115
      %p368 = pneg %p139
      %p369 = pneg %p136
      %p370 = pneg %p160
      %p371 = pneg %p157
      %p372 = pneg %p181
      %p373 = pneg %p178
      %p374 = pneg %p202
      %p375 = pneg %p199
      %p376 = pneg %p223
      %p377 = pneg %p220
      %p378 = pneg %p244
      %p379 = pneg %p241
      %p380 = pneg %p265
      %p381 = pneg %p262
      %p382 = pneg %p293
      %p383 = pneg %p290
      %p384 = scmp.lt.s32.totalorder %s26, 1
      %s385 = scalar_select %p384, %s26, 1
      %p386 = scmp.lt.s32.totalorder %s27, 0
      %s387 = scalar_select %p386, %s27, 0
      %s388 = sadd.s32 %s387, %s385
      %s389 = smul.addr %s388, 8
      %s390 = scalar_lea.vmem %s11, %s389
      %p391 = scmp.lt.s32.totalorder %s26, 1
      %s392 = scalar_select %p391, %s26, 1
      %s393 = smul.addr %s392, 8
      %s394 = scalar_lea.vmem %s0, %s393
      %p395 = scmp.lt.s32.totalorder %s26, 1
      %s396 = scalar_select %p395, %s26, 1
      %p397 = scmp.lt.s32.totalorder %s27, 0
      %s398 = scalar_select %p397, %s27, 0
      %s399 = sadd.s32 %s398, %s396
      %s400 = smul.addr %s399, 8
      %s401 = scalar_lea.vmem %s11, %s400
      %v403 = vld [vmem:[%s1] sm:$0x1]
      %v404 = vld [vmem:[%s2] sm:$0x1]
      %p405 = scmp.eq.s32.totalorder %s27, 0
      // Predicated region
      $region65: #{decoder_forward.6} parent=63 // pred_check
        %p406 = pneg %p405
      $region66: #{decoder_forward.6} parent=63 // pred_check_branch
        %408 = sbr.rel (%p406) target = $region68
      $region67: #{decoder_forward.6} parent=63 // pred_region
        %v409 = vld [vmem:[%s394] sm:$0xff]
        %vm410 = vcmask 261120
        %v411 = vsel %vm410, %v409, 0.0
        %412 = vadd.xlane.f32.xlu0 %v411
        %v413 = vpop.xlane.xlu0 %412
        %v414 = vrcp.pop 32.0
        %v415 = vmul.f32 32.0, %v414
        %v416 = vsub.f32 1.0, %v415
        %v417 = vmul.f32 %v414, %v416
        %v418 = vadd.f32 %v414, %v417
        %vm419 = vweird.f32 %v414
        %v420 = vsel %vm419, %v414, %v418
        %v421 = vmul.f32 %v413, %v420
        %v422 = vsub.f32 %v409, %v421
        %v423 = vmul.f32 %v422, %v422
        %v424 = vsel %vm410, %v423, 0.0
        %425 = vadd.xlane.f32.xlu0 %v424
        %v426 = vpop.xlane.xlu0 %425
        %v427 = vmul.f32 %v426, 0.032258064
        %v428 = vrsqrt.pop %v427
        %v429 = vmul.f32 %v428, %v427
        %v430 = vmul.f32 %v429, %v428
        %v431 = vmul.f32 0.5, %v430
        %v432 = vsub.f32 1.5, %v431
        %v433 = vmul.f32 %v428, %v432
        %v434 = vmul.f32 %v427, %v433
        %vm435 = vcmp.eq.f32.partialorder %v427, inf
        %v436 = vsel %vm435, %v427, %v434
        %vm437 = vcmp.eq.f32.partialorder %v427, 0.0
        %v438 = vand.u32 %v427, 2147483648
        %v439 = vsel %vm437, %v438, %v436
        %v440 = vadd.f32 %v439, 1e-06
        %v441 = vrcp.pop %v440
        %v442 = vmul.f32 %v440, %v441
        %v443 = vsub.f32 1.0, %v442
        %v444 = vmul.f32 %v441, %v443
        %v445 = vadd.f32 %v441, %v444
        %vm446 = vweird.f32 %v440
        %vm447 = vweird.f32 %v441
        %vm448 = vmor %vm446, %vm447
        %v449 = vsel %vm448, %v441, %v445
        %v450 = vand.u32 2147483647, %v440
        %vm451 = vcmp.eq.f32.partialorder %v450, 8.507059e+37
        %v452 = vand.u32 %v440, 2147483648
        %v453 = vor.u32 1.1754944e-38, %v452
        %v454 = vsel %vm451, %v453, %v449
        %v456 = vperm.slane %v403, 0
        %v458 = vmul.f32 %v456, %v422
        %v459 = vmul.f32 %v458, %v454
        %v461 = vperm.slane %v404, 0
        %v463 = vadd.f32 %v459, %v461
        %v464 = vpack.c.bf16 %v463, %v463
        %v465 = vld [vmem:[%s5] sm:$0xf]
        %v466 = vld [vmem:[%s5 + $0x4] sm:$0xf]
        %v467 = vld [vmem:[%s5 + $0x8] sm:$0xf]
        %v468 = vld [vmem:[%s5 + $0xc] sm:$0xf]
        %v469 = vld [vmem:[%s6] sm:$0x1]
        %v471 = vperm.slane %v469, 0
        %v477 = vunpack.c.l.b16 %v465
        %v478 = vunpack.c.l.b16 %v466
        %v479 = vunpack.c.l.b16 %v467
        %v480 = vunpack.c.l.b16 %v468
        %v481 = vpack.c.b16 %v478, %v477
        %v482 = vpack.c.b16 %v480, %v479
        %v486 = vsel %vm410, %v464, 0
        %488 = vmatpush.bf16.msra.mxu0 0
        %489 = vmatpush.bf16.msra.mxu0 0
        %490 = vmatpush.bf16.msra.mxu0 0
        %491 = vmatpush.bf16.msra.mxu0 0
        %492 = vmatpush.bf16.msra.mxu0 0
        %493 = vmatpush.bf16.msra.mxu0 0
        %494 = vmatpush.bf16.msra.mxu0 %v482
        %495 = vmatpush.bf16.msra.mxu0 %v481
        %496 = vmatmul.bf16.gmra.mxu0 %v486
        %v497 = vpop.f32.mrf.mxu0
        %v498 = vadd.f32 %v471, %v497
        %v499 = vpop.f32.mrf.mxu0
        %500 = vdwg.mxu0
        %v501 = vpack.c.bf16 %v498, %v498
        %vm502 = vcmask 257024
        %503 = vst.msk [vmem:[#allocation2] sm:$0xf] %vm502, %v501
        %v504 = vld [vmem:[%s7] sm:$0xf]
        %v505 = vld [vmem:[%s7 + $0x4] sm:$0xf]
        %v506 = vld [vmem:[%s7 + $0x8] sm:$0xf]
        %v507 = vld [vmem:[%s7 + $0xc] sm:$0xf]
        %v508 = vld [vmem:[%s8] sm:$0x1]
        %v510 = vperm.slane %v508, 0
        %v516 = vunpack.c.l.b16 %v504
        %v517 = vunpack.c.l.b16 %v505
        %v518 = vunpack.c.l.b16 %v506
        %v519 = vunpack.c.l.b16 %v507
        %v520 = vpack.c.b16 %v517, %v516
        %v521 = vpack.c.b16 %v519, %v518
        %524 = vmatpush.bf16.msra.mxu0 0
        %525 = vmatpush.bf16.msra.mxu0 0
        %526 = vmatpush.bf16.msra.mxu0 0
        %527 = vmatpush.bf16.msra.mxu0 0
        %528 = vmatpush.bf16.msra.mxu0 0
        %529 = vmatpush.bf16.msra.mxu0 0
        %530 = vmatpush.bf16.msra.mxu0 %v521
        %531 = vmatpush.bf16.msra.mxu0 %v520
        %532 = vmatmul.bf16.gmra.mxu0 %v486
        %v533 = vpop.f32.mrf.mxu0
        %v534 = vadd.f32 %v510, %v533
        %v535 = vpop.f32.mrf.mxu0
        %536 = vdwg.mxu0
        %v537 = vpack.c.bf16 %v534, %v534
        %538 = vst.msk [vmem:[#allocation3] sm:$0xf] %vm502, %v537
      $region68: #{decoder_forward.6} parent=63 // pred_fallthru
        _
      %s539 = smul.u32 %s27, 8
      %s540 = scalar_lea.vmem %s394, %s539
      %v541 = vld [vmem:[%s540] sm:$0xff]
      %vm542 = vcmask 261120
      %v543 = vsel %vm542, %v541, 0.0
      %544 = vadd.xlane.f32.xlu0 %v543
      %v545 = vpop.xlane.xlu0 %544
      %v546 = vrcp.pop 32.0
      %v547 = vmul.f32 32.0, %v546
      %v548 = vsub.f32 1.0, %v547
      %v549 = vmul.f32 %v546, %v548
      %v550 = vadd.f32 %v546, %v549
      %vm551 = vweird.f32 %v546
      %v552 = vsel %vm551, %v546, %v550
      %v553 = vmul.f32 %v545, %v552
      %v554 = vsub.f32 %v541, %v553
      %v555 = vmul.f32 %v554, %v554
      %v556 = vsel %vm542, %v555, 0.0
      %557 = vadd.xlane.f32.xlu0 %v556
      %v558 = vpop.xlane.xlu0 %557
      %v559 = vmul.f32 %v558, 0.032258064
      %v560 = vrsqrt.pop %v559
      %v561 = vmul.f32 %v560, %v559
      %v562 = vmul.f32 %v561, %v560
      %v563 = vmul.f32 0.5, %v562
      %v564 = vsub.f32 1.5, %v563
      %v565 = vmul.f32 %v560, %v564
      %v566 = vmul.f32 %v559, %v565
      %vm567 = vcmp.eq.f32.partialorder %v559, inf
      %v568 = vsel %vm567, %v559, %v566
      %vm569 = vcmp.eq.f32.partialorder %v559, 0.0
      %v570 = vand.u32 %v559, 2147483648
      %v571 = vsel %vm569, %v570, %v568
      %v572 = vadd.f32 %v571, 1e-06
      %v573 = vrcp.pop %v572
      %v574 = vmul.f32 %v572, %v573
      %v575 = vsub.f32 1.0, %v574
      %v576 = vmul.f32 %v573, %v575
      %v577 = vadd.f32 %v573, %v576
      %vm578 = vweird.f32 %v572
      %vm579 = vweird.f32 %v573
      %vm580 = vmor %vm578, %vm579
      %v581 = vsel %vm580, %v573, %v577
      %v582 = vand.u32 2147483647, %v572
      %vm583 = vcmp.eq.f32.partialorder %v582, 8.507059e+37
      %v584 = vand.u32 %v572, 2147483648
      %v585 = vor.u32 1.1754944e-38, %v584
      %v586 = vsel %vm583, %v585, %v581
      %v588 = vperm.slane %v403, 0
      %v590 = vmul.f32 %v588, %v554
      %v591 = vmul.f32 %v590, %v586
      %v593 = vperm.slane %v404, 0
      %v595 = vadd.f32 %v591, %v593
      %v596 = vpack.c.bf16 %v595, %v595
      %v597 = vld [vmem:[%s3] sm:$0xf]
      %v598 = vld [vmem:[%s3 + $0x4] sm:$0xf]
      %v599 = vld [vmem:[%s3 + $0x8] sm:$0xf]
      %v600 = vld [vmem:[%s3 + $0xc] sm:$0xf]
      %v601 = vld [vmem:[%s4] sm:$0x1]
      %v603 = vperm.slane %v601, 0
      %v609 = vunpack.c.l.b16 %v597
      %v610 = vunpack.c.l.b16 %v598
      %v611 = vunpack.c.l.b16 %v599
      %v612 = vunpack.c.l.b16 %v600
      %v613 = vpack.c.b16 %v610, %v609
      %v614 = vpack.c.b16 %v612, %v611
      %v618 = vsel %vm542, %v596, 0
      %620 = vmatpush.bf16.msra.mxu0 0
      %621 = vmatpush.bf16.msra.mxu0 0
      %622 = vmatpush.bf16.msra.mxu0 0
      %623 = vmatpush.bf16.msra.mxu0 0
      %624 = vmatpush.bf16.msra.mxu0 0
      %625 = vmatpush.bf16.msra.mxu0 0
      %626 = vmatpush.bf16.msra.mxu0 %v614
      %627 = vmatpush.bf16.msra.mxu0 %v613
      %628 = vmatmul.bf16.gmra.mxu0 %v618
      %v629 = vpop.f32.mrf.mxu0
      %v630 = vadd.f32 %v603, %v629
      %v631 = vpop.f32.mrf.mxu0
      %632 = vdwg.mxu0
      %v633 = vmul.f32 %v630, 0.35355338
      %v634 = vpack.c.bf16 %v633, %v633
      %v635 = vlaneseq
      %v636 = vshrl.u32 %v635, 7
      %v637 = vstv %s539
      %v638 = vadd.s32 %v637, %v636
      %v639 = vlaneseq
      %v640 = vand.u32 %v639, 127
      %vm641 = vcmp.gt.s32.totalorder %v640, %v638
      %v642 = vsel %vm641, -1e+09, 0.0
      %v643 = vld [vmem:[#allocation2] sm:$0xf]
      %v644 = vld [vmem:[#allocation3] sm:$0xf]
      %vm645 = vcmask 64512
      %v647 = vsel %vm645, %v634, 0
      %v650 = vsel %vm645, %v643, 0
      %652 = vmatpush.bf16.xpose.msra.mxu0 0
      %653 = vmatpush.bf16.xpose.msra.mxu0 0
      %654 = vmatpush.bf16.xpose.msra.mxu0 0
      %655 = vmatpush.bf16.xpose.msra.mxu0 0
      %656 = vmatpush.bf16.xpose.msra.mxu0 0
      %657 = vmatpush.bf16.xpose.msra.mxu0 0
      %658 = vmatpush.bf16.xpose.msra.mxu0 0
      %659 = vmatpush.bf16.xpose.msra.mxu0 %v650
      %660 = vmatmul.bf16.gmra.mxu0 %v647
      %v661 = vpop.f32.mrf.mxu0
      %v662 = vadd.f32 %v642, %v661
      %v663 = vpop.f32.mrf.mxu0
      %664 = vdwg.mxu0
      %v665 = vsel %vm645, %v662, -inf
      %666 = vmax.xlane.f32.xlu0 %v665
      %v667 = vpop.xlane.xlu0 %666
      %v668 = vsub.f32 %v662, %v667
      %v669 = vmul.f32 %v668, 1.442695
      %v670 = vpow.pop %v669
      %v671 = vsel %vm645, %v670, 0.0
      %672 = vadd.xlane.f32.xlu0 %v671
      %v673 = vpop.xlane.xlu0 %672
      %v674 = vrcp.pop %v673
      %v675 = vmul.f32 %v670, %v674
      %v676 = vpack.c.bf16 %v675, %v675
      %v678 = vsel %vm645, %v676, 0
      %vm680 = vcmask 1043456
      %v682 = vsel %vm680, %v644, 0
      %684 = vmatpush.bf16.msra.mxu0 0
      %685 = vmatpush.bf16.msra.mxu0 0
      %686 = vmatpush.bf16.msra.mxu0 0
      %687 = vmatpush.bf16.msra.mxu0 0
      %688 = vmatpush.bf16.msra.mxu0 0
      %689 = vmatpush.bf16.msra.mxu0 0
      %690 = vmatpush.bf16.msra.mxu0 0
      %691 = vmatpush.bf16.msra.mxu0 %v682
      %692 = vmatmul.bf16.gmra.mxu0 %v678
      %v693 = vpop.f32.mrf.mxu0
      %v694 = vadd.f32 0.0, %v693
      %v695 = vpop.f32.mrf.mxu0
      %696 = vdwg.mxu0
      %697 = vst.msk [vmem:[#allocation4] sm:$0xff] %vm645, %v694
      %v699 = vunpack.c.l.b16 %v634
      %v700 = vpack.c.b16 %v699, %v699
      %701 = vrot.lane.b32.xlu0 %v700, 120
      %v702 = vpop.permute.xlu0 %701
      %v704 = vunpack.c.l.b16 %v643
      %v705 = vpack.c.b16 %v704, %v704
      %706 = vrot.lane.b32.xlu0 %v705, 120
      %v707 = vpop.permute.xlu0 %706
      %v709 = vsel %vm645, %v702, 0
      %v712 = vsel %vm645, %v707, 0
      %714 = vmatpush.bf16.xpose.msra.mxu0 0
      %715 = vmatpush.bf16.xpose.msra.mxu0 0
      %716 = vmatpush.bf16.xpose.msra.mxu0 0
      %717 = vmatpush.bf16.xpose.msra.mxu0 0
      %718 = vmatpush.bf16.xpose.msra.mxu0 0
      %719 = vmatpush.bf16.xpose.msra.mxu0 0
      %720 = vmatpush.bf16.xpose.msra.mxu0 0
      %721 = vmatpush.bf16.xpose.msra.mxu0 %v712
      %722 = vmatmul.bf16.gmra.mxu0 %v709
      %v723 = vpop.f32.mrf.mxu0
      %v724 = vadd.f32 %v642, %v723
      %v725 = vpop.f32.mrf.mxu0
      %726 = vdwg.mxu0
      %v727 = vsel %vm645, %v724, -inf
      %728 = vmax.xlane.f32.xlu0 %v727
      %v729 = vpop.xlane.xlu0 %728
      %v730 = vsub.f32 %v724, %v729
      %v731 = vmul.f32 %v730, 1.442695
      %v732 = vpow.pop %v731
      %v733 = vsel %vm645, %v732, 0.0
      %734 = vadd.xlane.f32.xlu0 %v733
      %v735 = vpop.xlane.xlu0 %734
      %v736 = vrcp.pop %v735
      %v737 = vmul.f32 %v732, %v736
      %v738 = vpack.c.bf16 %v737, %v737
      %v740 = vunpack.c.l.b16 %v644
      %v741 = vpack.c.b16 %v740, %v740
      %742 = vrot.lane.b32.xlu0 %v741, 120
      %v743 = vpop.permute.xlu0 %742
      %v745 = vsel %vm645, %v738, 0
      %v748 = vsel %vm680, %v743, 0
      %750 = vmatpush.bf16.msra.mxu0 0
      %751 = vmatpush.bf16.msra.mxu0 0
      %752 = vmatpush.bf16.msra.mxu0 0
      %753 = vmatpush.bf16.msra.mxu0 0
      %754 = vmatpush.bf16.msra.mxu0 0
      %755 = vmatpush.bf16.msra.mxu0 0
      %756 = vmatpush.bf16.msra.mxu0 0
      %757 = vmatpush.bf16.msra.mxu0 %v748
      %758 = vmatmul.bf16.gmra.mxu0 %v745
      %v759 = vpop.f32.mrf.mxu0
      %v760 = vadd.f32 0.0, %v759
      %v761 = vpop.f32.mrf.mxu0
      %762 = vdwg.mxu0
      %764 = vrot.lane.b32.xlu0 %v760, 8
      %v765 = vpop.permute.xlu0 %764
      %vm767 = vcmask 130112
      %768 = vst.msk [vmem:[#allocation4] sm:$0xff] %vm767, %v765
      %769 = vrot.lane.b32.xlu0 %v700, 112
      %v770 = vpop.permute.xlu0 %769
      %771 = vrot.lane.b32.xlu0 %v705, 112
      %v772 = vpop.permute.xlu0 %771
      %v774 = vsel %vm645, %v770, 0
      %v777 = vsel %vm645, %v772, 0
      %779 = vmatpush.bf16.xpose.msra.mxu0 0
      %780 = vmatpush.bf16.xpose.msra.mxu0 0
      %781 = vmatpush.bf16.xpose.msra.mxu0 0
      %782 = vmatpush.bf16.xpose.msra.mxu0 0
      %783 = vmatpush.bf16.xpose.msra.mxu0 0
      %784 = vmatpush.bf16.xpose.msra.mxu0 0
      %785 = vmatpush.bf16.xpose.msra.mxu0 0
      %786 = vmatpush.bf16.xpose.msra.mxu0 %v777
      %787 = vmatmul.bf16.gmra.mxu0 %v774
      %v788 = vpop.f32.mrf.mxu0
      %v789 = vadd.f32 %v642, %v788
      %v790 = vpop.f32.mrf.mxu0
      %791 = vdwg.mxu0
      %v792 = vsel %vm645, %v789, -inf
      %793 = vmax.xlane.f32.xlu0 %v792
      %v794 = vpop.xlane.xlu0 %793
      %v795 = vsub.f32 %v789, %v794
      %v796 = vmul.f32 %v795, 1.442695
      %v797 = vpow.pop %v796
      %v798 = vsel %vm645, %v797, 0.0
      %799 = vadd.xlane.f32.xlu0 %v798
      %v800 = vpop.xlane.xlu0 %799
      %v801 = vrcp.pop %v800
      %v802 = vmul.f32 %v797, %v801
      %v803 = vpack.c.bf16 %v802, %v802
      %804 = vrot.lane.b32.xlu0 %v741, 112
      %v805 = vpop.permute.xlu0 %804
      %v807 = vsel %vm645, %v803, 0
      %v810 = vsel %vm680, %v805, 0
      %812 = vmatpush.bf16.msra.mxu0 0
      %813 = vmatpush.bf16.msra.mxu0 0
      %814 = vmatpush.bf16.msra.mxu0 0
      %815 = vmatpush.bf16.msra.mxu0 0
      %816 = vmatpush.bf16.msra.mxu0 0
      %817 = vmatpush.bf16.msra.mxu0 0
      %818 = vmatpush.bf16.msra.mxu0 0
      %819 = vmatpush.bf16.msra.mxu0 %v810
      %820 = vmatmul.bf16.gmra.mxu0 %v807
      %v821 = vpop.f32.mrf.mxu0
      %v822 = vadd.f32 0.0, %v821
      %v823 = vpop.f32.mrf.mxu0
      %824 = vdwg.mxu0
      %826 = vrot.lane.b32.xlu0 %v822, 16
      %v827 = vpop.permute.xlu0 %826
      %vm829 = vcmask 195712
      %830 = vst.msk [vmem:[#allocation4] sm:$0xff] %vm829, %v827
      %831 = vrot.lane.b32.xlu0 %v700, 104
      %v832 = vpop.permute.xlu0 %831
      %833 = vrot.lane.b32.xlu0 %v705, 104
      %v834 = vpop.permute.xlu0 %833
      %v836 = vsel %vm645, %v832, 0
      %v839 = vsel %vm645, %v834, 0
      %841 = vmatpush.bf16.xpose.msra.mxu0 0
      %842 = vmatpush.bf16.xpose.msra.mxu0 0
      %843 = vmatpush.bf16.xpose.msra.mxu0 0
      %844 = vmatpush.bf16.xpose.msra.mxu0 0
      %845 = vmatpush.bf16.xpose.msra.mxu0 0
      %846 = vmatpush.bf16.xpose.msra.mxu0 0
      %847 = vmatpush.bf16.xpose.msra.mxu0 0
      %848 = vmatpush.bf16.xpose.msra.mxu0 %v839
      %849 = vmatmul.bf16.gmra.mxu0 %v836
      %v850 = vpop.f32.mrf.mxu0
      %v851 = vadd.f32 %v642, %v850
      %v852 = vpop.f32.mrf.mxu0
      %853 = vdwg.mxu0
      %v854 = vsel %vm645, %v851, -inf
      %855 = vmax.xlane.f32.xlu0 %v854
      %v856 = vpop.xlane.xlu0 %855
      %v857 = vsub.f32 %v851, %v856
      %v858 = vmul.f32 %v857, 1.442695
      %v859 = vpow.pop %v858
      %v860 = vsel %vm645, %v859, 0.0
      %861 = vadd.xlane.f32.xlu0 %v860
      %v862 = vpop.xlane.xlu0 %861
      %v863 = vrcp.pop %v862
      %v864 = vmul.f32 %v859, %v863
      %v865 = vpack.c.bf16 %v864, %v864
      %866 = vrot.lane.b32.xlu0 %v741, 104
      %v867 = vpop.permute.xlu0 %866
      %v869 = vsel %vm645, %v865, 0
      %v872 = vsel %vm680, %v867, 0
      %874 = vmatpush.bf16.msra.mxu0 0
      %875 = vmatpush.bf16.msra.mxu0 0
      %876 = vmatpush.bf16.msra.mxu0 0
      %877 = vmatpush.bf16.msra.mxu0 0
      %878 = vmatpush.bf16.msra.mxu0 0
      %879 = vmatpush.bf16.msra.mxu0 0
      %880 = vmatpush.bf16.msra.mxu0 0
      %881 = vmatpush.bf16.msra.mxu0 %v872
      %882 = vmatmul.bf16.gmra.mxu0 %v869
      %v883 = vpop.f32.mrf.mxu0
      %v884 = vadd.f32 0.0, %v883
      %v885 = vpop.f32.mrf.mxu0
      %886 = vdwg.mxu0
      %888 = vrot.lane.b32.xlu0 %v884, 24
      %v889 = vpop.permute.xlu0 %888
      %vm891 = vcmask 261312
      %892 = vst.msk [vmem:[#allocation4] sm:$0xff] %vm891, %v889
      %v893 = vld [vmem:[#allocation4] sm:$0xff]
      %v894 = vpack.c.bf16 %v893, %v893
      %v895 = vld [vmem:[%s9] sm:$0xf]
      %v896 = vld [vmem:[%s9 + $0x4] sm:$0xf]
      %v897 = vld [vmem:[%s9 + $0x8] sm:$0xf]
      %v898 = vld [vmem:[%s9 + $0xc] sm:$0xf]
      %v899 = vld [vmem:[%s10] sm:$0x1]
      %v901 = vperm.slane %v899, 0
      %v907 = vunpack.c.l.b16 %v895
      %v908 = vunpack.c.l.b16 %v896
      %v909 = vunpack.c.l.b16 %v897
      %v910 = vunpack.c.l.b16 %v898
      %v911 = vpack.c.b16 %v908, %v907
      %v912 = vpack.c.b16 %v910, %v909
      %v916 = vsel %vm542, %v894, 0
      %918 = vmatpush.bf16.msra.mxu0 0
      %919 = vmatpush.bf16.msra.mxu0 0
      %920 = vmatpush.bf16.msra.mxu0 0
      %921 = vmatpush.bf16.msra.mxu0 0
      %922 = vmatpush.bf16.msra.mxu0 0
      %923 = vmatpush.bf16.msra.mxu0 0
      %924 = vmatpush.bf16.msra.mxu0 %v912
      %925 = vmatpush.bf16.msra.mxu0 %v911
      %926 = vmatmul.bf16.gmra.mxu0 %v916
      %v927 = vpop.f32.mrf.mxu0
      %v928 = vadd.f32 %v901, %v927
      %v929 = vpop.f32.mrf.mxu0
      %930 = vdwg.mxu0
      %v931 = vadd.f32 %v541, %v928
      %932 = vst.msk [vmem:[%s401] sm:$0xff] %vm542, %v931
      %p933 = scmp.lt.s32.totalorder %s26, 1
      %s934 = scalar_select %p933, %s26, 1
      %p935 = scmp.lt.s32.totalorder %s27, 0
      %s936 = scalar_select %p935, %s27, 0
      %s937 = sadd.s32 %s936, %s934
      %s938 = smul.addr %s937, 8
      %s939 = scalar_lea.vmem %s11, %s938
      // Predicated region
      $region69: #{decoder_forward.6} parent=63 // pred_check
        %p940 = pneg %p290
      $region70: #{decoder_forward.6} parent=63 // pred_check_branch
        %942 = sbr.rel (%p940) target = $region72
      $region71: #{decoder_forward.6} parent=63 // pred_region
        _
      $region72: #{decoder_forward.6} parent=63 // pred_fallthru
        _
    $region64: #{decoder_forward.6} parent=5 // pred_fallthru
      _
    %p943 = scmp.le.s32.totalorder 2, %s17
    // Predicated region
    $region73: #{decoder_forward.6} parent=5 // pred_check
      %p944 = pneg %p943
    $region74: #{decoder_forward.6} parent=5 // pred_check_branch
      %946 = sbr.rel (%p944) target = $region76
    $region75: #{decoder_forward.6} parent=5 // pred_region
      %s947 = ssub.s32 %s17, 2
      // Predicated region
      $region77: #{decoder_forward.6} parent=75 // pred_check
        %p948 = pneg %p296
      $region78: #{decoder_forward.6} parent=75 // pred_check_branch
        %950 = sbr.rel (%p948) target = $region80
      $region79: #{decoder_forward.6} parent=75 // pred_region
        %p951 = scmp.lt.s32.totalorder %s28, 1
        %s952 = scalar_select %p951, %s28, 1
        %p953 = scmp.lt.s32.totalorder %s29, 0
        %s954 = scalar_select %p953, %s29, 0
        %s955 = sadd.s32 %s954, %s952
        %s956 = smul.addr %s955, 8
        %s957 = scalar_lea.vmem %s11, %s956
      $region80: #{decoder_forward.6} parent=75 // pred_fallthru
        _
    $region76: #{decoder_forward.6} parent=5 // pred_fallthru
      _
  $region6: #{decoder_forward.6} parent=0 // loop_footer
    %s21 = sadd.s32 1, %s17
  $region7: #{decoder_forward.6} parent=0 // loop_footer_branch
    %16 = sbr.rel target = $region3
  $region8: #{decoder_forward.6} parent=0 // loop_exit
    _

</llo_original>
